<compile_context>
chip_gen: v7x
topology: tpu7x:2x2x1
jax: 0.10.0
libtpu: 0.0.40
codegen_flags: <defaults>
</compile_context>

<pallas_src>
import math

import jax
import jax.numpy as jnp
from jax.experimental import pallas as pl
from jax.experimental.pallas import tpu as pltpu

LATENT_DIM = 32   # hidden size H
INPUT_DIM = 16    # per-timestep feature size
SEQ_LEN = 8       # time steps T
BATCH = 2

H = LATENT_DIM
D = INPUT_DIM
T = SEQ_LEN
B = BATCH
G = 3 * H          # 96: one direction's [r|z|n] gate lanes at native width (no per-gate padding)
TB = T * B

# ---- packed-slab row offsets (16-row aligned so bf16 sublane tiles stay aligned; see pack_params) ----
A_WIH0, A_BIH0, A_WIH1, A_BIH1 = 0, 32, 48, 112            # slab A: (128, 2*G) bf16
B_L0, B_L1 = 0, 80                                          # slab B: (160, G) bf16; per layer: W at +0, bias at +64
C_PHIW, C_PHIB, C_W1, C_W2REP, C_SCAL = 0, 16, 32, 48, 64   # slab C: (80, 2H) bf16


# ----------------------------------------------------------------------------
# Pure-JAX reference (natural PyTorch-style parameters), used only for checking.
# ----------------------------------------------------------------------------
def _gru_direction(seq, w_ih, w_hh, b_ih, b_hh, reverse, mm):
    T_ = len(seq)
    B_ = seq[0].shape[0]
    H_ = w_hh.shape[0]
    h = jnp.zeros((B_, H_), jnp.float32)
    outs = [None] * T_
    order = range(T_ - 1, -1, -1) if reverse else range(T_)
    for t in order:
        gx = mm(seq[t], w_ih) + b_ih
        gh = mm(h, w_hh) + b_hh
        r = jax.nn.sigmoid(gx[:, 0:H_] + gh[:, 0:H_])
        z = jax.nn.sigmoid(gx[:, H_:2 * H_] + gh[:, H_:2 * H_])
        n = jnp.tanh(gx[:, 2 * H_:3 * H_] + r * gh[:, 2 * H_:3 * H_])
        h = (1.0 - z) * n + z * h
        outs[t] = h
    return outs


def _forward_reference(x, params, cast_matmul_to_bf16=False):
    (phi_w, phi_b,
     wih0f, whh0f, bih0f, bhh0f,
     wih0b, whh0b, bih0b, bhh0b,
     wih1f, whh1f, bih1f, bhh1f,
     wih1b, whh1b, bih1b, bhh1b,
     out1_w, out1_b, out2_w, out2_b) = params

    def mm(a, b):
        if cast_matmul_to_bf16:
            a = a.astype(jnp.bfloat16)
            b = b.astype(jnp.bfloat16)
        return jnp.dot(a, b, preferred_element_type=jnp.float32)

    _, T_, _ = x.shape
    xs = [x[:, t, :] for t in range(T_)]
    seq0 = [jax.nn.relu(mm(xt, phi_w) + phi_b) for xt in xs]
    f0 = _gru_direction(seq0, wih0f, whh0f, bih0f, bhh0f, False, mm)
    r0 = _gru_direction(seq0, wih0b, whh0b, bih0b, bhh0b, True, mm)
    seq1 = [jnp.concatenate([f0[t], r0[t]], axis=-1) for t in range(T_)]
    # TODO(synk): nn.GRU dropout=0.05 between layers is a train-time-only op; eval-mode forward has no dropout.
    f1 = _gru_direction(seq1, wih1f, whh1f, bih1f, bhh1f, False, mm)
    r1 = _gru_direction(seq1, wih1b, whh1b, bih1b, bhh1b, True, mm)
    seq2 = [jnp.concatenate([f1[t], r1[t]], axis=-1) for t in range(T_)]
    # out1/out2 tail is a VPU-only f32 path in the kernel; keep it f32 here too
    y_cols = [jax.nn.relu(jnp.dot(st, out1_w, preferred_element_type=jnp.float32) + out1_b) for st in seq2]
    y = jnp.concatenate(y_cols, axis=-1)                                    # (B, T)
    return jnp.dot(y, out2_w, preferred_element_type=jnp.float32) + out2_b  # (B, 1)


# ----------------------------------------------------------------------------
# Kernel
# ----------------------------------------------------------------------------
def _discriminator_kernel(x_ref, a_ref, b_ref, c_ref, o_ref, gxf_ref, fr_ref):
    f32 = jnp.float32
    bf16 = jnp.bfloat16

    x = x_ref[...]                                               # (TB, D) bf16, rows ordered t*B + b

    # ---- parameters: loaded once, reused across the fully-unrolled time loops (all bf16 in the slabs) ----
    w_ih0 = a_ref[A_WIH0:A_WIH0 + H, :]                          # (H,  2G) bf16
    b_ih0 = a_ref[A_BIH0:A_BIH0 + 1, :].astype(f32)              # (1,  2G)
    w_ih1 = a_ref[A_WIH1:A_WIH1 + 2 * H, :]                      # (2H, 2G) bf16
    b_ih1 = a_ref[A_BIH1:A_BIH1 + 1, :].astype(f32)
    w_hh0 = b_ref[B_L0:B_L0 + 2 * H, :]                          # (2H, G)  bf16  vstack(fwd, bwd)
    b_hh0 = b_ref[B_L0 + 2 * H:B_L0 + 2 * H + 2 * B, :].astype(f32)   # (2B, G) per-row recurrent bias
    w_hh1 = b_ref[B_L1:B_L1 + 2 * H, :]
    b_hh1 = b_ref[B_L1 + 2 * H:B_L1 + 2 * H + 2 * B, :].astype(f32)
    phi_w = c_ref[C_PHIW:C_PHIW + D, 0:H]                        # (D, H) bf16
    phi_b = c_ref[C_PHIB:C_PHIB + 1, 0:H].astype(f32)            # (1, H)
    w1row = c_ref[C_W1:C_W1 + 1, 0:2 * H].astype(f32)            # (1, 2H)  out1 weight as a row
    w2rep = c_ref[C_W2REP:C_W2REP + TB, 0:1].astype(f32)         # (TB, 1)  out2 weight repeated per batch row
    out1_b = c_ref[C_SCAL:C_SCAL + 1, 0:1].astype(f32)           # (1, 1)
    out2_b = c_ref[C_SCAL:C_SCAL + 1, 1:2].astype(f32)           # (1, 1)

    # constant direction mask: [h | 0] for forward rows, [0 | h] for backward rows (built once)
    one_bh = jnp.ones((B, H), f32)
    zero_bh = jnp.zeros((B, H), f32)
    dirmask = jnp.concatenate(
        [jnp.concatenate([one_bh, zero_bh], axis=1),
         jnp.concatenate([zero_bh, one_bh], axis=1)], axis=0)    # (2B, 2H)

    # ---- phi_x over all timesteps at once (one bf16 matmul, f32 accumulate) ----
    seq0 = jax.nn.relu(jnp.dot(x, phi_w, preferred_element_type=f32) + phi_b)        # (TB, H) f32

    def run_layer(seq_f32, w_ih, b_ih, w_hh, b_hh):
        """One bidirectional GRU layer; fwd/bwd fused into a single recurrent matmul per step."""
        # batched input-to-hidden gates for both directions (one matmul), bias folded in
        gx = jnp.dot(seq_f32.astype(bf16), w_ih, preferred_element_type=f32) + b_ih  # (TB, 2G)
        # scatter once into fused per-step row order: block s = [fwd gates @ t=s ; bwd gates @ t=T-1-s]
        for s in range(T):
            tb = T - 1 - s
            gxf_ref[s * 2 * B:s * 2 * B + B, :] = gx[s * B:(s + 1) * B, 0:G]
            gxf_ref[s * 2 * B + B:(s + 1) * 2 * B, :] = gx[tb * B:(tb + 1) * B, G:2 * G]

        # serial recurrence: 8 steps, forward (rows 0:B) and backward (rows B:2B) in lockstep
        h = jnp.zeros((2 * B, H), f32)
        for s in range(T):                                       # static unroll
            tb = T - 1 - s
            gxs = gxf_ref[s * 2 * B:(s + 1) * 2 * B, :]          # (2B, G) contiguous load
            h_in = jnp.concatenate([h, h], axis=1) * dirmask     # (2B, 2H): [h|0] fwd rows, [0|h] bwd rows
            gh = jnp.dot(h_in.astype(bf16), w_hh, preferred_element_type=f32) + b_hh  # (2B, G)
            rz = jax.nn.sigmoid(gxs[:, 0:2 * H] + gh[:, 0:2 * H])   # one EUP issue for r and z together
            r = rz[:, 0:H]
            z = rz[:, H:2 * H]
            n = jnp.tanh(gxs[:, 2 * H:3 * H] + r * gh[:, 2 * H:3 * H])
            h = n + z * (h - n)
            # store fwd output for time s (lanes 0:H) and bwd output for time T-1-s (lanes H:2H)
            fr_ref[s * B:(s + 1) * B, 0:H] = h[0:B, :]
            fr_ref[tb * B:(tb + 1) * B, H:2 * H] = h[B:2 * B, :]
        return fr_ref[...]                                       # (TB, 2H) f32, read before reuse

    # GRU layer 0, then layer 1 (input = [fwd | bwd] of layer 0); scratch buffers are reused
    fr0 = run_layer(seq0, w_ih0, b_ih0, w_hh0, b_hh0)
    fr1 = run_layer(fr0, w_ih1, b_ih1, w_hh1, b_hh1)

    # ---- out1 (Linear(2H->1)+ReLU) and out2 (Linear(T->1)) as a VPU/XLU-only f32 tail ----
    u = jnp.sum(fr1 * w1row, axis=1, keepdims=True) + out1_b     # (TB, 1)
    yw = jax.nn.relu(u) * w2rep                                  # (TB, 1)
    acc = yw[0:B, :]
    for t in range(1, T):                                        # static unroll
        acc = acc + yw[t * B:(t + 1) * B, :]
    res = acc + out2_b                                           # (B, 1)

    # lane-dense store; the wrapper slices [:, :1]
    o_ref[...] = jnp.broadcast_to(res, (B, 128)).astype(o_ref.dtype)


@jax.jit
def time_series_rnn_discriminator(x, slabs):
    slab_a, slab_b, slab_c = slabs
    bb, tt, dd = x.shape
    assert (bb, tt, dd) == (B, T, D)
    # wrapper-side layout plumbing: time-major rows (row = t*B + b), bf16 matmul operand
    x_tm = jnp.transpose(x, (1, 0, 2)).reshape(T * B, D).astype(jnp.bfloat16)
    out_padded = pl.pallas_call(
        _discriminator_kernel,
        out_shape=jax.ShapeDtypeStruct((B, 128), jnp.float32),
        in_specs=[pl.BlockSpec(memory_space=pltpu.MemorySpace.VMEM)] * 4,
        out_specs=pl.BlockSpec(memory_space=pltpu.MemorySpace.VMEM),
        scratch_shapes=[pltpu.VMEM((2 * T * B, G), jnp.float32),   # fused per-step gx
                        pltpu.VMEM((T * B, 2 * H), jnp.float32)],  # per-layer [fwd|bwd] hidden outputs
    )(x_tm, slab_a, slab_b, slab_c)
    return out_padded[:, 0:1]


# ----------------------------------------------------------------------------
# Parameter init (natural PyTorch-style layout) and host-side packing into bf16 slabs.
# ----------------------------------------------------------------------------
def init_params(key, latent_dim, input_dim, seq_len):
    """Deterministic init mirroring PyTorch default U(-1/sqrt(fan), 1/sqrt(fan)) bounds."""
    keys = iter(jax.random.split(key, 64))

    def unif(shape, bound):
        return jax.random.uniform(next(keys), shape, jnp.float32, -bound, bound)

    H_ = latent_dim
    k_phi = 1.0 / math.sqrt(input_dim)
    phi_w = unif((input_dim, H_), k_phi)
    phi_b = unif((1, H_), k_phi)

    k_gru = 1.0 / math.sqrt(H_)
    gru = []
    for in_dim in (H_, 2 * H_):         # layer 0 input H, layer 1 input 2H (bidirectional)
        for _direction in range(2):     # forward, backward
            gru += [unif((in_dim, 3 * H_), k_gru),   # w_ih^T, cols [r|z|n]
                    unif((H_, 3 * H_), k_gru),       # w_hh^T
                    unif((1, 3 * H_), k_gru),        # b_ih
                    unif((1, 3 * H_), k_gru)]        # b_hh

    k1 = 1.0 / math.sqrt(2 * H_)
    out1_w = unif((2 * H_, 1), k1)
    out1_b = unif((1, 1), k1)
    k2 = 1.0 / math.sqrt(seq_len)
    out2_w = unif((seq_len, 1), k2)
    out2_b = unif((1, 1), k2)

    return (phi_w, phi_b, *gru, out1_w, out1_b, out2_w, out2_b)


def pack_params(params):
    """Pack all 22 parameter tensors into 3 lane-dense bf16 slabs (one DMA each, native gate width)."""
    (phi_w, phi_b,
     wih0f, whh0f, bih0f, bhh0f,
     wih0b, whh0b, bih0b, bhh0b,
     wih1f, whh1f, bih1f, bhh1f,
     wih1b, whh1b, bih1b, bhh1b,
     out1_w, out1_b, out2_w, out2_b) = params

    def rowpad(a, rows):
        return jnp.pad(a, ((0, rows - a.shape[0]), (0, 0)))

    def cat_dirs(wf, wb):
        return jnp.concatenate([wf, wb], axis=1)                              # (rows, 2G)

    # slab A: input-to-hidden weights/biases, both layers, both directions (rows 16-aligned)
    slab_a = jnp.concatenate([
        cat_dirs(wih0f, wih0b),                      # rows   0: 32
        rowpad(cat_dirs(bih0f, bih0b), 16),          # rows  32: 48
        cat_dirs(wih1f, wih1b),                      # rows  48:112
        rowpad(cat_dirs(bih1f, bih1b), 16),          # rows 112:128
    ], axis=0).astype(jnp.bfloat16)                                           # (128, 2G)

    def hh_block(whf, whb, bhf, bhb):
        w = jnp.concatenate([whf, whb], axis=0)                               # (2H, G)
        bias = jnp.concatenate([jnp.tile(bhf, (B, 1)),
                                jnp.tile(bhb, (B, 1))], axis=0)               # (2B, G)
        return jnp.concatenate([w, rowpad(bias, 16)], axis=0)                 # (80, G)

    # slab B: recurrent weights/biases (forward rows stacked over backward rows)
    slab_b = jnp.concatenate([hh_block(whh0f, whh0b, bhh0f, bhh0b),
                              hh_block(whh1f, whh1b, bhh1f, bhh1b)],
                             axis=0).astype(jnp.bfloat16)                     # (160, G)

    # slab C: phi_x, out1, out2 (2H = 64 lanes wide)
    lanes_c = 2 * H

    def lanepad(a):
        return jnp.pad(a, ((0, 0), (0, lanes_c - a.shape[1])))

    w2rep = jnp.repeat(out2_w, B, axis=0)                                     # (TB, 1): row t*B+b = out2_w[t]
    scal = jnp.zeros((1, lanes_c), jnp.float32)
    scal = scal.at[0, 0].set(out1_b[0, 0]).at[0, 1].set(out2_b[0, 0])
    slab_c = jnp.concatenate([
        lanepad(phi_w),                  # rows  0:16
        rowpad(lanepad(phi_b), 16),      # rows 16:32
        rowpad(out1_w.T, 16),            # rows 32:48
        rowpad(lanepad(w2rep), 16),      # rows 48:64
        rowpad(scal, 16),                # rows 64:80
    ], axis=0).astype(jnp.bfloat16)                                           # (80, 2H)

    return slab_a, slab_b, slab_c


if __name__ == "__main__":
    key = jax.random.PRNGKey(0)
    k_x, k_p = jax.random.split(key)
    x = jax.random.normal(k_x, (BATCH, SEQ_LEN, INPUT_DIM), jnp.float32)
    params = init_params(k_p, LATENT_DIM, INPUT_DIM, SEQ_LEN)
    slabs = pack_params(params)

    out = jax.block_until_ready(time_series_rnn_discriminator(x, slabs))
    assert out.shape == (BATCH, 1), out.shape

    # tight check vs. a reference run at the kernel's precision (bf16 matmul operands, bf16-stored params)
    params_q = jax.tree_util.tree_map(lambda p: p.astype(jnp.bfloat16).astype(jnp.float32), params)
    ref_bf16 = jax.block_until_ready(
        jax.jit(lambda xx: _forward_reference(xx, params_q, cast_matmul_to_bf16=True))(x))
    assert jnp.allclose(out, ref_bf16, atol=2e-3, rtol=2e-3), (out, ref_bf16)

    # sanity band vs. the exact-f32 module math (bf16 matmul operands shift results by O(1%))
    ref_f32 = jax.block_until_ready(
        jax.jit(lambda xx: _forward_reference(xx, params, cast_matmul_to_bf16=False))(x))
    assert jnp.allclose(out, ref_f32, atol=1e-1, rtol=1e-1), (out, ref_f32)

    print("KERNEL_OK")
</pallas_src>

<mosaic_0001>
module attributes {stable_mosaic.version = 11 : i64} {
  func.func @_discriminator_kernel(%arg0: memref<16x16xbf16, #tpu.memory_space<vmem>>, %arg1: memref<128x192xbf16, #tpu.memory_space<vmem>>, %arg2: memref<160x96xbf16, #tpu.memory_space<vmem>>, %arg3: memref<80x64xbf16, #tpu.memory_space<vmem>>, %arg4: memref<2x128xf32, #tpu.memory_space<vmem>>, %arg5: memref<32x96xf32, #tpu.memory_space<vmem>>, %arg6: memref<16x64xf32, #tpu.memory_space<vmem>>) attributes {dimension_semantics = [], scalar_prefetch = 0 : i64, scratch_operands = 2 : i64, tpu.core_type = #tpu.core_type<tc>} {
    %c0 = arith.constant 0 : index
    %c0_0 = arith.constant 0 : index
    %0 = vector.load %arg0[%c0, %c0_0] : memref<16x16xbf16, #tpu.memory_space<vmem>>, vector<16x16xbf16>
    %c0_1 = arith.constant 0 : index
    %c0_2 = arith.constant 0 : index
    %1 = vector.load %arg1[%c0_1, %c0_2] : memref<128x192xbf16, #tpu.memory_space<vmem>>, vector<32x192xbf16>
    %c32 = arith.constant 32 : index
    %c0_3 = arith.constant 0 : index
    %2 = vector.load %arg1[%c32, %c0_3] : memref<128x192xbf16, #tpu.memory_space<vmem>>, vector<1x192xbf16>
    %3 = arith.extf %2 : vector<1x192xbf16> to vector<1x192xf32>
    %c48 = arith.constant 48 : index
    %c0_4 = arith.constant 0 : index
    %4 = vector.load %arg1[%c48, %c0_4] : memref<128x192xbf16, #tpu.memory_space<vmem>>, vector<64x192xbf16>
    %c112 = arith.constant 112 : index
    %c0_5 = arith.constant 0 : index
    %5 = vector.load %arg1[%c112, %c0_5] : memref<128x192xbf16, #tpu.memory_space<vmem>>, vector<1x192xbf16>
    %6 = arith.extf %5 : vector<1x192xbf16> to vector<1x192xf32>
    %c0_6 = arith.constant 0 : index
    %c0_7 = arith.constant 0 : index
    %7 = vector.load %arg2[%c0_6, %c0_7] : memref<160x96xbf16, #tpu.memory_space<vmem>>, vector<64x96xbf16>
    %c64 = arith.constant 64 : index
    %c0_8 = arith.constant 0 : index
    %8 = vector.load %arg2[%c64, %c0_8] : memref<160x96xbf16, #tpu.memory_space<vmem>>, vector<4x96xbf16>
    %9 = arith.extf %8 : vector<4x96xbf16> to vector<4x96xf32>
    %c80 = arith.constant 80 : index
    %c0_9 = arith.constant 0 : index
    %10 = vector.load %arg2[%c80, %c0_9] : memref<160x96xbf16, #tpu.memory_space<vmem>>, vector<64x96xbf16>
    %c144 = arith.constant 144 : index
    %c0_10 = arith.constant 0 : index
    %11 = vector.load %arg2[%c144, %c0_10] : memref<160x96xbf16, #tpu.memory_space<vmem>>, vector<4x96xbf16>
    %12 = arith.extf %11 : vector<4x96xbf16> to vector<4x96xf32>
    %c0_11 = arith.constant 0 : index
    %c0_12 = arith.constant 0 : index
    %13 = vector.load %arg3[%c0_11, %c0_12] : memref<80x64xbf16, #tpu.memory_space<vmem>>, vector<16x32xbf16>
    %c16 = arith.constant 16 : index
    %c0_13 = arith.constant 0 : index
    %14 = vector.load %arg3[%c16, %c0_13] : memref<80x64xbf16, #tpu.memory_space<vmem>>, vector<1x32xbf16>
    %15 = arith.extf %14 : vector<1x32xbf16> to vector<1x32xf32>
    %c32_14 = arith.constant 32 : index
    %c0_15 = arith.constant 0 : index
    %16 = vector.load %arg3[%c32_14, %c0_15] : memref<80x64xbf16, #tpu.memory_space<vmem>>, vector<1x64xbf16>
    %17 = arith.extf %16 : vector<1x64xbf16> to vector<1x64xf32>
    %c48_16 = arith.constant 48 : index
    %c0_17 = arith.constant 0 : index
    %18 = vector.load %arg3[%c48_16, %c0_17] : memref<80x64xbf16, #tpu.memory_space<vmem>>, vector<16x1xbf16>
    %19 = arith.extf %18 : vector<16x1xbf16> to vector<16x1xf32>
    %c64_18 = arith.constant 64 : index
    %c0_19 = arith.constant 0 : index
    %20 = vector.load %arg3[%c64_18, %c0_19] : memref<80x64xbf16, #tpu.memory_space<vmem>>, vector<1x1xbf16>
    %21 = arith.extf %20 : vector<1x1xbf16> to vector<1x1xf32>
    %c64_20 = arith.constant 64 : index
    %c1 = arith.constant 1 : index
    %22 = vector.load %arg3[%c64_20, %c1] : memref<80x64xbf16, #tpu.memory_space<vmem>>, vector<1x1xbf16>
    %23 = arith.extf %22 : vector<1x1xbf16> to vector<1x1xf32>
    %cst = arith.constant 1.000000e+00 : f32
    %24 = vector.broadcast %cst : f32 to vector<2x32xf32>
    %cst_21 = arith.constant 0.000000e+00 : f32
    %25 = vector.broadcast %cst_21 : f32 to vector<2x32xf32>
    %26 = tpu.concatenate %24, %25 in 1 : vector<2x32xf32>, vector<2x32xf32> -> vector<2x64xf32>
    %27 = tpu.concatenate %25, %24 in 1 : vector<2x32xf32>, vector<2x32xf32> -> vector<2x64xf32>
    %28 = tpu.concatenate %26, %27 in 0 : vector<2x64xf32>, vector<2x64xf32> -> vector<4x64xf32>
    %cst_22 = arith.constant dense<0.000000e+00> : vector<16x32xf32>
    %29 = tpu.matmul %0, %13, %cst_22 {dimension_numbers = #tpu.dot_dimension_numbers<[1], [0], [0], [1], [0, 0, 1, 1], [], []>} : vector<16x16xbf16>, vector<16x32xbf16>, vector<16x32xf32> -> vector<16x32xf32>
    %30 = vector.broadcast %15 : vector<1x32xf32> to vector<16x32xf32>
    %31 = arith.addf %29, %30 : vector<16x32xf32>
    %cst_23 = arith.constant 0.000000e+00 : f32
    %32 = vector.broadcast %cst_23 : f32 to vector<16x32xf32>
    %33 = arith.maximumf %31, %32 : vector<16x32xf32>
    %34 = arith.truncf %33 : vector<16x32xf32> to vector<16x32xbf16>
    %cst_24 = arith.constant dense<0.000000e+00> : vector<16x192xf32>
    %35 = tpu.matmul %34, %1, %cst_24 {dimension_numbers = #tpu.dot_dimension_numbers<[1], [0], [0], [1], [0, 0, 1, 1], [], []>} : vector<16x32xbf16>, vector<32x192xbf16>, vector<16x192xf32> -> vector<16x192xf32>
    %36 = vector.broadcast %3 : vector<1x192xf32> to vector<16x192xf32>
    %37 = arith.addf %35, %36 : vector<16x192xf32>
    %38 = vector.extract_strided_slice %37 {offsets = [0, 0], sizes = [2, 96], strides = [1, 1]} : vector<16x192xf32> to vector<2x96xf32>
    %c0_25 = arith.constant 0 : index
    %c0_26 = arith.constant 0 : index
    %39 = vector.load %arg5[%c0_25, %c0_26] : memref<32x96xf32, #tpu.memory_space<vmem>>, vector<2x96xf32>
    tpu.vector_store %arg5[%c0_25, %c0_26], %38 {strides = array<i32>} : memref<32x96xf32, #tpu.memory_space<vmem>>, vector<2x96xf32>,
    %40 = vector.extract_strided_slice %37 {offsets = [14, 96], sizes = [2, 96], strides = [1, 1]} : vector<16x192xf32> to vector<2x96xf32>
    %c2 = arith.constant 2 : index
    %c0_27 = arith.constant 0 : index
    %41 = vector.load %arg5[%c2, %c0_27] : memref<32x96xf32, #tpu.memory_space<vmem>>, vector<2x96xf32>
    tpu.vector_store %arg5[%c2, %c0_27], %40 {strides = array<i32>} : memref<32x96xf32, #tpu.memory_space<vmem>>, vector<2x96xf32>,
    %42 = vector.extract_strided_slice %37 {offsets = [2, 0], sizes = [2, 96], strides = [1, 1]} : vector<16x192xf32> to vector<2x96xf32>
    %c4 = arith.constant 4 : index
    %c0_28 = arith.constant 0 : index
    %43 = vector.load %arg5[%c4, %c0_28] : memref<32x96xf32, #tpu.memory_space<vmem>>, vector<2x96xf32>
    tpu.vector_store %arg5[%c4, %c0_28], %42 {strides = array<i32>} : memref<32x96xf32, #tpu.memory_space<vmem>>, vector<2x96xf32>,
    %44 = vector.extract_strided_slice %37 {offsets = [12, 96], sizes = [2, 96], strides = [1, 1]} : vector<16x192xf32> to vector<2x96xf32>
    %c6 = arith.constant 6 : index
    %c0_29 = arith.constant 0 : index
    %45 = vector.load %arg5[%c6, %c0_29] : memref<32x96xf32, #tpu.memory_space<vmem>>, vector<2x96xf32>
    tpu.vector_store %arg5[%c6, %c0_29], %44 {strides = array<i32>} : memref<32x96xf32, #tpu.memory_space<vmem>>, vector<2x96xf32>,
    %46 = vector.extract_strided_slice %37 {offsets = [4, 0], sizes = [2, 96], strides = [1, 1]} : vector<16x192xf32> to vector<2x96xf32>
    %c8 = arith.constant 8 : index
    %c0_30 = arith.constant 0 : index
    %47 = vector.load %arg5[%c8, %c0_30] : memref<32x96xf32, #tpu.memory_space<vmem>>, vector<2x96xf32>
    tpu.vector_store %arg5[%c8, %c0_30], %46 {strides = array<i32>} : memref<32x96xf32, #tpu.memory_space<vmem>>, vector<2x96xf32>,
    %48 = vector.extract_strided_slice %37 {offsets = [10, 96], sizes = [2, 96], strides = [1, 1]} : vector<16x192xf32> to vector<2x96xf32>
    %c10 = arith.constant 10 : index
    %c0_31 = arith.constant 0 : index
    %49 = vector.load %arg5[%c10, %c0_31] : memref<32x96xf32, #tpu.memory_space<vmem>>, vector<2x96xf32>
    tpu.vector_store %arg5[%c10, %c0_31], %48 {strides = array<i32>} : memref<32x96xf32, #tpu.memory_space<vmem>>, vector<2x96xf32>,
    %50 = vector.extract_strided_slice %37 {offsets = [6, 0], sizes = [2, 96], strides = [1, 1]} : vector<16x192xf32> to vector<2x96xf32>
    %c12 = arith.constant 12 : index
    %c0_32 = arith.constant 0 : index
    %51 = vector.load %arg5[%c12, %c0_32] : memref<32x96xf32, #tpu.memory_space<vmem>>, vector<2x96xf32>
    tpu.vector_store %arg5[%c12, %c0_32], %50 {strides = array<i32>} : memref<32x96xf32, #tpu.memory_space<vmem>>, vector<2x96xf32>,
    %52 = vector.extract_strided_slice %37 {offsets = [8, 96], sizes = [2, 96], strides = [1, 1]} : vector<16x192xf32> to vector<2x96xf32>
    %c14 = arith.constant 14 : index
    %c0_33 = arith.constant 0 : index
    %53 = vector.load %arg5[%c14, %c0_33] : memref<32x96xf32, #tpu.memory_space<vmem>>, vector<2x96xf32>
    tpu.vector_store %arg5[%c14, %c0_33], %52 {strides = array<i32>} : memref<32x96xf32, #tpu.memory_space<vmem>>, vector<2x96xf32>,
    %54 = vector.extract_strided_slice %37 {offsets = [8, 0], sizes = [2, 96], strides = [1, 1]} : vector<16x192xf32> to vector<2x96xf32>
    %c16_34 = arith.constant 16 : index
    %c0_35 = arith.constant 0 : index
    %55 = vector.load %arg5[%c16_34, %c0_35] : memref<32x96xf32, #tpu.memory_space<vmem>>, vector<2x96xf32>
    tpu.vector_store %arg5[%c16_34, %c0_35], %54 {strides = array<i32>} : memref<32x96xf32, #tpu.memory_space<vmem>>, vector<2x96xf32>,
    %56 = vector.extract_strided_slice %37 {offsets = [6, 96], sizes = [2, 96], strides = [1, 1]} : vector<16x192xf32> to vector<2x96xf32>
    %c18 = arith.constant 18 : index
    %c0_36 = arith.constant 0 : index
    %57 = vector.load %arg5[%c18, %c0_36] : memref<32x96xf32, #tpu.memory_space<vmem>>, vector<2x96xf32>
    tpu.vector_store %arg5[%c18, %c0_36], %56 {strides = array<i32>} : memref<32x96xf32, #tpu.memory_space<vmem>>, vector<2x96xf32>,
    %58 = vector.extract_strided_slice %37 {offsets = [10, 0], sizes = [2, 96], strides = [1, 1]} : vector<16x192xf32> to vector<2x96xf32>
    %c20 = arith.constant 20 : index
    %c0_37 = arith.constant 0 : index
    %59 = vector.load %arg5[%c20, %c0_37] : memref<32x96xf32, #tpu.memory_space<vmem>>, vector<2x96xf32>
    tpu.vector_store %arg5[%c20, %c0_37], %58 {strides = array<i32>} : memref<32x96xf32, #tpu.memory_space<vmem>>, vector<2x96xf32>,
    %60 = vector.extract_strided_slice %37 {offsets = [4, 96], sizes = [2, 96], strides = [1, 1]} : vector<16x192xf32> to vector<2x96xf32>
    %c22 = arith.constant 22 : index
    %c0_38 = arith.constant 0 : index
    %61 = vector.load %arg5[%c22, %c0_38] : memref<32x96xf32, #tpu.memory_space<vmem>>, vector<2x96xf32>
    tpu.vector_store %arg5[%c22, %c0_38], %60 {strides = array<i32>} : memref<32x96xf32, #tpu.memory_space<vmem>>, vector<2x96xf32>,
    %62 = vector.extract_strided_slice %37 {offsets = [12, 0], sizes = [2, 96], strides = [1, 1]} : vector<16x192xf32> to vector<2x96xf32>
    %c24 = arith.constant 24 : index
    %c0_39 = arith.constant 0 : index
    %63 = vector.load %arg5[%c24, %c0_39] : memref<32x96xf32, #tpu.memory_space<vmem>>, vector<2x96xf32>
    tpu.vector_store %arg5[%c24, %c0_39], %62 {strides = array<i32>} : memref<32x96xf32, #tpu.memory_space<vmem>>, vector<2x96xf32>,
    %64 = vector.extract_strided_slice %37 {offsets = [2, 96], sizes = [2, 96], strides = [1, 1]} : vector<16x192xf32> to vector<2x96xf32>
    %c26 = arith.constant 26 : index
    %c0_40 = arith.constant 0 : index
    %65 = vector.load %arg5[%c26, %c0_40] : memref<32x96xf32, #tpu.memory_space<vmem>>, vector<2x96xf32>
    tpu.vector_store %arg5[%c26, %c0_40], %64 {strides = array<i32>} : memref<32x96xf32, #tpu.memory_space<vmem>>, vector<2x96xf32>,
    %66 = vector.extract_strided_slice %37 {offsets = [14, 0], sizes = [2, 96], strides = [1, 1]} : vector<16x192xf32> to vector<2x96xf32>
    %c28 = arith.constant 28 : index
    %c0_41 = arith.constant 0 : index
    %67 = vector.load %arg5[%c28, %c0_41] : memref<32x96xf32, #tpu.memory_space<vmem>>, vector<2x96xf32>
    tpu.vector_store %arg5[%c28, %c0_41], %66 {strides = array<i32>} : memref<32x96xf32, #tpu.memory_space<vmem>>, vector<2x96xf32>,
    %68 = vector.extract_strided_slice %37 {offsets = [0, 96], sizes = [2, 96], strides = [1, 1]} : vector<16x192xf32> to vector<2x96xf32>
    %c30 = arith.constant 30 : index
    %c0_42 = arith.constant 0 : index
    %69 = vector.load %arg5[%c30, %c0_42] : memref<32x96xf32, #tpu.memory_space<vmem>>, vector<2x96xf32>
    tpu.vector_store %arg5[%c30, %c0_42], %68 {strides = array<i32>} : memref<32x96xf32, #tpu.memory_space<vmem>>, vector<2x96xf32>,
    %cst_43 = arith.constant 0.000000e+00 : f32
    %70 = vector.broadcast %cst_43 : f32 to vector<4x32xf32>
    %c0_44 = arith.constant 0 : index
    %c0_45 = arith.constant 0 : index
    %71 = vector.load %arg5[%c0_44, %c0_45] : memref<32x96xf32, #tpu.memory_space<vmem>>, vector<4x96xf32>
    %72 = tpu.concatenate %70, %70 in 1 : vector<4x32xf32>, vector<4x32xf32> -> vector<4x64xf32>
    %73 = arith.mulf %72, %28 : vector<4x64xf32>
    %74 = arith.truncf %73 : vector<4x64xf32> to vector<4x64xbf16>
    %cst_46 = arith.constant dense<0.000000e+00> : vector<4x96xf32>
    %75 = tpu.matmul %74, %7, %cst_46 {dimension_numbers = #tpu.dot_dimension_numbers<[1], [0], [0], [1], [0, 0, 1, 1], [], []>} : vector<4x64xbf16>, vector<64x96xbf16>, vector<4x96xf32> -> vector<4x96xf32>
    %76 = arith.addf %75, %9 : vector<4x96xf32>
    %77 = vector.extract_strided_slice %71 {offsets = [0, 0], sizes = [4, 64], strides = [1, 1]} : vector<4x96xf32> to vector<4x64xf32>
    %78 = vector.extract_strided_slice %76 {offsets = [0, 0], sizes = [4, 64], strides = [1, 1]} : vector<4x96xf32> to vector<4x64xf32>
    %79 = arith.addf %77, %78 : vector<4x64xf32>
    %80 = arith.negf %79 : vector<4x64xf32>
    %81 = math.exp %80 : vector<4x64xf32>
    %cst_47 = arith.constant 1.000000e+00 : f32
    %82 = vector.broadcast %cst_47 : f32 to vector<4x64xf32>
    %83 = arith.addf %82, %81 : vector<4x64xf32>
    %84 = arith.divf %82, %83 : vector<4x64xf32>
    %85 = vector.extract_strided_slice %84 {offsets = [0, 0], sizes = [4, 32], strides = [1, 1]} : vector<4x64xf32> to vector<4x32xf32>
    %86 = vector.extract_strided_slice %84 {offsets = [0, 32], sizes = [4, 32], strides = [1, 1]} : vector<4x64xf32> to vector<4x32xf32>
    %87 = vector.extract_strided_slice %71 {offsets = [0, 64], sizes = [4, 32], strides = [1, 1]} : vector<4x96xf32> to vector<4x32xf32>
    %88 = vector.extract_strided_slice %76 {offsets = [0, 64], sizes = [4, 32], strides = [1, 1]} : vector<4x96xf32> to vector<4x32xf32>
    %89 = arith.mulf %85, %88 : vector<4x32xf32>
    %90 = arith.addf %87, %89 : vector<4x32xf32>
    %91 = math.tanh %90 : vector<4x32xf32>
    %92 = arith.subf %70, %91 : vector<4x32xf32>
    %93 = arith.mulf %86, %92 : vector<4x32xf32>
    %94 = arith.addf %91, %93 : vector<4x32xf32>
    %95 = vector.extract_strided_slice %94 {offsets = [0, 0], sizes = [2, 32], strides = [1, 1]} : vector<4x32xf32> to vector<2x32xf32>
    %c0_48 = arith.constant 0 : index
    %c0_49 = arith.constant 0 : index
    %96 = vector.load %arg6[%c0_48, %c0_49] : memref<16x64xf32, #tpu.memory_space<vmem>>, vector<2x32xf32>
    tpu.vector_store %arg6[%c0_48, %c0_49], %95 {strides = array<i32>} : memref<16x64xf32, #tpu.memory_space<vmem>>, vector<2x32xf32>,
    %97 = vector.extract_strided_slice %94 {offsets = [2, 0], sizes = [2, 32], strides = [1, 1]} : vector<4x32xf32> to vector<2x32xf32>
    %c14_50 = arith.constant 14 : index
    %c32_51 = arith.constant 32 : index
    %98 = vector.load %arg6[%c14_50, %c32_51] : memref<16x64xf32, #tpu.memory_space<vmem>>, vector<2x32xf32>
    tpu.vector_store %arg6[%c14_50, %c32_51], %97 {strides = array<i32>} : memref<16x64xf32, #tpu.memory_space<vmem>>, vector<2x32xf32>,
    %c4_52 = arith.constant 4 : index
    %c0_53 = arith.constant 0 : index
    %99 = vector.load %arg5[%c4_52, %c0_53] : memref<32x96xf32, #tpu.memory_space<vmem>>, vector<4x96xf32>
    %100 = tpu.concatenate %94, %94 in 1 : vector<4x32xf32>, vector<4x32xf32> -> vector<4x64xf32>
    %101 = arith.mulf %100, %28 : vector<4x64xf32>
    %102 = arith.truncf %101 : vector<4x64xf32> to vector<4x64xbf16>
    %cst_54 = arith.constant dense<0.000000e+00> : vector<4x96xf32>
    %103 = tpu.matmul %102, %7, %cst_54 {dimension_numbers = #tpu.dot_dimension_numbers<[1], [0], [0], [1], [0, 0, 1, 1], [], []>} : vector<4x64xbf16>, vector<64x96xbf16>, vector<4x96xf32> -> vector<4x96xf32>
    %104 = arith.addf %103, %9 : vector<4x96xf32>
    %105 = vector.extract_strided_slice %99 {offsets = [0, 0], sizes = [4, 64], strides = [1, 1]} : vector<4x96xf32> to vector<4x64xf32>
    %106 = vector.extract_strided_slice %104 {offsets = [0, 0], sizes = [4, 64], strides = [1, 1]} : vector<4x96xf32> to vector<4x64xf32>
    %107 = arith.addf %105, %106 : vector<4x64xf32>
    %108 = arith.negf %107 : vector<4x64xf32>
    %109 = math.exp %108 : vector<4x64xf32>
    %cst_55 = arith.constant 1.000000e+00 : f32
    %110 = vector.broadcast %cst_55 : f32 to vector<4x64xf32>
    %111 = arith.addf %110, %109 : vector<4x64xf32>
    %112 = arith.divf %110, %111 : vector<4x64xf32>
    %113 = vector.extract_strided_slice %112 {offsets = [0, 0], sizes = [4, 32], strides = [1, 1]} : vector<4x64xf32> to vector<4x32xf32>
    %114 = vector.extract_strided_slice %112 {offsets = [0, 32], sizes = [4, 32], strides = [1, 1]} : vector<4x64xf32> to vector<4x32xf32>
    %115 = vector.extract_strided_slice %99 {offsets = [0, 64], sizes = [4, 32], strides = [1, 1]} : vector<4x96xf32> to vector<4x32xf32>
    %116 = vector.extract_strided_slice %104 {offsets = [0, 64], sizes = [4, 32], strides = [1, 1]} : vector<4x96xf32> to vector<4x32xf32>
    %117 = arith.mulf %113, %116 : vector<4x32xf32>
    %118 = arith.addf %115, %117 : vector<4x32xf32>
    %119 = math.tanh %118 : vector<4x32xf32>
    %120 = arith.subf %94, %119 : vector<4x32xf32>
    %121 = arith.mulf %114, %120 : vector<4x32xf32>
    %122 = arith.addf %119, %121 : vector<4x32xf32>
    %123 = vector.extract_strided_slice %122 {offsets = [0, 0], sizes = [2, 32], strides = [1, 1]} : vector<4x32xf32> to vector<2x32xf32>
    %c2_56 = arith.constant 2 : index
    %c0_57 = arith.constant 0 : index
    %124 = vector.load %arg6[%c2_56, %c0_57] : memref<16x64xf32, #tpu.memory_space<vmem>>, vector<2x32xf32>
    tpu.vector_store %arg6[%c2_56, %c0_57], %123 {strides = array<i32>} : memref<16x64xf32, #tpu.memory_space<vmem>>, vector<2x32xf32>,
    %125 = vector.extract_strided_slice %122 {offsets = [2, 0], sizes = [2, 32], strides = [1, 1]} : vector<4x32xf32> to vector<2x32xf32>
    %c12_58 = arith.constant 12 : index
    %c32_59 = arith.constant 32 : index
    %126 = vector.load %arg6[%c12_58, %c32_59] : memref<16x64xf32, #tpu.memory_space<vmem>>, vector<2x32xf32>
    tpu.vector_store %arg6[%c12_58, %c32_59], %125 {strides = array<i32>} : memref<16x64xf32, #tpu.memory_space<vmem>>, vector<2x32xf32>,
    %c8_60 = arith.constant 8 : index
    %c0_61 = arith.constant 0 : index
    %127 = vector.load %arg5[%c8_60, %c0_61] : memref<32x96xf32, #tpu.memory_space<vmem>>, vector<4x96xf32>
    %128 = tpu.concatenate %122, %122 in 1 : vector<4x32xf32>, vector<4x32xf32> -> vector<4x64xf32>
    %129 = arith.mulf %128, %28 : vector<4x64xf32>
    %130 = arith.truncf %129 : vector<4x64xf32> to vector<4x64xbf16>
    %cst_62 = arith.constant dense<0.000000e+00> : vector<4x96xf32>
    %131 = tpu.matmul %130, %7, %cst_62 {dimension_numbers = #tpu.dot_dimension_numbers<[1], [0], [0], [1], [0, 0, 1, 1], [], []>} : vector<4x64xbf16>, vector<64x96xbf16>, vector<4x96xf32> -> vector<4x96xf32>
    %132 = arith.addf %131, %9 : vector<4x96xf32>
    %133 = vector.extract_strided_slice %127 {offsets = [0, 0], sizes = [4, 64], strides = [1, 1]} : vector<4x96xf32> to vector<4x64xf32>
    %134 = vector.extract_strided_slice %132 {offsets = [0, 0], sizes = [4, 64], strides = [1, 1]} : vector<4x96xf32> to vector<4x64xf32>
    %135 = arith.addf %133, %134 : vector<4x64xf32>
    %136 = arith.negf %135 : vector<4x64xf32>
    %137 = math.exp %136 : vector<4x64xf32>
    %cst_63 = arith.constant 1.000000e+00 : f32
    %138 = vector.broadcast %cst_63 : f32 to vector<4x64xf32>
    %139 = arith.addf %138, %137 : vector<4x64xf32>
    %140 = arith.divf %138, %139 : vector<4x64xf32>
    %141 = vector.extract_strided_slice %140 {offsets = [0, 0], sizes = [4, 32], strides = [1, 1]} : vector<4x64xf32> to vector<4x32xf32>
    %142 = vector.extract_strided_slice %140 {offsets = [0, 32], sizes = [4, 32], strides = [1, 1]} : vector<4x64xf32> to vector<4x32xf32>
    %143 = vector.extract_strided_slice %127 {offsets = [0, 64], sizes = [4, 32], strides = [1, 1]} : vector<4x96xf32> to vector<4x32xf32>
    %144 = vector.extract_strided_slice %132 {offsets = [0, 64], sizes = [4, 32], strides = [1, 1]} : vector<4x96xf32> to vector<4x32xf32>
    %145 = arith.mulf %141, %144 : vector<4x32xf32>
    %146 = arith.addf %143, %145 : vector<4x32xf32>
    %147 = math.tanh %146 : vector<4x32xf32>
    %148 = arith.subf %122, %147 : vector<4x32xf32>
    %149 = arith.mulf %142, %148 : vector<4x32xf32>
    %150 = arith.addf %147, %149 : vector<4x32xf32>
    %151 = vector.extract_strided_slice %150 {offsets = [0, 0], sizes = [2, 32], strides = [1, 1]} : vector<4x32xf32> to vector<2x32xf32>
    %c4_64 = arith.constant 4 : index
    %c0_65 = arith.constant 0 : index
    %152 = vector.load %arg6[%c4_64, %c0_65] : memref<16x64xf32, #tpu.memory_space<vmem>>, vector<2x32xf32>
    tpu.vector_store %arg6[%c4_64, %c0_65], %151 {strides = array<i32>} : memref<16x64xf32, #tpu.memory_space<vmem>>, vector<2x32xf32>,
    %153 = vector.extract_strided_slice %150 {offsets = [2, 0], sizes = [2, 32], strides = [1, 1]} : vector<4x32xf32> to vector<2x32xf32>
    %c10_66 = arith.constant 10 : index
    %c32_67 = arith.constant 32 : index
    %154 = vector.load %arg6[%c10_66, %c32_67] : memref<16x64xf32, #tpu.memory_space<vmem>>, vector<2x32xf32>
    tpu.vector_store %arg6[%c10_66, %c32_67], %153 {strides = array<i32>} : memref<16x64xf32, #tpu.memory_space<vmem>>, vector<2x32xf32>,
    %c12_68 = arith.constant 12 : index
    %c0_69 = arith.constant 0 : index
    %155 = vector.load %arg5[%c12_68, %c0_69] : memref<32x96xf32, #tpu.memory_space<vmem>>, vector<4x96xf32>
    %156 = tpu.concatenate %150, %150 in 1 : vector<4x32xf32>, vector<4x32xf32> -> vector<4x64xf32>
    %157 = arith.mulf %156, %28 : vector<4x64xf32>
    %158 = arith.truncf %157 : vector<4x64xf32> to vector<4x64xbf16>
    %cst_70 = arith.constant dense<0.000000e+00> : vector<4x96xf32>
    %159 = tpu.matmul %158, %7, %cst_70 {dimension_numbers = #tpu.dot_dimension_numbers<[1], [0], [0], [1], [0, 0, 1, 1], [], []>} : vector<4x64xbf16>, vector<64x96xbf16>, vector<4x96xf32> -> vector<4x96xf32>
    %160 = arith.addf %159, %9 : vector<4x96xf32>
    %161 = vector.extract_strided_slice %155 {offsets = [0, 0], sizes = [4, 64], strides = [1, 1]} : vector<4x96xf32> to vector<4x64xf32>
    %162 = vector.extract_strided_slice %160 {offsets = [0, 0], sizes = [4, 64], strides = [1, 1]} : vector<4x96xf32> to vector<4x64xf32>
    %163 = arith.addf %161, %162 : vector<4x64xf32>
    %164 = arith.negf %163 : vector<4x64xf32>
    %165 = math.exp %164 : vector<4x64xf32>
    %cst_71 = arith.constant 1.000000e+00 : f32
    %166 = vector.broadcast %cst_71 : f32 to vector<4x64xf32>
    %167 = arith.addf %166, %165 : vector<4x64xf32>
    %168 = arith.divf %166, %167 : vector<4x64xf32>
    %169 = vector.extract_strided_slice %168 {offsets = [0, 0], sizes = [4, 32], strides = [1, 1]} : vector<4x64xf32> to vector<4x32xf32>
    %170 = vector.extract_strided_slice %168 {offsets = [0, 32], sizes = [4, 32], strides = [1, 1]} : vector<4x64xf32> to vector<4x32xf32>
    %171 = vector.extract_strided_slice %155 {offsets = [0, 64], sizes = [4, 32], strides = [1, 1]} : vector<4x96xf32> to vector<4x32xf32>
    %172 = vector.extract_strided_slice %160 {offsets = [0, 64], sizes = [4, 32], strides = [1, 1]} : vector<4x96xf32> to vector<4x32xf32>
    %173 = arith.mulf %169, %172 : vector<4x32xf32>
    %174 = arith.addf %171, %173 : vector<4x32xf32>
    %175 = math.tanh %174 : vector<4x32xf32>
    %176 = arith.subf %150, %175 : vector<4x32xf32>
    %177 = arith.mulf %170, %176 : vector<4x32xf32>
    %178 = arith.addf %175, %177 : vector<4x32xf32>
    %179 = vector.extract_strided_slice %178 {offsets = [0, 0], sizes = [2, 32], strides = [1, 1]} : vector<4x32xf32> to vector<2x32xf32>
    %c6_72 = arith.constant 6 : index
    %c0_73 = arith.constant 0 : index
    %180 = vector.load %arg6[%c6_72, %c0_73] : memref<16x64xf32, #tpu.memory_space<vmem>>, vector<2x32xf32>
    tpu.vector_store %arg6[%c6_72, %c0_73], %179 {strides = array<i32>} : memref<16x64xf32, #tpu.memory_space<vmem>>, vector<2x32xf32>,
    %181 = vector.extract_strided_slice %178 {offsets = [2, 0], sizes = [2, 32], strides = [1, 1]} : vector<4x32xf32> to vector<2x32xf32>
    %c8_74 = arith.constant 8 : index
    %c32_75 = arith.constant 32 : index
    %182 = vector.load %arg6[%c8_74, %c32_75] : memref<16x64xf32, #tpu.memory_space<vmem>>, vector<2x32xf32>
    tpu.vector_store %arg6[%c8_74, %c32_75], %181 {strides = array<i32>} : memref<16x64xf32, #tpu.memory_space<vmem>>, vector<2x32xf32>,
    %c16_76 = arith.constant 16 : index
    %c0_77 = arith.constant 0 : index
    %183 = vector.load %arg5[%c16_76, %c0_77] : memref<32x96xf32, #tpu.memory_space<vmem>>, vector<4x96xf32>
    %184 = tpu.concatenate %178, %178 in 1 : vector<4x32xf32>, vector<4x32xf32> -> vector<4x64xf32>
    %185 = arith.mulf %184, %28 : vector<4x64xf32>
    %186 = arith.truncf %185 : vector<4x64xf32> to vector<4x64xbf16>
    %cst_78 = arith.constant dense<0.000000e+00> : vector<4x96xf32>
    %187 = tpu.matmul %186, %7, %cst_78 {dimension_numbers = #tpu.dot_dimension_numbers<[1], [0], [0], [1], [0, 0, 1, 1], [], []>} : vector<4x64xbf16>, vector<64x96xbf16>, vector<4x96xf32> -> vector<4x96xf32>
    %188 = arith.addf %187, %9 : vector<4x96xf32>
    %189 = vector.extract_strided_slice %183 {offsets = [0, 0], sizes = [4, 64], strides = [1, 1]} : vector<4x96xf32> to vector<4x64xf32>
    %190 = vector.extract_strided_slice %188 {offsets = [0, 0], sizes = [4, 64], strides = [1, 1]} : vector<4x96xf32> to vector<4x64xf32>
    %191 = arith.addf %189, %190 : vector<4x64xf32>
    %192 = arith.negf %191 : vector<4x64xf32>
    %193 = math.exp %192 : vector<4x64xf32>
    %cst_79 = arith.constant 1.000000e+00 : f32
    %194 = vector.broadcast %cst_79 : f32 to vector<4x64xf32>
    %195 = arith.addf %194, %193 : vector<4x64xf32>
    %196 = arith.divf %194, %195 : vector<4x64xf32>
    %197 = vector.extract_strided_slice %196 {offsets = [0, 0], sizes = [4, 32], strides = [1, 1]} : vector<4x64xf32> to vector<4x32xf32>
    %198 = vector.extract_strided_slice %196 {offsets = [0, 32], sizes = [4, 32], strides = [1, 1]} : vector<4x64xf32> to vector<4x32xf32>
    %199 = vector.extract_strided_slice %183 {offsets = [0, 64], sizes = [4, 32], strides = [1, 1]} : vector<4x96xf32> to vector<4x32xf32>
    %200 = vector.extract_strided_slice %188 {offsets = [0, 64], sizes = [4, 32], strides = [1, 1]} : vector<4x96xf32> to vector<4x32xf32>
    %201 = arith.mulf %197, %200 : vector<4x32xf32>
    %202 = arith.addf %199, %201 : vector<4x32xf32>
    %203 = math.tanh %202 : vector<4x32xf32>
    %204 = arith.subf %178, %203 : vector<4x32xf32>
    %205 = arith.mulf %198, %204 : vector<4x32xf32>
    %206 = arith.addf %203, %205 : vector<4x32xf32>
    %207 = vector.extract_strided_slice %206 {offsets = [0, 0], sizes = [2, 32], strides = [1, 1]} : vector<4x32xf32> to vector<2x32xf32>
    %c8_80 = arith.constant 8 : index
    %c0_81 = arith.constant 0 : index
    %208 = vector.load %arg6[%c8_80, %c0_81] : memref<16x64xf32, #tpu.memory_space<vmem>>, vector<2x32xf32>
    tpu.vector_store %arg6[%c8_80, %c0_81], %207 {strides = array<i32>} : memref<16x64xf32, #tpu.memory_space<vmem>>, vector<2x32xf32>,
    %209 = vector.extract_strided_slice %206 {offsets = [2, 0], sizes = [2, 32], strides = [1, 1]} : vector<4x32xf32> to vector<2x32xf32>
    %c6_82 = arith.constant 6 : index
    %c32_83 = arith.constant 32 : index
    %210 = vector.load %arg6[%c6_82, %c32_83] : memref<16x64xf32, #tpu.memory_space<vmem>>, vector<2x32xf32>
    tpu.vector_store %arg6[%c6_82, %c32_83], %209 {strides = array<i32>} : memref<16x64xf32, #tpu.memory_space<vmem>>, vector<2x32xf32>,
    %c20_84 = arith.constant 20 : index
    %c0_85 = arith.constant 0 : index
    %211 = vector.load %arg5[%c20_84, %c0_85] : memref<32x96xf32, #tpu.memory_space<vmem>>, vector<4x96xf32>
    %212 = tpu.concatenate %206, %206 in 1 : vector<4x32xf32>, vector<4x32xf32> -> vector<4x64xf32>
    %213 = arith.mulf %212, %28 : vector<4x64xf32>
    %214 = arith.truncf %213 : vector<4x64xf32> to vector<4x64xbf16>
    %cst_86 = arith.constant dense<0.000000e+00> : vector<4x96xf32>
    %215 = tpu.matmul %214, %7, %cst_86 {dimension_numbers = #tpu.dot_dimension_numbers<[1], [0], [0], [1], [0, 0, 1, 1], [], []>} : vector<4x64xbf16>, vector<64x96xbf16>, vector<4x96xf32> -> vector<4x96xf32>
    %216 = arith.addf %215, %9 : vector<4x96xf32>
    %217 = vector.extract_strided_slice %211 {offsets = [0, 0], sizes = [4, 64], strides = [1, 1]} : vector<4x96xf32> to vector<4x64xf32>
    %218 = vector.extract_strided_slice %216 {offsets = [0, 0], sizes = [4, 64], strides = [1, 1]} : vector<4x96xf32> to vector<4x64xf32>
    %219 = arith.addf %217, %218 : vector<4x64xf32>
    %220 = arith.negf %219 : vector<4x64xf32>
    %221 = math.exp %220 : vector<4x64xf32>
    %cst_87 = arith.constant 1.000000e+00 : f32
    %222 = vector.broadcast %cst_87 : f32 to vector<4x64xf32>
    %223 = arith.addf %222, %221 : vector<4x64xf32>
    %224 = arith.divf %222, %223 : vector<4x64xf32>
    %225 = vector.extract_strided_slice %224 {offsets = [0, 0], sizes = [4, 32], strides = [1, 1]} : vector<4x64xf32> to vector<4x32xf32>
    %226 = vector.extract_strided_slice %224 {offsets = [0, 32], sizes = [4, 32], strides = [1, 1]} : vector<4x64xf32> to vector<4x32xf32>
    %227 = vector.extract_strided_slice %211 {offsets = [0, 64], sizes = [4, 32], strides = [1, 1]} : vector<4x96xf32> to vector<4x32xf32>
    %228 = vector.extract_strided_slice %216 {offsets = [0, 64], sizes = [4, 32], strides = [1, 1]} : vector<4x96xf32> to vector<4x32xf32>
    %229 = arith.mulf %225, %228 : vector<4x32xf32>
    %230 = arith.addf %227, %229 : vector<4x32xf32>
    %231 = math.tanh %230 : vector<4x32xf32>
    %232 = arith.subf %206, %231 : vector<4x32xf32>
    %233 = arith.mulf %226, %232 : vector<4x32xf32>
    %234 = arith.addf %231, %233 : vector<4x32xf32>
    %235 = vector.extract_strided_slice %234 {offsets = [0, 0], sizes = [2, 32], strides = [1, 1]} : vector<4x32xf32> to vector<2x32xf32>
    %c10_88 = arith.constant 10 : index
    %c0_89 = arith.constant 0 : index
    %236 = vector.load %arg6[%c10_88, %c0_89] : memref<16x64xf32, #tpu.memory_space<vmem>>, vector<2x32xf32>
    tpu.vector_store %arg6[%c10_88, %c0_89], %235 {strides = array<i32>} : memref<16x64xf32, #tpu.memory_space<vmem>>, vector<2x32xf32>,
    %237 = vector.extract_strided_slice %234 {offsets = [2, 0], sizes = [2, 32], strides = [1, 1]} : vector<4x32xf32> to vector<2x32xf32>
    %c4_90 = arith.constant 4 : index
    %c32_91 = arith.constant 32 : index
    %238 = vector.load %arg6[%c4_90, %c32_91] : memref<16x64xf32, #tpu.memory_space<vmem>>, vector<2x32xf32>
    tpu.vector_store %arg6[%c4_90, %c32_91], %237 {strides = array<i32>} : memref<16x64xf32, #tpu.memory_space<vmem>>, vector<2x32xf32>,
    %c24_92 = arith.constant 24 : index
    %c0_93 = arith.constant 0 : index
    %239 = vector.load %arg5[%c24_92, %c0_93] : memref<32x96xf32, #tpu.memory_space<vmem>>, vector<4x96xf32>
    %240 = tpu.concatenate %234, %234 in 1 : vector<4x32xf32>, vector<4x32xf32> -> vector<4x64xf32>
    %241 = arith.mulf %240, %28 : vector<4x64xf32>
    %242 = arith.truncf %241 : vector<4x64xf32> to vector<4x64xbf16>
    %cst_94 = arith.constant dense<0.000000e+00> : vector<4x96xf32>
    %243 = tpu.matmul %242, %7, %cst_94 {dimension_numbers = #tpu.dot_dimension_numbers<[1], [0], [0], [1], [0, 0, 1, 1], [], []>} : vector<4x64xbf16>, vector<64x96xbf16>, vector<4x96xf32> -> vector<4x96xf32>
    %244 = arith.addf %243, %9 : vector<4x96xf32>
    %245 = vector.extract_strided_slice %239 {offsets = [0, 0], sizes = [4, 64], strides = [1, 1]} : vector<4x96xf32> to vector<4x64xf32>
    %246 = vector.extract_strided_slice %244 {offsets = [0, 0], sizes = [4, 64], strides = [1, 1]} : vector<4x96xf32> to vector<4x64xf32>
    %247 = arith.addf %245, %246 : vector<4x64xf32>
    %248 = arith.negf %247 : vector<4x64xf32>
    %249 = math.exp %248 : vector<4x64xf32>
    %cst_95 = arith.constant 1.000000e+00 : f32
    %250 = vector.broadcast %cst_95 : f32 to vector<4x64xf32>
    %251 = arith.addf %250, %249 : vector<4x64xf32>
    %252 = arith.divf %250, %251 : vector<4x64xf32>
    %253 = vector.extract_strided_slice %252 {offsets = [0, 0], sizes = [4, 32], strides = [1, 1]} : vector<4x64xf32> to vector<4x32xf32>
    %254 = vector.extract_strided_slice %252 {offsets = [0, 32], sizes = [4, 32], strides = [1, 1]} : vector<4x64xf32> to vector<4x32xf32>
    %255 = vector.extract_strided_slice %239 {offsets = [0, 64], sizes = [4, 32], strides = [1, 1]} : vector<4x96xf32> to vector<4x32xf32>
    %256 = vector.extract_strided_slice %244 {offsets = [0, 64], sizes = [4, 32], strides = [1, 1]} : vector<4x96xf32> to vector<4x32xf32>
    %257 = arith.mulf %253, %256 : vector<4x32xf32>
    %258 = arith.addf %255, %257 : vector<4x32xf32>
    %259 = math.tanh %258 : vector<4x32xf32>
    %260 = arith.subf %234, %259 : vector<4x32xf32>
    %261 = arith.mulf %254, %260 : vector<4x32xf32>
    %262 = arith.addf %259, %261 : vector<4x32xf32>
    %263 = vector.extract_strided_slice %262 {offsets = [0, 0], sizes = [2, 32], strides = [1, 1]} : vector<4x32xf32> to vector<2x32xf32>
    %c12_96 = arith.constant 12 : index
    %c0_97 = arith.constant 0 : index
    %264 = vector.load %arg6[%c12_96, %c0_97] : memref<16x64xf32, #tpu.memory_space<vmem>>, vector<2x32xf32>
    tpu.vector_store %arg6[%c12_96, %c0_97], %263 {strides = array<i32>} : memref<16x64xf32, #tpu.memory_space<vmem>>, vector<2x32xf32>,
    %265 = vector.extract_strided_slice %262 {offsets = [2, 0], sizes = [2, 32], strides = [1, 1]} : vector<4x32xf32> to vector<2x32xf32>
    %c2_98 = arith.constant 2 : index
    %c32_99 = arith.constant 32 : index
    %266 = vector.load %arg6[%c2_98, %c32_99] : memref<16x64xf32, #tpu.memory_space<vmem>>, vector<2x32xf32>
    tpu.vector_store %arg6[%c2_98, %c32_99], %265 {strides = array<i32>} : memref<16x64xf32, #tpu.memory_space<vmem>>, vector<2x32xf32>,
    %c28_100 = arith.constant 28 : index
    %c0_101 = arith.constant 0 : index
    %267 = vector.load %arg5[%c28_100, %c0_101] : memref<32x96xf32, #tpu.memory_space<vmem>>, vector<4x96xf32>
    %268 = tpu.concatenate %262, %262 in 1 : vector<4x32xf32>, vector<4x32xf32> -> vector<4x64xf32>
    %269 = arith.mulf %268, %28 : vector<4x64xf32>
    %270 = arith.truncf %269 : vector<4x64xf32> to vector<4x64xbf16>
    %cst_102 = arith.constant dense<0.000000e+00> : vector<4x96xf32>
    %271 = tpu.matmul %270, %7, %cst_102 {dimension_numbers = #tpu.dot_dimension_numbers<[1], [0], [0], [1], [0, 0, 1, 1], [], []>} : vector<4x64xbf16>, vector<64x96xbf16>, vector<4x96xf32> -> vector<4x96xf32>
    %272 = arith.addf %271, %9 : vector<4x96xf32>
    %273 = vector.extract_strided_slice %267 {offsets = [0, 0], sizes = [4, 64], strides = [1, 1]} : vector<4x96xf32> to vector<4x64xf32>
    %274 = vector.extract_strided_slice %272 {offsets = [0, 0], sizes = [4, 64], strides = [1, 1]} : vector<4x96xf32> to vector<4x64xf32>
    %275 = arith.addf %273, %274 : vector<4x64xf32>
    %276 = arith.negf %275 : vector<4x64xf32>
    %277 = math.exp %276 : vector<4x64xf32>
    %cst_103 = arith.constant 1.000000e+00 : f32
    %278 = vector.broadcast %cst_103 : f32 to vector<4x64xf32>
    %279 = arith.addf %278, %277 : vector<4x64xf32>
    %280 = arith.divf %278, %279 : vector<4x64xf32>
    %281 = vector.extract_strided_slice %280 {offsets = [0, 0], sizes = [4, 32], strides = [1, 1]} : vector<4x64xf32> to vector<4x32xf32>
    %282 = vector.extract_strided_slice %280 {offsets = [0, 32], sizes = [4, 32], strides = [1, 1]} : vector<4x64xf32> to vector<4x32xf32>
    %283 = vector.extract_strided_slice %267 {offsets = [0, 64], sizes = [4, 32], strides = [1, 1]} : vector<4x96xf32> to vector<4x32xf32>
    %284 = vector.extract_strided_slice %272 {offsets = [0, 64], sizes = [4, 32], strides = [1, 1]} : vector<4x96xf32> to vector<4x32xf32>
    %285 = arith.mulf %281, %284 : vector<4x32xf32>
    %286 = arith.addf %283, %285 : vector<4x32xf32>
    %287 = math.tanh %286 : vector<4x32xf32>
    %288 = arith.subf %262, %287 : vector<4x32xf32>
    %289 = arith.mulf %282, %288 : vector<4x32xf32>
    %290 = arith.addf %287, %289 : vector<4x32xf32>
    %291 = vector.extract_strided_slice %290 {offsets = [0, 0], sizes = [2, 32], strides = [1, 1]} : vector<4x32xf32> to vector<2x32xf32>
    %c14_104 = arith.constant 14 : index
    %c0_105 = arith.constant 0 : index
    %292 = vector.load %arg6[%c14_104, %c0_105] : memref<16x64xf32, #tpu.memory_space<vmem>>, vector<2x32xf32>
    tpu.vector_store %arg6[%c14_104, %c0_105], %291 {strides = array<i32>} : memref<16x64xf32, #tpu.memory_space<vmem>>, vector<2x32xf32>,
    %293 = vector.extract_strided_slice %290 {offsets = [2, 0], sizes = [2, 32], strides = [1, 1]} : vector<4x32xf32> to vector<2x32xf32>
    %c0_106 = arith.constant 0 : index
    %c32_107 = arith.constant 32 : index
    %294 = vector.load %arg6[%c0_106, %c32_107] : memref<16x64xf32, #tpu.memory_space<vmem>>, vector<2x32xf32>
    tpu.vector_store %arg6[%c0_106, %c32_107], %293 {strides = array<i32>} : memref<16x64xf32, #tpu.memory_space<vmem>>, vector<2x32xf32>,
    %c0_108 = arith.constant 0 : index
    %c0_109 = arith.constant 0 : index
    %295 = vector.load %arg6[%c0_108, %c0_109] : memref<16x64xf32, #tpu.memory_space<vmem>>, vector<16x64xf32>
    %296 = arith.truncf %295 : vector<16x64xf32> to vector<16x64xbf16>
    %cst_110 = arith.constant dense<0.000000e+00> : vector<16x192xf32>
    %297 = tpu.matmul %296, %4, %cst_110 {dimension_numbers = #tpu.dot_dimension_numbers<[1], [0], [0], [1], [0, 0, 1, 1], [], []>} : vector<16x64xbf16>, vector<64x192xbf16>, vector<16x192xf32> -> vector<16x192xf32>
    %298 = vector.broadcast %6 : vector<1x192xf32> to vector<16x192xf32>
    %299 = arith.addf %297, %298 : vector<16x192xf32>
    %300 = vector.extract_strided_slice %299 {offsets = [0, 0], sizes = [2, 96], strides = [1, 1]} : vector<16x192xf32> to vector<2x96xf32>
    %c0_111 = arith.constant 0 : index
    %c0_112 = arith.constant 0 : index
    %301 = vector.load %arg5[%c0_111, %c0_112] : memref<32x96xf32, #tpu.memory_space<vmem>>, vector<2x96xf32>
    tpu.vector_store %arg5[%c0_111, %c0_112], %300 {strides = array<i32>} : memref<32x96xf32, #tpu.memory_space<vmem>>, vector<2x96xf32>,
    %302 = vector.extract_strided_slice %299 {offsets = [14, 96], sizes = [2, 96], strides = [1, 1]} : vector<16x192xf32> to vector<2x96xf32>
    %c2_113 = arith.constant 2 : index
    %c0_114 = arith.constant 0 : index
    %303 = vector.load %arg5[%c2_113, %c0_114] : memref<32x96xf32, #tpu.memory_space<vmem>>, vector<2x96xf32>
    tpu.vector_store %arg5[%c2_113, %c0_114], %302 {strides = array<i32>} : memref<32x96xf32, #tpu.memory_space<vmem>>, vector<2x96xf32>,
    %304 = vector.extract_strided_slice %299 {offsets = [2, 0], sizes = [2, 96], strides = [1, 1]} : vector<16x192xf32> to vector<2x96xf32>
    %c4_115 = arith.constant 4 : index
    %c0_116 = arith.constant 0 : index
    %305 = vector.load %arg5[%c4_115, %c0_116] : memref<32x96xf32, #tpu.memory_space<vmem>>, vector<2x96xf32>
    tpu.vector_store %arg5[%c4_115, %c0_116], %304 {strides = array<i32>} : memref<32x96xf32, #tpu.memory_space<vmem>>, vector<2x96xf32>,
    %306 = vector.extract_strided_slice %299 {offsets = [12, 96], sizes = [2, 96], strides = [1, 1]} : vector<16x192xf32> to vector<2x96xf32>
    %c6_117 = arith.constant 6 : index
    %c0_118 = arith.constant 0 : index
    %307 = vector.load %arg5[%c6_117, %c0_118] : memref<32x96xf32, #tpu.memory_space<vmem>>, vector<2x96xf32>
    tpu.vector_store %arg5[%c6_117, %c0_118], %306 {strides = array<i32>} : memref<32x96xf32, #tpu.memory_space<vmem>>, vector<2x96xf32>,
    %308 = vector.extract_strided_slice %299 {offsets = [4, 0], sizes = [2, 96], strides = [1, 1]} : vector<16x192xf32> to vector<2x96xf32>
    %c8_119 = arith.constant 8 : index
    %c0_120 = arith.constant 0 : index
    %309 = vector.load %arg5[%c8_119, %c0_120] : memref<32x96xf32, #tpu.memory_space<vmem>>, vector<2x96xf32>
    tpu.vector_store %arg5[%c8_119, %c0_120], %308 {strides = array<i32>} : memref<32x96xf32, #tpu.memory_space<vmem>>, vector<2x96xf32>,
    %310 = vector.extract_strided_slice %299 {offsets = [10, 96], sizes = [2, 96], strides = [1, 1]} : vector<16x192xf32> to vector<2x96xf32>
    %c10_121 = arith.constant 10 : index
    %c0_122 = arith.constant 0 : index
    %311 = vector.load %arg5[%c10_121, %c0_122] : memref<32x96xf32, #tpu.memory_space<vmem>>, vector<2x96xf32>
    tpu.vector_store %arg5[%c10_121, %c0_122], %310 {strides = array<i32>} : memref<32x96xf32, #tpu.memory_space<vmem>>, vector<2x96xf32>,
    %312 = vector.extract_strided_slice %299 {offsets = [6, 0], sizes = [2, 96], strides = [1, 1]} : vector<16x192xf32> to vector<2x96xf32>
    %c12_123 = arith.constant 12 : index
    %c0_124 = arith.constant 0 : index
    %313 = vector.load %arg5[%c12_123, %c0_124] : memref<32x96xf32, #tpu.memory_space<vmem>>, vector<2x96xf32>
    tpu.vector_store %arg5[%c12_123, %c0_124], %312 {strides = array<i32>} : memref<32x96xf32, #tpu.memory_space<vmem>>, vector<2x96xf32>,
    %314 = vector.extract_strided_slice %299 {offsets = [8, 96], sizes = [2, 96], strides = [1, 1]} : vector<16x192xf32> to vector<2x96xf32>
    %c14_125 = arith.constant 14 : index
    %c0_126 = arith.constant 0 : index
    %315 = vector.load %arg5[%c14_125, %c0_126] : memref<32x96xf32, #tpu.memory_space<vmem>>, vector<2x96xf32>
    tpu.vector_store %arg5[%c14_125, %c0_126], %314 {strides = array<i32>} : memref<32x96xf32, #tpu.memory_space<vmem>>, vector<2x96xf32>,
    %316 = vector.extract_strided_slice %299 {offsets = [8, 0], sizes = [2, 96], strides = [1, 1]} : vector<16x192xf32> to vector<2x96xf32>
    %c16_127 = arith.constant 16 : index
    %c0_128 = arith.constant 0 : index
    %317 = vector.load %arg5[%c16_127, %c0_128] : memref<32x96xf32, #tpu.memory_space<vmem>>, vector<2x96xf32>
    tpu.vector_store %arg5[%c16_127, %c0_128], %316 {strides = array<i32>} : memref<32x96xf32, #tpu.memory_space<vmem>>, vector<2x96xf32>,
    %318 = vector.extract_strided_slice %299 {offsets = [6, 96], sizes = [2, 96], strides = [1, 1]} : vector<16x192xf32> to vector<2x96xf32>
    %c18_129 = arith.constant 18 : index
    %c0_130 = arith.constant 0 : index
    %319 = vector.load %arg5[%c18_129, %c0_130] : memref<32x96xf32, #tpu.memory_space<vmem>>, vector<2x96xf32>
    tpu.vector_store %arg5[%c18_129, %c0_130], %318 {strides = array<i32>} : memref<32x96xf32, #tpu.memory_space<vmem>>, vector<2x96xf32>,
    %320 = vector.extract_strided_slice %299 {offsets = [10, 0], sizes = [2, 96], strides = [1, 1]} : vector<16x192xf32> to vector<2x96xf32>
    %c20_131 = arith.constant 20 : index
    %c0_132 = arith.constant 0 : index
    %321 = vector.load %arg5[%c20_131, %c0_132] : memref<32x96xf32, #tpu.memory_space<vmem>>, vector<2x96xf32>
    tpu.vector_store %arg5[%c20_131, %c0_132], %320 {strides = array<i32>} : memref<32x96xf32, #tpu.memory_space<vmem>>, vector<2x96xf32>,
    %322 = vector.extract_strided_slice %299 {offsets = [4, 96], sizes = [2, 96], strides = [1, 1]} : vector<16x192xf32> to vector<2x96xf32>
    %c22_133 = arith.constant 22 : index
    %c0_134 = arith.constant 0 : index
    %323 = vector.load %arg5[%c22_133, %c0_134] : memref<32x96xf32, #tpu.memory_space<vmem>>, vector<2x96xf32>
    tpu.vector_store %arg5[%c22_133, %c0_134], %322 {strides = array<i32>} : memref<32x96xf32, #tpu.memory_space<vmem>>, vector<2x96xf32>,
    %324 = vector.extract_strided_slice %299 {offsets = [12, 0], sizes = [2, 96], strides = [1, 1]} : vector<16x192xf32> to vector<2x96xf32>
    %c24_135 = arith.constant 24 : index
    %c0_136 = arith.constant 0 : index
    %325 = vector.load %arg5[%c24_135, %c0_136] : memref<32x96xf32, #tpu.memory_space<vmem>>, vector<2x96xf32>
    tpu.vector_store %arg5[%c24_135, %c0_136], %324 {strides = array<i32>} : memref<32x96xf32, #tpu.memory_space<vmem>>, vector<2x96xf32>,
    %326 = vector.extract_strided_slice %299 {offsets = [2, 96], sizes = [2, 96], strides = [1, 1]} : vector<16x192xf32> to vector<2x96xf32>
    %c26_137 = arith.constant 26 : index
    %c0_138 = arith.constant 0 : index
    %327 = vector.load %arg5[%c26_137, %c0_138] : memref<32x96xf32, #tpu.memory_space<vmem>>, vector<2x96xf32>
    tpu.vector_store %arg5[%c26_137, %c0_138], %326 {strides = array<i32>} : memref<32x96xf32, #tpu.memory_space<vmem>>, vector<2x96xf32>,
    %328 = vector.extract_strided_slice %299 {offsets = [14, 0], sizes = [2, 96], strides = [1, 1]} : vector<16x192xf32> to vector<2x96xf32>
    %c28_139 = arith.constant 28 : index
    %c0_140 = arith.constant 0 : index
    %329 = vector.load %arg5[%c28_139, %c0_140] : memref<32x96xf32, #tpu.memory_space<vmem>>, vector<2x96xf32>
    tpu.vector_store %arg5[%c28_139, %c0_140], %328 {strides = array<i32>} : memref<32x96xf32, #tpu.memory_space<vmem>>, vector<2x96xf32>,
    %330 = vector.extract_strided_slice %299 {offsets = [0, 96], sizes = [2, 96], strides = [1, 1]} : vector<16x192xf32> to vector<2x96xf32>
    %c30_141 = arith.constant 30 : index
    %c0_142 = arith.constant 0 : index
    %331 = vector.load %arg5[%c30_141, %c0_142] : memref<32x96xf32, #tpu.memory_space<vmem>>, vector<2x96xf32>
    tpu.vector_store %arg5[%c30_141, %c0_142], %330 {strides = array<i32>} : memref<32x96xf32, #tpu.memory_space<vmem>>, vector<2x96xf32>,
    %cst_143 = arith.constant 0.000000e+00 : f32
    %332 = vector.broadcast %cst_143 : f32 to vector<4x32xf32>
    %c0_144 = arith.constant 0 : index
    %c0_145 = arith.constant 0 : index
    %333 = vector.load %arg5[%c0_144, %c0_145] : memref<32x96xf32, #tpu.memory_space<vmem>>, vector<4x96xf32>
    %334 = tpu.concatenate %332, %332 in 1 : vector<4x32xf32>, vector<4x32xf32> -> vector<4x64xf32>
    %335 = arith.mulf %334, %28 : vector<4x64xf32>
    %336 = arith.truncf %335 : vector<4x64xf32> to vector<4x64xbf16>
    %cst_146 = arith.constant dense<0.000000e+00> : vector<4x96xf32>
    %337 = tpu.matmul %336, %10, %cst_146 {dimension_numbers = #tpu.dot_dimension_numbers<[1], [0], [0], [1], [0, 0, 1, 1], [], []>} : vector<4x64xbf16>, vector<64x96xbf16>, vector<4x96xf32> -> vector<4x96xf32>
    %338 = arith.addf %337, %12 : vector<4x96xf32>
    %339 = vector.extract_strided_slice %333 {offsets = [0, 0], sizes = [4, 64], strides = [1, 1]} : vector<4x96xf32> to vector<4x64xf32>
    %340 = vector.extract_strided_slice %338 {offsets = [0, 0], sizes = [4, 64], strides = [1, 1]} : vector<4x96xf32> to vector<4x64xf32>
    %341 = arith.addf %339, %340 : vector<4x64xf32>
    %342 = arith.negf %341 : vector<4x64xf32>
    %343 = math.exp %342 : vector<4x64xf32>
    %cst_147 = arith.constant 1.000000e+00 : f32
    %344 = vector.broadcast %cst_147 : f32 to vector<4x64xf32>
    %345 = arith.addf %344, %343 : vector<4x64xf32>
    %346 = arith.divf %344, %345 : vector<4x64xf32>
    %347 = vector.extract_strided_slice %346 {offsets = [0, 0], sizes = [4, 32], strides = [1, 1]} : vector<4x64xf32> to vector<4x32xf32>
    %348 = vector.extract_strided_slice %346 {offsets = [0, 32], sizes = [4, 32], strides = [1, 1]} : vector<4x64xf32> to vector<4x32xf32>
    %349 = vector.extract_strided_slice %333 {offsets = [0, 64], sizes = [4, 32], strides = [1, 1]} : vector<4x96xf32> to vector<4x32xf32>
    %350 = vector.extract_strided_slice %338 {offsets = [0, 64], sizes = [4, 32], strides = [1, 1]} : vector<4x96xf32> to vector<4x32xf32>
    %351 = arith.mulf %347, %350 : vector<4x32xf32>
    %352 = arith.addf %349, %351 : vector<4x32xf32>
    %353 = math.tanh %352 : vector<4x32xf32>
    %354 = arith.subf %332, %353 : vector<4x32xf32>
    %355 = arith.mulf %348, %354 : vector<4x32xf32>
    %356 = arith.addf %353, %355 : vector<4x32xf32>
    %357 = vector.extract_strided_slice %356 {offsets = [0, 0], sizes = [2, 32], strides = [1, 1]} : vector<4x32xf32> to vector<2x32xf32>
    %c0_148 = arith.constant 0 : index
    %c0_149 = arith.constant 0 : index
    %358 = vector.load %arg6[%c0_148, %c0_149] : memref<16x64xf32, #tpu.memory_space<vmem>>, vector<2x32xf32>
    tpu.vector_store %arg6[%c0_148, %c0_149], %357 {strides = array<i32>} : memref<16x64xf32, #tpu.memory_space<vmem>>, vector<2x32xf32>,
    %359 = vector.extract_strided_slice %356 {offsets = [2, 0], sizes = [2, 32], strides = [1, 1]} : vector<4x32xf32> to vector<2x32xf32>
    %c14_150 = arith.constant 14 : index
    %c32_151 = arith.constant 32 : index
    %360 = vector.load %arg6[%c14_150, %c32_151] : memref<16x64xf32, #tpu.memory_space<vmem>>, vector<2x32xf32>
    tpu.vector_store %arg6[%c14_150, %c32_151], %359 {strides = array<i32>} : memref<16x64xf32, #tpu.memory_space<vmem>>, vector<2x32xf32>,
    %c4_152 = arith.constant 4 : index
    %c0_153 = arith.constant 0 : index
    %361 = vector.load %arg5[%c4_152, %c0_153] : memref<32x96xf32, #tpu.memory_space<vmem>>, vector<4x96xf32>
    %362 = tpu.concatenate %356, %356 in 1 : vector<4x32xf32>, vector<4x32xf32> -> vector<4x64xf32>
    %363 = arith.mulf %362, %28 : vector<4x64xf32>
    %364 = arith.truncf %363 : vector<4x64xf32> to vector<4x64xbf16>
    %cst_154 = arith.constant dense<0.000000e+00> : vector<4x96xf32>
    %365 = tpu.matmul %364, %10, %cst_154 {dimension_numbers = #tpu.dot_dimension_numbers<[1], [0], [0], [1], [0, 0, 1, 1], [], []>} : vector<4x64xbf16>, vector<64x96xbf16>, vector<4x96xf32> -> vector<4x96xf32>
    %366 = arith.addf %365, %12 : vector<4x96xf32>
    %367 = vector.extract_strided_slice %361 {offsets = [0, 0], sizes = [4, 64], strides = [1, 1]} : vector<4x96xf32> to vector<4x64xf32>
    %368 = vector.extract_strided_slice %366 {offsets = [0, 0], sizes = [4, 64], strides = [1, 1]} : vector<4x96xf32> to vector<4x64xf32>
    %369 = arith.addf %367, %368 : vector<4x64xf32>
    %370 = arith.negf %369 : vector<4x64xf32>
    %371 = math.exp %370 : vector<4x64xf32>
    %cst_155 = arith.constant 1.000000e+00 : f32
    %372 = vector.broadcast %cst_155 : f32 to vector<4x64xf32>
    %373 = arith.addf %372, %371 : vector<4x64xf32>
    %374 = arith.divf %372, %373 : vector<4x64xf32>
    %375 = vector.extract_strided_slice %374 {offsets = [0, 0], sizes = [4, 32], strides = [1, 1]} : vector<4x64xf32> to vector<4x32xf32>
    %376 = vector.extract_strided_slice %374 {offsets = [0, 32], sizes = [4, 32], strides = [1, 1]} : vector<4x64xf32> to vector<4x32xf32>
    %377 = vector.extract_strided_slice %361 {offsets = [0, 64], sizes = [4, 32], strides = [1, 1]} : vector<4x96xf32> to vector<4x32xf32>
    %378 = vector.extract_strided_slice %366 {offsets = [0, 64], sizes = [4, 32], strides = [1, 1]} : vector<4x96xf32> to vector<4x32xf32>
    %379 = arith.mulf %375, %378 : vector<4x32xf32>
    %380 = arith.addf %377, %379 : vector<4x32xf32>
    %381 = math.tanh %380 : vector<4x32xf32>
    %382 = arith.subf %356, %381 : vector<4x32xf32>
    %383 = arith.mulf %376, %382 : vector<4x32xf32>
    %384 = arith.addf %381, %383 : vector<4x32xf32>
    %385 = vector.extract_strided_slice %384 {offsets = [0, 0], sizes = [2, 32], strides = [1, 1]} : vector<4x32xf32> to vector<2x32xf32>
    %c2_156 = arith.constant 2 : index
    %c0_157 = arith.constant 0 : index
    %386 = vector.load %arg6[%c2_156, %c0_157] : memref<16x64xf32, #tpu.memory_space<vmem>>, vector<2x32xf32>
    tpu.vector_store %arg6[%c2_156, %c0_157], %385 {strides = array<i32>} : memref<16x64xf32, #tpu.memory_space<vmem>>, vector<2x32xf32>,
    %387 = vector.extract_strided_slice %384 {offsets = [2, 0], sizes = [2, 32], strides = [1, 1]} : vector<4x32xf32> to vector<2x32xf32>
    %c12_158 = arith.constant 12 : index
    %c32_159 = arith.constant 32 : index
    %388 = vector.load %arg6[%c12_158, %c32_159] : memref<16x64xf32, #tpu.memory_space<vmem>>, vector<2x32xf32>
    tpu.vector_store %arg6[%c12_158, %c32_159], %387 {strides = array<i32>} : memref<16x64xf32, #tpu.memory_space<vmem>>, vector<2x32xf32>,
    %c8_160 = arith.constant 8 : index
    %c0_161 = arith.constant 0 : index
    %389 = vector.load %arg5[%c8_160, %c0_161] : memref<32x96xf32, #tpu.memory_space<vmem>>, vector<4x96xf32>
    %390 = tpu.concatenate %384, %384 in 1 : vector<4x32xf32>, vector<4x32xf32> -> vector<4x64xf32>
    %391 = arith.mulf %390, %28 : vector<4x64xf32>
    %392 = arith.truncf %391 : vector<4x64xf32> to vector<4x64xbf16>
    %cst_162 = arith.constant dense<0.000000e+00> : vector<4x96xf32>
    %393 = tpu.matmul %392, %10, %cst_162 {dimension_numbers = #tpu.dot_dimension_numbers<[1], [0], [0], [1], [0, 0, 1, 1], [], []>} : vector<4x64xbf16>, vector<64x96xbf16>, vector<4x96xf32> -> vector<4x96xf32>
    %394 = arith.addf %393, %12 : vector<4x96xf32>
    %395 = vector.extract_strided_slice %389 {offsets = [0, 0], sizes = [4, 64], strides = [1, 1]} : vector<4x96xf32> to vector<4x64xf32>
    %396 = vector.extract_strided_slice %394 {offsets = [0, 0], sizes = [4, 64], strides = [1, 1]} : vector<4x96xf32> to vector<4x64xf32>
    %397 = arith.addf %395, %396 : vector<4x64xf32>
    %398 = arith.negf %397 : vector<4x64xf32>
    %399 = math.exp %398 : vector<4x64xf32>
    %cst_163 = arith.constant 1.000000e+00 : f32
    %400 = vector.broadcast %cst_163 : f32 to vector<4x64xf32>
    %401 = arith.addf %400, %399 : vector<4x64xf32>
    %402 = arith.divf %400, %401 : vector<4x64xf32>
    %403 = vector.extract_strided_slice %402 {offsets = [0, 0], sizes = [4, 32], strides = [1, 1]} : vector<4x64xf32> to vector<4x32xf32>
    %404 = vector.extract_strided_slice %402 {offsets = [0, 32], sizes = [4, 32], strides = [1, 1]} : vector<4x64xf32> to vector<4x32xf32>
    %405 = vector.extract_strided_slice %389 {offsets = [0, 64], sizes = [4, 32], strides = [1, 1]} : vector<4x96xf32> to vector<4x32xf32>
    %406 = vector.extract_strided_slice %394 {offsets = [0, 64], sizes = [4, 32], strides = [1, 1]} : vector<4x96xf32> to vector<4x32xf32>
    %407 = arith.mulf %403, %406 : vector<4x32xf32>
    %408 = arith.addf %405, %407 : vector<4x32xf32>
    %409 = math.tanh %408 : vector<4x32xf32>
    %410 = arith.subf %384, %409 : vector<4x32xf32>
    %411 = arith.mulf %404, %410 : vector<4x32xf32>
    %412 = arith.addf %409, %411 : vector<4x32xf32>
    %413 = vector.extract_strided_slice %412 {offsets = [0, 0], sizes = [2, 32], strides = [1, 1]} : vector<4x32xf32> to vector<2x32xf32>
    %c4_164 = arith.constant 4 : index
    %c0_165 = arith.constant 0 : index
    %414 = vector.load %arg6[%c4_164, %c0_165] : memref<16x64xf32, #tpu.memory_space<vmem>>, vector<2x32xf32>
    tpu.vector_store %arg6[%c4_164, %c0_165], %413 {strides = array<i32>} : memref<16x64xf32, #tpu.memory_space<vmem>>, vector<2x32xf32>,
    %415 = vector.extract_strided_slice %412 {offsets = [2, 0], sizes = [2, 32], strides = [1, 1]} : vector<4x32xf32> to vector<2x32xf32>
    %c10_166 = arith.constant 10 : index
    %c32_167 = arith.constant 32 : index
    %416 = vector.load %arg6[%c10_166, %c32_167] : memref<16x64xf32, #tpu.memory_space<vmem>>, vector<2x32xf32>
    tpu.vector_store %arg6[%c10_166, %c32_167], %415 {strides = array<i32>} : memref<16x64xf32, #tpu.memory_space<vmem>>, vector<2x32xf32>,
    %c12_168 = arith.constant 12 : index
    %c0_169 = arith.constant 0 : index
    %417 = vector.load %arg5[%c12_168, %c0_169] : memref<32x96xf32, #tpu.memory_space<vmem>>, vector<4x96xf32>
    %418 = tpu.concatenate %412, %412 in 1 : vector<4x32xf32>, vector<4x32xf32> -> vector<4x64xf32>
    %419 = arith.mulf %418, %28 : vector<4x64xf32>
    %420 = arith.truncf %419 : vector<4x64xf32> to vector<4x64xbf16>
    %cst_170 = arith.constant dense<0.000000e+00> : vector<4x96xf32>
    %421 = tpu.matmul %420, %10, %cst_170 {dimension_numbers = #tpu.dot_dimension_numbers<[1], [0], [0], [1], [0, 0, 1, 1], [], []>} : vector<4x64xbf16>, vector<64x96xbf16>, vector<4x96xf32> -> vector<4x96xf32>
    %422 = arith.addf %421, %12 : vector<4x96xf32>
    %423 = vector.extract_strided_slice %417 {offsets = [0, 0], sizes = [4, 64], strides = [1, 1]} : vector<4x96xf32> to vector<4x64xf32>
    %424 = vector.extract_strided_slice %422 {offsets = [0, 0], sizes = [4, 64], strides = [1, 1]} : vector<4x96xf32> to vector<4x64xf32>
    %425 = arith.addf %423, %424 : vector<4x64xf32>
    %426 = arith.negf %425 : vector<4x64xf32>
    %427 = math.exp %426 : vector<4x64xf32>
    %cst_171 = arith.constant 1.000000e+00 : f32
    %428 = vector.broadcast %cst_171 : f32 to vector<4x64xf32>
    %429 = arith.addf %428, %427 : vector<4x64xf32>
    %430 = arith.divf %428, %429 : vector<4x64xf32>
    %431 = vector.extract_strided_slice %430 {offsets = [0, 0], sizes = [4, 32], strides = [1, 1]} : vector<4x64xf32> to vector<4x32xf32>
    %432 = vector.extract_strided_slice %430 {offsets = [0, 32], sizes = [4, 32], strides = [1, 1]} : vector<4x64xf32> to vector<4x32xf32>
    %433 = vector.extract_strided_slice %417 {offsets = [0, 64], sizes = [4, 32], strides = [1, 1]} : vector<4x96xf32> to vector<4x32xf32>
    %434 = vector.extract_strided_slice %422 {offsets = [0, 64], sizes = [4, 32], strides = [1, 1]} : vector<4x96xf32> to vector<4x32xf32>
    %435 = arith.mulf %431, %434 : vector<4x32xf32>
    %436 = arith.addf %433, %435 : vector<4x32xf32>
    %437 = math.tanh %436 : vector<4x32xf32>
    %438 = arith.subf %412, %437 : vector<4x32xf32>
    %439 = arith.mulf %432, %438 : vector<4x32xf32>
    %440 = arith.addf %437, %439 : vector<4x32xf32>
    %441 = vector.extract_strided_slice %440 {offsets = [0, 0], sizes = [2, 32], strides = [1, 1]} : vector<4x32xf32> to vector<2x32xf32>
    %c6_172 = arith.constant 6 : index
    %c0_173 = arith.constant 0 : index
    %442 = vector.load %arg6[%c6_172, %c0_173] : memref<16x64xf32, #tpu.memory_space<vmem>>, vector<2x32xf32>
    tpu.vector_store %arg6[%c6_172, %c0_173], %441 {strides = array<i32>} : memref<16x64xf32, #tpu.memory_space<vmem>>, vector<2x32xf32>,
    %443 = vector.extract_strided_slice %440 {offsets = [2, 0], sizes = [2, 32], strides = [1, 1]} : vector<4x32xf32> to vector<2x32xf32>
    %c8_174 = arith.constant 8 : index
    %c32_175 = arith.constant 32 : index
    %444 = vector.load %arg6[%c8_174, %c32_175] : memref<16x64xf32, #tpu.memory_space<vmem>>, vector<2x32xf32>
    tpu.vector_store %arg6[%c8_174, %c32_175], %443 {strides = array<i32>} : memref<16x64xf32, #tpu.memory_space<vmem>>, vector<2x32xf32>,
    %c16_176 = arith.constant 16 : index
    %c0_177 = arith.constant 0 : index
    %445 = vector.load %arg5[%c16_176, %c0_177] : memref<32x96xf32, #tpu.memory_space<vmem>>, vector<4x96xf32>
    %446 = tpu.concatenate %440, %440 in 1 : vector<4x32xf32>, vector<4x32xf32> -> vector<4x64xf32>
    %447 = arith.mulf %446, %28 : vector<4x64xf32>
    %448 = arith.truncf %447 : vector<4x64xf32> to vector<4x64xbf16>
    %cst_178 = arith.constant dense<0.000000e+00> : vector<4x96xf32>
    %449 = tpu.matmul %448, %10, %cst_178 {dimension_numbers = #tpu.dot_dimension_numbers<[1], [0], [0], [1], [0, 0, 1, 1], [], []>} : vector<4x64xbf16>, vector<64x96xbf16>, vector<4x96xf32> -> vector<4x96xf32>
    %450 = arith.addf %449, %12 : vector<4x96xf32>
    %451 = vector.extract_strided_slice %445 {offsets = [0, 0], sizes = [4, 64], strides = [1, 1]} : vector<4x96xf32> to vector<4x64xf32>
    %452 = vector.extract_strided_slice %450 {offsets = [0, 0], sizes = [4, 64], strides = [1, 1]} : vector<4x96xf32> to vector<4x64xf32>
    %453 = arith.addf %451, %452 : vector<4x64xf32>
    %454 = arith.negf %453 : vector<4x64xf32>
    %455 = math.exp %454 : vector<4x64xf32>
    %cst_179 = arith.constant 1.000000e+00 : f32
    %456 = vector.broadcast %cst_179 : f32 to vector<4x64xf32>
    %457 = arith.addf %456, %455 : vector<4x64xf32>
    %458 = arith.divf %456, %457 : vector<4x64xf32>
    %459 = vector.extract_strided_slice %458 {offsets = [0, 0], sizes = [4, 32], strides = [1, 1]} : vector<4x64xf32> to vector<4x32xf32>
    %460 = vector.extract_strided_slice %458 {offsets = [0, 32], sizes = [4, 32], strides = [1, 1]} : vector<4x64xf32> to vector<4x32xf32>
    %461 = vector.extract_strided_slice %445 {offsets = [0, 64], sizes = [4, 32], strides = [1, 1]} : vector<4x96xf32> to vector<4x32xf32>
    %462 = vector.extract_strided_slice %450 {offsets = [0, 64], sizes = [4, 32], strides = [1, 1]} : vector<4x96xf32> to vector<4x32xf32>
    %463 = arith.mulf %459, %462 : vector<4x32xf32>
    %464 = arith.addf %461, %463 : vector<4x32xf32>
    %465 = math.tanh %464 : vector<4x32xf32>
    %466 = arith.subf %440, %465 : vector<4x32xf32>
    %467 = arith.mulf %460, %466 : vector<4x32xf32>
    %468 = arith.addf %465, %467 : vector<4x32xf32>
    %469 = vector.extract_strided_slice %468 {offsets = [0, 0], sizes = [2, 32], strides = [1, 1]} : vector<4x32xf32> to vector<2x32xf32>
    %c8_180 = arith.constant 8 : index
    %c0_181 = arith.constant 0 : index
    %470 = vector.load %arg6[%c8_180, %c0_181] : memref<16x64xf32, #tpu.memory_space<vmem>>, vector<2x32xf32>
    tpu.vector_store %arg6[%c8_180, %c0_181], %469 {strides = array<i32>} : memref<16x64xf32, #tpu.memory_space<vmem>>, vector<2x32xf32>,
    %471 = vector.extract_strided_slice %468 {offsets = [2, 0], sizes = [2, 32], strides = [1, 1]} : vector<4x32xf32> to vector<2x32xf32>
    %c6_182 = arith.constant 6 : index
    %c32_183 = arith.constant 32 : index
    %472 = vector.load %arg6[%c6_182, %c32_183] : memref<16x64xf32, #tpu.memory_space<vmem>>, vector<2x32xf32>
    tpu.vector_store %arg6[%c6_182, %c32_183], %471 {strides = array<i32>} : memref<16x64xf32, #tpu.memory_space<vmem>>, vector<2x32xf32>,
    %c20_184 = arith.constant 20 : index
    %c0_185 = arith.constant 0 : index
    %473 = vector.load %arg5[%c20_184, %c0_185] : memref<32x96xf32, #tpu.memory_space<vmem>>, vector<4x96xf32>
    %474 = tpu.concatenate %468, %468 in 1 : vector<4x32xf32>, vector<4x32xf32> -> vector<4x64xf32>
    %475 = arith.mulf %474, %28 : vector<4x64xf32>
    %476 = arith.truncf %475 : vector<4x64xf32> to vector<4x64xbf16>
    %cst_186 = arith.constant dense<0.000000e+00> : vector<4x96xf32>
    %477 = tpu.matmul %476, %10, %cst_186 {dimension_numbers = #tpu.dot_dimension_numbers<[1], [0], [0], [1], [0, 0, 1, 1], [], []>} : vector<4x64xbf16>, vector<64x96xbf16>, vector<4x96xf32> -> vector<4x96xf32>
    %478 = arith.addf %477, %12 : vector<4x96xf32>
    %479 = vector.extract_strided_slice %473 {offsets = [0, 0], sizes = [4, 64], strides = [1, 1]} : vector<4x96xf32> to vector<4x64xf32>
    %480 = vector.extract_strided_slice %478 {offsets = [0, 0], sizes = [4, 64], strides = [1, 1]} : vector<4x96xf32> to vector<4x64xf32>
    %481 = arith.addf %479, %480 : vector<4x64xf32>
    %482 = arith.negf %481 : vector<4x64xf32>
    %483 = math.exp %482 : vector<4x64xf32>
    %cst_187 = arith.constant 1.000000e+00 : f32
    %484 = vector.broadcast %cst_187 : f32 to vector<4x64xf32>
    %485 = arith.addf %484, %483 : vector<4x64xf32>
    %486 = arith.divf %484, %485 : vector<4x64xf32>
    %487 = vector.extract_strided_slice %486 {offsets = [0, 0], sizes = [4, 32], strides = [1, 1]} : vector<4x64xf32> to vector<4x32xf32>
    %488 = vector.extract_strided_slice %486 {offsets = [0, 32], sizes = [4, 32], strides = [1, 1]} : vector<4x64xf32> to vector<4x32xf32>
    %489 = vector.extract_strided_slice %473 {offsets = [0, 64], sizes = [4, 32], strides = [1, 1]} : vector<4x96xf32> to vector<4x32xf32>
    %490 = vector.extract_strided_slice %478 {offsets = [0, 64], sizes = [4, 32], strides = [1, 1]} : vector<4x96xf32> to vector<4x32xf32>
    %491 = arith.mulf %487, %490 : vector<4x32xf32>
    %492 = arith.addf %489, %491 : vector<4x32xf32>
    %493 = math.tanh %492 : vector<4x32xf32>
    %494 = arith.subf %468, %493 : vector<4x32xf32>
    %495 = arith.mulf %488, %494 : vector<4x32xf32>
    %496 = arith.addf %493, %495 : vector<4x32xf32>
    %497 = vector.extract_strided_slice %496 {offsets = [0, 0], sizes = [2, 32], strides = [1, 1]} : vector<4x32xf32> to vector<2x32xf32>
    %c10_188 = arith.constant 10 : index
    %c0_189 = arith.constant 0 : index
    %498 = vector.load %arg6[%c10_188, %c0_189] : memref<16x64xf32, #tpu.memory_space<vmem>>, vector<2x32xf32>
    tpu.vector_store %arg6[%c10_188, %c0_189], %497 {strides = array<i32>} : memref<16x64xf32, #tpu.memory_space<vmem>>, vector<2x32xf32>,
    %499 = vector.extract_strided_slice %496 {offsets = [2, 0], sizes = [2, 32], strides = [1, 1]} : vector<4x32xf32> to vector<2x32xf32>
    %c4_190 = arith.constant 4 : index
    %c32_191 = arith.constant 32 : index
    %500 = vector.load %arg6[%c4_190, %c32_191] : memref<16x64xf32, #tpu.memory_space<vmem>>, vector<2x32xf32>
    tpu.vector_store %arg6[%c4_190, %c32_191], %499 {strides = array<i32>} : memref<16x64xf32, #tpu.memory_space<vmem>>, vector<2x32xf32>,
    %c24_192 = arith.constant 24 : index
    %c0_193 = arith.constant 0 : index
    %501 = vector.load %arg5[%c24_192, %c0_193] : memref<32x96xf32, #tpu.memory_space<vmem>>, vector<4x96xf32>
    %502 = tpu.concatenate %496, %496 in 1 : vector<4x32xf32>, vector<4x32xf32> -> vector<4x64xf32>
    %503 = arith.mulf %502, %28 : vector<4x64xf32>
    %504 = arith.truncf %503 : vector<4x64xf32> to vector<4x64xbf16>
    %cst_194 = arith.constant dense<0.000000e+00> : vector<4x96xf32>
    %505 = tpu.matmul %504, %10, %cst_194 {dimension_numbers = #tpu.dot_dimension_numbers<[1], [0], [0], [1], [0, 0, 1, 1], [], []>} : vector<4x64xbf16>, vector<64x96xbf16>, vector<4x96xf32> -> vector<4x96xf32>
    %506 = arith.addf %505, %12 : vector<4x96xf32>
    %507 = vector.extract_strided_slice %501 {offsets = [0, 0], sizes = [4, 64], strides = [1, 1]} : vector<4x96xf32> to vector<4x64xf32>
    %508 = vector.extract_strided_slice %506 {offsets = [0, 0], sizes = [4, 64], strides = [1, 1]} : vector<4x96xf32> to vector<4x64xf32>
    %509 = arith.addf %507, %508 : vector<4x64xf32>
    %510 = arith.negf %509 : vector<4x64xf32>
    %511 = math.exp %510 : vector<4x64xf32>
    %cst_195 = arith.constant 1.000000e+00 : f32
    %512 = vector.broadcast %cst_195 : f32 to vector<4x64xf32>
    %513 = arith.addf %512, %511 : vector<4x64xf32>
    %514 = arith.divf %512, %513 : vector<4x64xf32>
    %515 = vector.extract_strided_slice %514 {offsets = [0, 0], sizes = [4, 32], strides = [1, 1]} : vector<4x64xf32> to vector<4x32xf32>
    %516 = vector.extract_strided_slice %514 {offsets = [0, 32], sizes = [4, 32], strides = [1, 1]} : vector<4x64xf32> to vector<4x32xf32>
    %517 = vector.extract_strided_slice %501 {offsets = [0, 64], sizes = [4, 32], strides = [1, 1]} : vector<4x96xf32> to vector<4x32xf32>
    %518 = vector.extract_strided_slice %506 {offsets = [0, 64], sizes = [4, 32], strides = [1, 1]} : vector<4x96xf32> to vector<4x32xf32>
    %519 = arith.mulf %515, %518 : vector<4x32xf32>
    %520 = arith.addf %517, %519 : vector<4x32xf32>
    %521 = math.tanh %520 : vector<4x32xf32>
    %522 = arith.subf %496, %521 : vector<4x32xf32>
    %523 = arith.mulf %516, %522 : vector<4x32xf32>
    %524 = arith.addf %521, %523 : vector<4x32xf32>
    %525 = vector.extract_strided_slice %524 {offsets = [0, 0], sizes = [2, 32], strides = [1, 1]} : vector<4x32xf32> to vector<2x32xf32>
    %c12_196 = arith.constant 12 : index
    %c0_197 = arith.constant 0 : index
    %526 = vector.load %arg6[%c12_196, %c0_197] : memref<16x64xf32, #tpu.memory_space<vmem>>, vector<2x32xf32>
    tpu.vector_store %arg6[%c12_196, %c0_197], %525 {strides = array<i32>} : memref<16x64xf32, #tpu.memory_space<vmem>>, vector<2x32xf32>,
    %527 = vector.extract_strided_slice %524 {offsets = [2, 0], sizes = [2, 32], strides = [1, 1]} : vector<4x32xf32> to vector<2x32xf32>
    %c2_198 = arith.constant 2 : index
    %c32_199 = arith.constant 32 : index
    %528 = vector.load %arg6[%c2_198, %c32_199] : memref<16x64xf32, #tpu.memory_space<vmem>>, vector<2x32xf32>
    tpu.vector_store %arg6[%c2_198, %c32_199], %527 {strides = array<i32>} : memref<16x64xf32, #tpu.memory_space<vmem>>, vector<2x32xf32>,
    %c28_200 = arith.constant 28 : index
    %c0_201 = arith.constant 0 : index
    %529 = vector.load %arg5[%c28_200, %c0_201] : memref<32x96xf32, #tpu.memory_space<vmem>>, vector<4x96xf32>
    %530 = tpu.concatenate %524, %524 in 1 : vector<4x32xf32>, vector<4x32xf32> -> vector<4x64xf32>
    %531 = arith.mulf %530, %28 : vector<4x64xf32>
    %532 = arith.truncf %531 : vector<4x64xf32> to vector<4x64xbf16>
    %cst_202 = arith.constant dense<0.000000e+00> : vector<4x96xf32>
    %533 = tpu.matmul %532, %10, %cst_202 {dimension_numbers = #tpu.dot_dimension_numbers<[1], [0], [0], [1], [0, 0, 1, 1], [], []>} : vector<4x64xbf16>, vector<64x96xbf16>, vector<4x96xf32> -> vector<4x96xf32>
    %534 = arith.addf %533, %12 : vector<4x96xf32>
    %535 = vector.extract_strided_slice %529 {offsets = [0, 0], sizes = [4, 64], strides = [1, 1]} : vector<4x96xf32> to vector<4x64xf32>
    %536 = vector.extract_strided_slice %534 {offsets = [0, 0], sizes = [4, 64], strides = [1, 1]} : vector<4x96xf32> to vector<4x64xf32>
    %537 = arith.addf %535, %536 : vector<4x64xf32>
    %538 = arith.negf %537 : vector<4x64xf32>
    %539 = math.exp %538 : vector<4x64xf32>
    %cst_203 = arith.constant 1.000000e+00 : f32
    %540 = vector.broadcast %cst_203 : f32 to vector<4x64xf32>
    %541 = arith.addf %540, %539 : vector<4x64xf32>
    %542 = arith.divf %540, %541 : vector<4x64xf32>
    %543 = vector.extract_strided_slice %542 {offsets = [0, 0], sizes = [4, 32], strides = [1, 1]} : vector<4x64xf32> to vector<4x32xf32>
    %544 = vector.extract_strided_slice %542 {offsets = [0, 32], sizes = [4, 32], strides = [1, 1]} : vector<4x64xf32> to vector<4x32xf32>
    %545 = vector.extract_strided_slice %529 {offsets = [0, 64], sizes = [4, 32], strides = [1, 1]} : vector<4x96xf32> to vector<4x32xf32>
    %546 = vector.extract_strided_slice %534 {offsets = [0, 64], sizes = [4, 32], strides = [1, 1]} : vector<4x96xf32> to vector<4x32xf32>
    %547 = arith.mulf %543, %546 : vector<4x32xf32>
    %548 = arith.addf %545, %547 : vector<4x32xf32>
    %549 = math.tanh %548 : vector<4x32xf32>
    %550 = arith.subf %524, %549 : vector<4x32xf32>
    %551 = arith.mulf %544, %550 : vector<4x32xf32>
    %552 = arith.addf %549, %551 : vector<4x32xf32>
    %553 = vector.extract_strided_slice %552 {offsets = [0, 0], sizes = [2, 32], strides = [1, 1]} : vector<4x32xf32> to vector<2x32xf32>
    %c14_204 = arith.constant 14 : index
    %c0_205 = arith.constant 0 : index
    %554 = vector.load %arg6[%c14_204, %c0_205] : memref<16x64xf32, #tpu.memory_space<vmem>>, vector<2x32xf32>
    tpu.vector_store %arg6[%c14_204, %c0_205], %553 {strides = array<i32>} : memref<16x64xf32, #tpu.memory_space<vmem>>, vector<2x32xf32>,
    %555 = vector.extract_strided_slice %552 {offsets = [2, 0], sizes = [2, 32], strides = [1, 1]} : vector<4x32xf32> to vector<2x32xf32>
    %c0_206 = arith.constant 0 : index
    %c32_207 = arith.constant 32 : index
    %556 = vector.load %arg6[%c0_206, %c32_207] : memref<16x64xf32, #tpu.memory_space<vmem>>, vector<2x32xf32>
    tpu.vector_store %arg6[%c0_206, %c32_207], %555 {strides = array<i32>} : memref<16x64xf32, #tpu.memory_space<vmem>>, vector<2x32xf32>,
    %c0_208 = arith.constant 0 : index
    %c0_209 = arith.constant 0 : index
    %557 = vector.load %arg6[%c0_208, %c0_209] : memref<16x64xf32, #tpu.memory_space<vmem>>, vector<16x64xf32>
    %558 = vector.broadcast %17 : vector<1x64xf32> to vector<16x64xf32>
    %559 = arith.mulf %557, %558 : vector<16x64xf32>
    %cst_210 = arith.constant dense<0.000000e+00> : vector<16xf32>
    %560 = vector.multi_reduction <add>, %559, %cst_210 [1] : vector<16x64xf32> to vector<16xf32>
    %561 = vector.shape_cast %560 : vector<16xf32> to vector<16x1xf32>
    %562 = vector.broadcast %21 : vector<1x1xf32> to vector<16x1xf32>
    %563 = arith.addf %561, %562 : vector<16x1xf32>
    %cst_211 = arith.constant 0.000000e+00 : f32
    %564 = vector.broadcast %cst_211 : f32 to vector<16x1xf32>
    %565 = arith.maximumf %563, %564 : vector<16x1xf32>
    %566 = arith.mulf %565, %19 : vector<16x1xf32>
    %567 = vector.extract_strided_slice %566 {offsets = [0, 0], sizes = [2, 1], strides = [1, 1]} : vector<16x1xf32> to vector<2x1xf32>
    %568 = vector.extract_strided_slice %566 {offsets = [2, 0], sizes = [2, 1], strides = [1, 1]} : vector<16x1xf32> to vector<2x1xf32>
    %569 = arith.addf %567, %568 : vector<2x1xf32>
    %570 = vector.extract_strided_slice %566 {offsets = [4, 0], sizes = [2, 1], strides = [1, 1]} : vector<16x1xf32> to vector<2x1xf32>
    %571 = arith.addf %569, %570 : vector<2x1xf32>
    %572 = vector.extract_strided_slice %566 {offsets = [6, 0], sizes = [2, 1], strides = [1, 1]} : vector<16x1xf32> to vector<2x1xf32>
    %573 = arith.addf %571, %572 : vector<2x1xf32>
    %574 = vector.extract_strided_slice %566 {offsets = [8, 0], sizes = [2, 1], strides = [1, 1]} : vector<16x1xf32> to vector<2x1xf32>
    %575 = arith.addf %573, %574 : vector<2x1xf32>
    %576 = vector.extract_strided_slice %566 {offsets = [10, 0], sizes = [2, 1], strides = [1, 1]} : vector<16x1xf32> to vector<2x1xf32>
    %577 = arith.addf %575, %576 : vector<2x1xf32>
    %578 = vector.extract_strided_slice %566 {offsets = [12, 0], sizes = [2, 1], strides = [1, 1]} : vector<16x1xf32> to vector<2x1xf32>
    %579 = arith.addf %577, %578 : vector<2x1xf32>
    %580 = vector.extract_strided_slice %566 {offsets = [14, 0], sizes = [2, 1], strides = [1, 1]} : vector<16x1xf32> to vector<2x1xf32>
    %581 = arith.addf %579, %580 : vector<2x1xf32>
    %582 = vector.broadcast %23 : vector<1x1xf32> to vector<2x1xf32>
    %583 = arith.addf %581, %582 : vector<2x1xf32>
    %584 = vector.shape_cast %583 : vector<2x1xf32> to vector<2x1xf32>
    %585 = vector.broadcast %584 : vector<2x1xf32> to vector<2x128xf32>
    %c0_212 = arith.constant 0 : index
    %c0_213 = arith.constant 0 : index
    %586 = vector.load %arg4[%c0_212, %c0_213] : memref<2x128xf32, #tpu.memory_space<vmem>>, vector<2x128xf32>
    tpu.vector_store %arg4[%c0_212, %c0_213], %585 {strides = array<i32>} : memref<2x128xf32, #tpu.memory_space<vmem>>, vector<2x128xf32>,
    return
  }
}

</mosaic_0001>

<llo_original>
// kernel: time_series_rnn_discriminator.1
$region0: #{time_series_rnn_discriminator.1}
  #allocation0 [shape = 'u32[]', space=smem, size = 0x4, offset = 0x4, fixed_abs, tag = 'smem constant byte address 0x4 - core index']
  #allocation1 [shape = 'u32[144,128]{1,0:T(1,128)}', space=vmem, size = 0x12000, scoped, tag = 'internal scratch']
  #allocation2 [shape = 'f32[32,96]{1,0:T(8,128)}', space=vmem, size = 0x4000, scoped, tag = 'scratch operand']
  #allocation3 [shape = 'f32[16,64]{1,0:T(8,128)}', space=vmem, size = 0x2000, scoped, tag = 'scratch operand']
  %s0 = inlined_call_operand.vmem [shape: bf16[16,16], index: 0, kind: input, shape index: {}]
  %s1 = inlined_call_operand.vmem [shape: bf16[128,192], index: 1, kind: input, shape index: {}]
  %s2 = inlined_call_operand.vmem [shape: bf16[160,96], index: 2, kind: input, shape index: {}]
  %s3 = inlined_call_operand.vmem [shape: bf16[80,64], index: 3, kind: input, shape index: {}]
  %s4 = inlined_call_operand.vmem [shape: f32[2,128], index: 4, kind: output, shape index: {}]
  %s5 = sld [smem:[#allocation0]]
  $region26: #{time_series_rnn_discriminator.1} parent=0
    _
  %s7 = ssub.s32 1, %s5
  %s8 = scalar_select 0, %s7, %s5
  // Predicated region
  $region2: #{time_series_rnn_discriminator.1} parent=0 // pred_check
    _
  $region3: #{time_series_rnn_discriminator.1} parent=0 // pred_check_branch
    %10 = sbr.rel (0) target = $region5
  $region4: #{time_series_rnn_discriminator.1} parent=0 // pred_region
    _
  $region5: #{time_series_rnn_discriminator.1} parent=0 // pred_fallthru
    _
  // Predicated region
  $region6: #{time_series_rnn_discriminator.1} parent=0 // pred_check
    _
  $region7: #{time_series_rnn_discriminator.1} parent=0 // pred_check_branch
    %12 = sbr.rel (0) target = $region9
  $region8: #{time_series_rnn_discriminator.1} parent=0 // pred_region
    _
  $region9: #{time_series_rnn_discriminator.1} parent=0 // pred_fallthru
    _
  // Predicated region
  $region10: #{time_series_rnn_discriminator.1} parent=0 // pred_check
    _
  $region11: #{time_series_rnn_discriminator.1} parent=0 // pred_check_branch
    %14 = sbr.rel (0) target = $region13
  $region12: #{time_series_rnn_discriminator.1} parent=0 // pred_region
    _
  $region13: #{time_series_rnn_discriminator.1} parent=0 // pred_fallthru
    _
  // Predicated region
  $region14: #{time_series_rnn_discriminator.1} parent=0 // pred_check
    _
  $region15: #{time_series_rnn_discriminator.1} parent=0 // pred_check_branch
    %16 = sbr.rel (0) target = $region17
  $region16: #{time_series_rnn_discriminator.1} parent=0 // pred_region
    _
  $region17: #{time_series_rnn_discriminator.1} parent=0 // pred_fallthru
    _
  %v18 = vld [vmem:[%s0] sm:$0xf]
  %v19 = vld [vmem:[%s0 + $0x4] sm:$0xf]
  %v20 = vld [vmem:[%s1] sm:$0xff]
  %v21 = vld [vmem:[%s1 + $0x8] sm:$0xff]
  %v22 = vld [vmem:[%s1 + $0x10] sm:$0xff]
  %v23 = vld [vmem:[%s1 + $0x18] sm:$0xff]
  %v24 = vld [vmem:[%s1 + $0x20] sm:$0x11]
  %v25 = vunpack.c.l.bf16 %v24
  %v26 = vunpack.c.h.bf16 %v24
  %v27 = vld [vmem:[%s1 + $0x30] sm:$0xff]
  %v28 = vld [vmem:[%s1 + $0x38] sm:$0xff]
  %v29 = vld [vmem:[%s1 + $0x40] sm:$0xff]
  %v30 = vld [vmem:[%s1 + $0x48] sm:$0xff]
  %v31 = vld [vmem:[%s1 + $0x50] sm:$0xff]
  %v32 = vld [vmem:[%s1 + $0x58] sm:$0xff]
  %v33 = vld [vmem:[%s1 + $0x60] sm:$0xff]
  %v34 = vld [vmem:[%s1 + $0x68] sm:$0xff]
  %v35 = vld [vmem:[%s1 + $0x70] sm:$0x11]
  %v36 = vunpack.c.l.bf16 %v35
  %v37 = vunpack.c.h.bf16 %v35
  %v38 = vld [vmem:[%s2] sm:$0xf]
  %v39 = vld [vmem:[%s2 + $0x4] sm:$0xf]
  %v40 = vld [vmem:[%s2 + $0x8] sm:$0xf]
  %v41 = vld [vmem:[%s2 + $0xc] sm:$0xf]
  %v42 = vld [vmem:[%s2 + $0x10] sm:$0xf]
  %v43 = vld [vmem:[%s2 + $0x14] sm:$0xf]
  %v44 = vld [vmem:[%s2 + $0x18] sm:$0xf]
  %v45 = vld [vmem:[%s2 + $0x1c] sm:$0xf]
  %v46 = vld [vmem:[%s2 + $0x20] sm:$0x3]
  %v47 = vunpack.c.l.bf16 %v46
  %v48 = vld [vmem:[%s2 + $0x28] sm:$0xf]
  %v49 = vld [vmem:[%s2 + $0x2c] sm:$0xf]
  %v50 = vld [vmem:[%s2 + $0x30] sm:$0xf]
  %v51 = vld [vmem:[%s2 + $0x34] sm:$0xf]
  %v52 = vld [vmem:[%s2 + $0x38] sm:$0xf]
  %v53 = vld [vmem:[%s2 + $0x3c] sm:$0xf]
  %v54 = vld [vmem:[%s2 + $0x40] sm:$0xf]
  %v55 = vld [vmem:[%s2 + $0x44] sm:$0xf]
  %v56 = vld [vmem:[%s2 + $0x48] sm:$0x3]
  %v57 = vunpack.c.l.bf16 %v56
  %v58 = vld [vmem:[%s3] sm:$0xf]
  %v59 = vld [vmem:[%s3 + $0x4] sm:$0xf]
  %v60 = vld [vmem:[%s3 + $0x8] sm:$0x1]
  %v61 = vunpack.c.l.bf16 %v60
  %v62 = vld [vmem:[%s3 + $0x10] sm:$0x1]
  %v63 = vunpack.c.l.bf16 %v62
  %v64 = vld [vmem:[%s3 + $0x18] sm:$0xf]
  %v65 = vld [vmem:[%s3 + $0x1c] sm:$0xf]
  %v66 = vunpack.c.l.bf16 %v64
  %v67 = vunpack.c.l.bf16 %v65
  %v68 = vld [vmem:[%s3 + $0x20] sm:$0x1]
  %v69 = vunpack.c.l.bf16 %v68
  %vm70 = vcmask 261120
  %v71 = vsel %vm70, 1.0, 0.0
  %v72 = vsel %vm70, 0.0, 1.0
  %v74 = vrot.slane %v72, 6
  %vm76 = vcmask 1041408
  %v77 = vsel %vm76, %v71, %v74
  %v78 = vlaneseq
  %v79 = vshrl.u32 %v78, 7
  %v80 = vsub.s32 0, %v79
  %v81 = vrot.slane %v61, %v80
  %v84 = vunpack.c.l.b16 %v18
  %v85 = vunpack.c.l.b16 %v19
  %v86 = vpack.c.b16 %v85, %v84
  %v89 = vunpack.c.l.b16 %v58
  %v90 = vunpack.c.l.b16 %v59
  %v91 = vpack.c.b16 %v90, %v89
  %vm93 = vcmask 130048
  %v95 = vsel %vm93, %v86, 0
  %97 = vmatprep.subr.bf16.mxu0 0
  %98 = vmatpush1.bf16.msra.mxu0 %v91
  %99 = vmatprep.subr.bf16.mxu0 0
  %100 = vmatpush1.bf16.msra.mxu0 0
  %101 = vmatprep.subr.bf16.mxu0 0
  %102 = vmatpush1.bf16.msra.mxu0 0
  %103 = vmatprep.subr.bf16.mxu0 0
  %104 = vmatpush1.bf16.msra.mxu0 0
  %105 = vmatprep.subr.bf16.mxu0 0
  %106 = vmatpush1.bf16.msra.mxu0 0
  %107 = vmatprep.subr.bf16.mxu0 0
  %108 = vmatpush1.bf16.msra.mxu0 0
  %109 = vmatprep.subr.bf16.mxu0 0
  %110 = vmatpush1.bf16.msra.mxu0 0
  %111 = vmatprep.subr.bf16.mxu0 0
  %112 = vmatpush1.bf16.msra.mxu0 0
  %113 = vmatprep.subr.bf16.mxu0 0
  %114 = vmatpush1.bf16.msra.mxu0 0
  %115 = vmatprep.subr.bf16.mxu0 0
  %116 = vmatpush1.bf16.msra.mxu0 0
  %117 = vmatprep.subr.bf16.mxu0 0
  %118 = vmatpush1.bf16.msra.mxu0 0
  %119 = vmatprep.subr.bf16.mxu0 0
  %120 = vmatpush1.bf16.msra.mxu0 0
  %121 = vmatprep.subr.bf16.mxu0 0
  %122 = vmatpush1.bf16.msra.mxu0 0
  %123 = vmatprep.subr.bf16.mxu0 0
  %124 = vmatpush1.bf16.msra.mxu0 0
  %125 = vmatprep.subr.bf16.mxu0 0
  %126 = vmatpush1.bf16.msra.mxu0 0
  %127 = vmatprep.subr.bf16.mxu0 0
  %128 = vmatpush1.bf16.msra.mxu0 0
  %129 = vmatprep.mubr.bf16.mxu0 0
  %130 = vmatmul.mubr.bf16.gmra.mrb[0].mxu0 %v95
  %v131 = vpop.f32.mrb[0].mxu0
  %v132 = vadd.f32 %v81, %v131
  %v133 = vpop.f32.mrb[0].mxu0
  %v134 = vpop.f32.mrb[0].mxu0
  %v135 = vadd.f32 %v81, %v134
  %v136 = vpop.f32.mrb[0].mxu0
  %137 = vdwg.mxu0
  %v138 = vmax.f32 %v132, 0.0
  %v139 = vmax.f32 %v135, 0.0
  %v140 = vpack.c.bf16 %v139, %v138
  %v141 = vlaneseq
  %v142 = vshrl.u32 %v141, 7
  %v143 = vsub.s32 0, %v142
  %v144 = vrot.slane %v25, %v143
  %v145 = vlaneseq
  %v146 = vshrl.u32 %v145, 7
  %v147 = vsub.s32 0, %v146
  %v148 = vrot.slane %v26, %v147
  %v153 = vunpack.c.l.b16 %v20
  %v154 = vunpack.c.h.b16 %v20
  %v155 = vunpack.c.l.b16 %v21
  %v156 = vunpack.c.h.b16 %v21
  %v157 = vunpack.c.l.b16 %v22
  %v158 = vunpack.c.h.b16 %v22
  %v159 = vunpack.c.l.b16 %v23
  %v160 = vunpack.c.h.b16 %v23
  %v161 = vpack.c.b16 %v155, %v153
  %v162 = vpack.c.b16 %v156, %v154
  %v163 = vpack.c.b16 %v159, %v157
  %v164 = vpack.c.b16 %v160, %v158
  %v170 = vsel %vm70, %v140, 0
  %172 = vmatprep.subr.bf16.mxu0 %v162
  %173 = vmatpush1.bf16.msra.mxu0 %v161
  %174 = vmatprep.subr.bf16.mxu0 %v164
  %175 = vmatpush1.bf16.msra.mxu0 %v163
  %176 = vmatprep.subr.bf16.mxu0 0
  %177 = vmatpush1.bf16.msra.mxu0 0
  %178 = vmatprep.subr.bf16.mxu0 0
  %179 = vmatpush1.bf16.msra.mxu0 0
  %180 = vmatprep.subr.bf16.mxu0 0
  %181 = vmatpush1.bf16.msra.mxu0 0
  %182 = vmatprep.subr.bf16.mxu0 0
  %183 = vmatpush1.bf16.msra.mxu0 0
  %184 = vmatprep.subr.bf16.mxu0 0
  %185 = vmatpush1.bf16.msra.mxu0 0
  %186 = vmatprep.subr.bf16.mxu0 0
  %187 = vmatpush1.bf16.msra.mxu0 0
  %188 = vmatprep.subr.bf16.mxu0 0
  %189 = vmatpush1.bf16.msra.mxu0 0
  %190 = vmatprep.subr.bf16.mxu0 0
  %191 = vmatpush1.bf16.msra.mxu0 0
  %192 = vmatprep.subr.bf16.mxu0 0
  %193 = vmatpush1.bf16.msra.mxu0 0
  %194 = vmatprep.subr.bf16.mxu0 0
  %195 = vmatpush1.bf16.msra.mxu0 0
  %196 = vmatprep.subr.bf16.mxu0 0
  %197 = vmatpush1.bf16.msra.mxu0 0
  %198 = vmatprep.subr.bf16.mxu0 0
  %199 = vmatpush1.bf16.msra.mxu0 0
  %200 = vmatprep.subr.bf16.mxu0 0
  %201 = vmatpush1.bf16.msra.mxu0 0
  %202 = vmatprep.subr.bf16.mxu0 0
  %203 = vmatpush1.bf16.msra.mxu0 0
  %204 = vmatprep.mubr.bf16.mxu0 0
  %205 = vmatmul.mubr.bf16.gmra.mrb[0].mxu0 %v170
  %v206 = vpop.f32.mrb[0].mxu0
  %v207 = vadd.f32 %v144, %v206
  %v208 = vpop.f32.mrb[0].mxu0
  %v209 = vadd.f32 %v148, %v208
  %v210 = vpop.f32.mrb[0].mxu0
  %v211 = vadd.f32 %v144, %v210
  %v212 = vpop.f32.mrb[0].mxu0
  %v213 = vadd.f32 %v148, %v212
  %214 = vdwg.mxu0
  %vm215 = vcmask 779264
  %216 = vst.msk [vmem:[#allocation2] sm:$0x3] %vm215, %v207
  %219 = vrot.lane.b32.xlu0 %v211, 32
  %v220 = vpop.permute.xlu0 %219
  %221 = vrot.lane.b32.xlu0 %v213, 32
  %v222 = vpop.permute.xlu0 %221
  %v223 = vsel %vm70, %v220, %v222
  %vm225 = vcmask 785414
  %226 = vst.msk [vmem:[#allocation2 - $0x4] sm:$0xc0] %vm225, %v223
  %vm227 = vcmask 781314
  %228 = vst.msk [vmem:[#allocation2 + $0x2] sm:$0xc] %vm227, %v207
  %vm229 = vcmask 783364
  %230 = vst.msk [vmem:[#allocation2 + $0x2] sm:$0x30] %vm229, %v223
  %231 = vst.msk [vmem:[#allocation2 + $0x4] sm:$0x30] %vm229, %v207
  %232 = vst.msk [vmem:[#allocation2 + $0x8] sm:$0xc] %vm227, %v223
  %233 = vst.msk [vmem:[#allocation2 + $0x6] sm:$0xc0] %vm225, %v207
  %234 = vst.msk [vmem:[#allocation2 + $0xe] sm:$0x3] %vm215, %v223
  %235 = vst.msk [vmem:[#allocation2 + $0x10] sm:$0x3] %vm215, %v211
  %238 = vrot.lane.b32.xlu0 %v207, 32
  %v239 = vpop.permute.xlu0 %238
  %240 = vrot.lane.b32.xlu0 %v209, 32
  %v241 = vpop.permute.xlu0 %240
  %v242 = vsel %vm70, %v239, %v241
  %244 = vst.msk [vmem:[#allocation2 + $0xc] sm:$0xc0] %vm225, %v242
  %245 = vst.msk [vmem:[#allocation2 + $0x12] sm:$0xc] %vm227, %v211
  %246 = vst.msk [vmem:[#allocation2 + $0x12] sm:$0x30] %vm229, %v242
  %247 = vst.msk [vmem:[#allocation2 + $0x14] sm:$0x30] %vm229, %v211
  %248 = vst.msk [vmem:[#allocation2 + $0x18] sm:$0xc] %vm227, %v242
  %249 = vst.msk [vmem:[#allocation2 + $0x16] sm:$0xc0] %vm225, %v211
  %250 = vst.msk [vmem:[#allocation2 + $0x1e] sm:$0x3] %vm215, %v242
  %v251 = vld [vmem:[#allocation2] sm:$0xf]
  %v252 = vmul.f32 %v77, 0.0
  %v253 = vpack.c.bf16 %v252, %v252
  %v262 = vunpack.c.l.b16 %v38
  %v263 = vunpack.c.l.b16 %v39
  %v264 = vunpack.c.l.b16 %v40
  %v265 = vunpack.c.l.b16 %v41
  %v266 = vunpack.c.l.b16 %v42
  %v267 = vunpack.c.l.b16 %v43
  %v268 = vunpack.c.l.b16 %v44
  %v269 = vunpack.c.l.b16 %v45
  %v270 = vpack.c.b16 %v263, %v262
  %v271 = vpack.c.b16 %v265, %v264
  %v272 = vpack.c.b16 %v267, %v266
  %v273 = vpack.c.b16 %v269, %v268
  %vm278 = vcmask 523264
  %v280 = vsel %vm278, %v253, 0
  %282 = vmatprep.subr.bf16.mxu0 0
  %283 = vmatpush1.bf16.msra.mxu0 %v270
  %284 = vmatprep.subr.bf16.mxu0 0
  %285 = vmatpush1.bf16.msra.mxu0 %v271
  %286 = vmatprep.subr.bf16.mxu0 0
  %287 = vmatpush1.bf16.msra.mxu0 %v272
  %288 = vmatprep.subr.bf16.mxu0 0
  %289 = vmatpush1.bf16.msra.mxu0 %v273
  %290 = vmatprep.subr.bf16.mxu0 0
  %291 = vmatpush1.bf16.msra.mxu0 0
  %292 = vmatprep.subr.bf16.mxu0 0
  %293 = vmatpush1.bf16.msra.mxu0 0
  %294 = vmatprep.subr.bf16.mxu0 0
  %295 = vmatpush1.bf16.msra.mxu0 0
  %296 = vmatprep.subr.bf16.mxu0 0
  %297 = vmatpush1.bf16.msra.mxu0 0
  %298 = vmatprep.subr.bf16.mxu0 0
  %299 = vmatpush1.bf16.msra.mxu0 0
  %300 = vmatprep.subr.bf16.mxu0 0
  %301 = vmatpush1.bf16.msra.mxu0 0
  %302 = vmatprep.subr.bf16.mxu0 0
  %303 = vmatpush1.bf16.msra.mxu0 0
  %304 = vmatprep.subr.bf16.mxu0 0
  %305 = vmatpush1.bf16.msra.mxu0 0
  %306 = vmatprep.subr.bf16.mxu0 0
  %307 = vmatpush1.bf16.msra.mxu0 0
  %308 = vmatprep.subr.bf16.mxu0 0
  %309 = vmatpush1.bf16.msra.mxu0 0
  %310 = vmatprep.subr.bf16.mxu0 0
  %311 = vmatpush1.bf16.msra.mxu0 0
  %312 = vmatprep.subr.bf16.mxu0 0
  %313 = vmatpush1.bf16.msra.mxu0 0
  %314 = vmatprep.mubr.bf16.mxu0 0
  %315 = vmatmul.mubr.bf16.gmra.mrb[0].mxu0 %v280
  %v316 = vpop.f32.mrb[0].mxu0
  %v317 = vadd.f32 %v47, %v316
  %v318 = vpop.f32.mrb[0].mxu0
  %v319 = vpop.f32.mrb[0].mxu0
  %v320 = vpop.f32.mrb[0].mxu0
  %321 = vdwg.mxu0
  %v322 = vadd.f32 %v251, %v317
  %v323 = vxor.u32 %v322, 2147483648
  %v324 = vmul.f32 %v323, 1.442695
  %v325 = vpow.pop %v324
  %v326 = vadd.f32 %v325, 1.0
  %v327 = vrcp.pop %v326
  %v328 = vmul.f32 1.0, %v327
  %330 = vrot.lane.b32.xlu0 %v317, 64
  %v331 = vpop.permute.xlu0 %330
  %v333 = vmul.f32 %v328, %v331
  %335 = vrot.lane.b32.xlu0 %v333, 64
  %v336 = vpop.permute.xlu0 %335
  %v338 = vadd.f32 %v251, %v336
  %v339 = vtanh.pop %v338
  %v340 = vsub.f32 0.0, %v339
  %342 = vrot.lane.b32.xlu0 %v340, 96
  %v343 = vpop.permute.xlu0 %342
  %v345 = vmul.f32 %v328, %v343
  %347 = vrot.lane.b32.xlu0 %v345, 32
  %v348 = vpop.permute.xlu0 %347
  %v350 = vadd.f32 %v339, %v348
  %352 = vrot.lane.b32.xlu0 %v350, 64
  %v353 = vpop.permute.xlu0 %352
  %vm355 = vcmask 254976
  %356 = vst.msk [vmem:[#allocation3] sm:$0x3] %vm355, %v353
  %357 = vrot.lane.b32.xlu0 %v350, 96
  %v358 = vpop.permute.xlu0 %357
  %vm360 = vcmask 519426
  %361 = vst.msk [vmem:[#allocation3 + $0xc] sm:$0xc] %vm360, %v358
  %v362 = vld [vmem:[#allocation2 + $0x4] sm:$0xf]
  %v363 = vsel %vm70, %v353, %v358
  %v364 = vmul.f32 %v363, %v77
  %v365 = vpack.c.bf16 %v364, %v364
  %v367 = vsel %vm278, %v365, 0
  %369 = vmatprep.subr.bf16.mxu0 0
  %370 = vmatpush1.bf16.msra.mxu0 %v270
  %371 = vmatprep.subr.bf16.mxu0 0
  %372 = vmatpush1.bf16.msra.mxu0 %v271
  %373 = vmatprep.subr.bf16.mxu0 0
  %374 = vmatpush1.bf16.msra.mxu0 %v272
  %375 = vmatprep.subr.bf16.mxu0 0
  %376 = vmatpush1.bf16.msra.mxu0 %v273
  %377 = vmatprep.subr.bf16.mxu0 0
  %378 = vmatpush1.bf16.msra.mxu0 0
  %379 = vmatprep.subr.bf16.mxu0 0
  %380 = vmatpush1.bf16.msra.mxu0 0
  %381 = vmatprep.subr.bf16.mxu0 0
  %382 = vmatpush1.bf16.msra.mxu0 0
  %383 = vmatprep.subr.bf16.mxu0 0
  %384 = vmatpush1.bf16.msra.mxu0 0
  %385 = vmatprep.subr.bf16.mxu0 0
  %386 = vmatpush1.bf16.msra.mxu0 0
  %387 = vmatprep.subr.bf16.mxu0 0
  %388 = vmatpush1.bf16.msra.mxu0 0
  %389 = vmatprep.subr.bf16.mxu0 0
  %390 = vmatpush1.bf16.msra.mxu0 0
  %391 = vmatprep.subr.bf16.mxu0 0
  %392 = vmatpush1.bf16.msra.mxu0 0
  %393 = vmatprep.subr.bf16.mxu0 0
  %394 = vmatpush1.bf16.msra.mxu0 0
  %395 = vmatprep.subr.bf16.mxu0 0
  %396 = vmatpush1.bf16.msra.mxu0 0
  %397 = vmatprep.subr.bf16.mxu0 0
  %398 = vmatpush1.bf16.msra.mxu0 0
  %399 = vmatprep.subr.bf16.mxu0 0
  %400 = vmatpush1.bf16.msra.mxu0 0
  %401 = vmatprep.mubr.bf16.mxu0 0
  %402 = vmatmul.mubr.bf16.gmra.mrb[0].mxu0 %v367
  %v403 = vpop.f32.mrb[0].mxu0
  %v404 = vadd.f32 %v47, %v403
  %v405 = vpop.f32.mrb[0].mxu0
  %v406 = vpop.f32.mrb[0].mxu0
  %v407 = vpop.f32.mrb[0].mxu0
  %408 = vdwg.mxu0
  %v409 = vadd.f32 %v362, %v404
  %v410 = vxor.u32 %v409, 2147483648
  %v411 = vmul.f32 %v410, 1.442695
  %v412 = vpow.pop %v411
  %v413 = vadd.f32 %v412, 1.0
  %v414 = vrcp.pop %v413
  %v415 = vmul.f32 1.0, %v414
  %417 = vrot.lane.b32.xlu0 %v404, 64
  %v418 = vpop.permute.xlu0 %417
  %v420 = vmul.f32 %v415, %v418
  %422 = vrot.lane.b32.xlu0 %v420, 64
  %v423 = vpop.permute.xlu0 %422
  %v425 = vadd.f32 %v362, %v423
  %v426 = vtanh.pop %v425
  %v427 = vsub.f32 %v350, %v426
  %429 = vrot.lane.b32.xlu0 %v427, 96
  %v430 = vpop.permute.xlu0 %429
  %v432 = vmul.f32 %v415, %v430
  %434 = vrot.lane.b32.xlu0 %v432, 32
  %v435 = vpop.permute.xlu0 %434
  %v437 = vadd.f32 %v426, %v435
  %439 = vrot.lane.b32.xlu0 %v437, 64
  %v440 = vpop.permute.xlu0 %439
  %442 = vst.msk [vmem:[#allocation3 + $0x2] sm:$0x3] %vm355, %v440
  %443 = vrot.lane.b32.xlu0 %v437, 96
  %v444 = vpop.permute.xlu0 %443
  %446 = vst.msk [vmem:[#allocation3 + $0xa] sm:$0xc] %vm360, %v444
  %v447 = vld [vmem:[#allocation2 + $0x8] sm:$0xf]
  %v448 = vsel %vm70, %v440, %v444
  %v449 = vmul.f32 %v448, %v77
  %v450 = vpack.c.bf16 %v449, %v449
  %v452 = vsel %vm278, %v450, 0
  %454 = vmatprep.subr.bf16.mxu0 0
  %455 = vmatpush1.bf16.msra.mxu0 %v270
  %456 = vmatprep.subr.bf16.mxu0 0
  %457 = vmatpush1.bf16.msra.mxu0 %v271
  %458 = vmatprep.subr.bf16.mxu0 0
  %459 = vmatpush1.bf16.msra.mxu0 %v272
  %460 = vmatprep.subr.bf16.mxu0 0
  %461 = vmatpush1.bf16.msra.mxu0 %v273
  %462 = vmatprep.subr.bf16.mxu0 0
  %463 = vmatpush1.bf16.msra.mxu0 0
  %464 = vmatprep.subr.bf16.mxu0 0
  %465 = vmatpush1.bf16.msra.mxu0 0
  %466 = vmatprep.subr.bf16.mxu0 0
  %467 = vmatpush1.bf16.msra.mxu0 0
  %468 = vmatprep.subr.bf16.mxu0 0
  %469 = vmatpush1.bf16.msra.mxu0 0
  %470 = vmatprep.subr.bf16.mxu0 0
  %471 = vmatpush1.bf16.msra.mxu0 0
  %472 = vmatprep.subr.bf16.mxu0 0
  %473 = vmatpush1.bf16.msra.mxu0 0
  %474 = vmatprep.subr.bf16.mxu0 0
  %475 = vmatpush1.bf16.msra.mxu0 0
  %476 = vmatprep.subr.bf16.mxu0 0
  %477 = vmatpush1.bf16.msra.mxu0 0
  %478 = vmatprep.subr.bf16.mxu0 0
  %479 = vmatpush1.bf16.msra.mxu0 0
  %480 = vmatprep.subr.bf16.mxu0 0
  %481 = vmatpush1.bf16.msra.mxu0 0
  %482 = vmatprep.subr.bf16.mxu0 0
  %483 = vmatpush1.bf16.msra.mxu0 0
  %484 = vmatprep.subr.bf16.mxu0 0
  %485 = vmatpush1.bf16.msra.mxu0 0
  %486 = vmatprep.mubr.bf16.mxu0 0
  %487 = vmatmul.mubr.bf16.gmra.mrb[0].mxu0 %v452
  %v488 = vpop.f32.mrb[0].mxu0
  %v489 = vadd.f32 %v47, %v488
  %v490 = vpop.f32.mrb[0].mxu0
  %v491 = vpop.f32.mrb[0].mxu0
  %v492 = vpop.f32.mrb[0].mxu0
  %493 = vdwg.mxu0
  %v494 = vadd.f32 %v447, %v489
  %v495 = vxor.u32 %v494, 2147483648
  %v496 = vmul.f32 %v495, 1.442695
  %v497 = vpow.pop %v496
  %v498 = vadd.f32 %v497, 1.0
  %v499 = vrcp.pop %v498
  %v500 = vmul.f32 1.0, %v499
  %502 = vrot.lane.b32.xlu0 %v489, 64
  %v503 = vpop.permute.xlu0 %502
  %v505 = vmul.f32 %v500, %v503
  %507 = vrot.lane.b32.xlu0 %v505, 64
  %v508 = vpop.permute.xlu0 %507
  %v510 = vadd.f32 %v447, %v508
  %v511 = vtanh.pop %v510
  %v512 = vsub.f32 %v437, %v511
  %514 = vrot.lane.b32.xlu0 %v512, 96
  %v515 = vpop.permute.xlu0 %514
  %v517 = vmul.f32 %v500, %v515
  %519 = vrot.lane.b32.xlu0 %v517, 32
  %v520 = vpop.permute.xlu0 %519
  %v522 = vadd.f32 %v511, %v520
  %524 = vrot.lane.b32.xlu0 %v522, 64
  %v525 = vpop.permute.xlu0 %524
  %527 = vst.msk [vmem:[#allocation3 + $0x4] sm:$0x3] %vm355, %v525
  %528 = vrot.lane.b32.xlu0 %v522, 96
  %v529 = vpop.permute.xlu0 %528
  %531 = vst.msk [vmem:[#allocation3 + $0x8] sm:$0xc] %vm360, %v529
  %v532 = vld [vmem:[#allocation2 + $0xc] sm:$0xf]
  %v533 = vsel %vm70, %v525, %v529
  %v534 = vmul.f32 %v533, %v77
  %v535 = vpack.c.bf16 %v534, %v534
  %v537 = vsel %vm278, %v535, 0
  %539 = vmatprep.subr.bf16.mxu0 0
  %540 = vmatpush1.bf16.msra.mxu0 %v270
  %541 = vmatprep.subr.bf16.mxu0 0
  %542 = vmatpush1.bf16.msra.mxu0 %v271
  %543 = vmatprep.subr.bf16.mxu0 0
  %544 = vmatpush1.bf16.msra.mxu0 %v272
  %545 = vmatprep.subr.bf16.mxu0 0
  %546 = vmatpush1.bf16.msra.mxu0 %v273
  %547 = vmatprep.subr.bf16.mxu0 0
  %548 = vmatpush1.bf16.msra.mxu0 0
  %549 = vmatprep.subr.bf16.mxu0 0
  %550 = vmatpush1.bf16.msra.mxu0 0
  %551 = vmatprep.subr.bf16.mxu0 0
  %552 = vmatpush1.bf16.msra.mxu0 0
  %553 = vmatprep.subr.bf16.mxu0 0
  %554 = vmatpush1.bf16.msra.mxu0 0
  %555 = vmatprep.subr.bf16.mxu0 0
  %556 = vmatpush1.bf16.msra.mxu0 0
  %557 = vmatprep.subr.bf16.mxu0 0
  %558 = vmatpush1.bf16.msra.mxu0 0
  %559 = vmatprep.subr.bf16.mxu0 0
  %560 = vmatpush1.bf16.msra.mxu0 0
  %561 = vmatprep.subr.bf16.mxu0 0
  %562 = vmatpush1.bf16.msra.mxu0 0
  %563 = vmatprep.subr.bf16.mxu0 0
  %564 = vmatpush1.bf16.msra.mxu0 0
  %565 = vmatprep.subr.bf16.mxu0 0
  %566 = vmatpush1.bf16.msra.mxu0 0
  %567 = vmatprep.subr.bf16.mxu0 0
  %568 = vmatpush1.bf16.msra.mxu0 0
  %569 = vmatprep.subr.bf16.mxu0 0
  %570 = vmatpush1.bf16.msra.mxu0 0
  %571 = vmatprep.mubr.bf16.mxu0 0
  %572 = vmatmul.mubr.bf16.gmra.mrb[0].mxu0 %v537
  %v573 = vpop.f32.mrb[0].mxu0
  %v574 = vadd.f32 %v47, %v573
  %v575 = vpop.f32.mrb[0].mxu0
  %v576 = vpop.f32.mrb[0].mxu0
  %v577 = vpop.f32.mrb[0].mxu0
  %578 = vdwg.mxu0
  %v579 = vadd.f32 %v532, %v574
  %v580 = vxor.u32 %v579, 2147483648
  %v581 = vmul.f32 %v580, 1.442695
  %v582 = vpow.pop %v581
  %v583 = vadd.f32 %v582, 1.0
  %v584 = vrcp.pop %v583
  %v585 = vmul.f32 1.0, %v584
  %587 = vrot.lane.b32.xlu0 %v574, 64
  %v588 = vpop.permute.xlu0 %587
  %v590 = vmul.f32 %v585, %v588
  %592 = vrot.lane.b32.xlu0 %v590, 64
  %v593 = vpop.permute.xlu0 %592
  %v595 = vadd.f32 %v532, %v593
  %v596 = vtanh.pop %v595
  %v597 = vsub.f32 %v522, %v596
  %599 = vrot.lane.b32.xlu0 %v597, 96
  %v600 = vpop.permute.xlu0 %599
  %v602 = vmul.f32 %v585, %v600
  %604 = vrot.lane.b32.xlu0 %v602, 32
  %v605 = vpop.permute.xlu0 %604
  %v607 = vadd.f32 %v596, %v605
  %609 = vrot.lane.b32.xlu0 %v607, 64
  %v610 = vpop.permute.xlu0 %609
  %612 = vst.msk [vmem:[#allocation3 + $0x6] sm:$0x3] %vm355, %v610
  %613 = vrot.lane.b32.xlu0 %v607, 96
  %v614 = vpop.permute.xlu0 %613
  %616 = vst.msk [vmem:[#allocation3 + $0x6] sm:$0xc] %vm360, %v614
  %v617 = vld [vmem:[#allocation2 + $0x10] sm:$0xf]
  %v618 = vsel %vm70, %v610, %v614
  %v619 = vmul.f32 %v618, %v77
  %v620 = vpack.c.bf16 %v619, %v619
  %v622 = vsel %vm278, %v620, 0
  %624 = vmatprep.subr.bf16.mxu0 0
  %625 = vmatpush1.bf16.msra.mxu0 %v270
  %626 = vmatprep.subr.bf16.mxu0 0
  %627 = vmatpush1.bf16.msra.mxu0 %v271
  %628 = vmatprep.subr.bf16.mxu0 0
  %629 = vmatpush1.bf16.msra.mxu0 %v272
  %630 = vmatprep.subr.bf16.mxu0 0
  %631 = vmatpush1.bf16.msra.mxu0 %v273
  %632 = vmatprep.subr.bf16.mxu0 0
  %633 = vmatpush1.bf16.msra.mxu0 0
  %634 = vmatprep.subr.bf16.mxu0 0
  %635 = vmatpush1.bf16.msra.mxu0 0
  %636 = vmatprep.subr.bf16.mxu0 0
  %637 = vmatpush1.bf16.msra.mxu0 0
  %638 = vmatprep.subr.bf16.mxu0 0
  %639 = vmatpush1.bf16.msra.mxu0 0
  %640 = vmatprep.subr.bf16.mxu0 0
  %641 = vmatpush1.bf16.msra.mxu0 0
  %642 = vmatprep.subr.bf16.mxu0 0
  %643 = vmatpush1.bf16.msra.mxu0 0
  %644 = vmatprep.subr.bf16.mxu0 0
  %645 = vmatpush1.bf16.msra.mxu0 0
  %646 = vmatprep.subr.bf16.mxu0 0
  %647 = vmatpush1.bf16.msra.mxu0 0
  %648 = vmatprep.subr.bf16.mxu0 0
  %649 = vmatpush1.bf16.msra.mxu0 0
  %650 = vmatprep.subr.bf16.mxu0 0
  %651 = vmatpush1.bf16.msra.mxu0 0
  %652 = vmatprep.subr.bf16.mxu0 0
  %653 = vmatpush1.bf16.msra.mxu0 0
  %654 = vmatprep.subr.bf16.mxu0 0
  %655 = vmatpush1.bf16.msra.mxu0 0
  %656 = vmatprep.mubr.bf16.mxu0 0
  %657 = vmatmul.mubr.bf16.gmra.mrb[0].mxu0 %v622
  %v658 = vpop.f32.mrb[0].mxu0
  %v659 = vadd.f32 %v47, %v658
  %v660 = vpop.f32.mrb[0].mxu0
  %v661 = vpop.f32.mrb[0].mxu0
  %v662 = vpop.f32.mrb[0].mxu0
  %663 = vdwg.mxu0
  %v664 = vadd.f32 %v617, %v659
  %v665 = vxor.u32 %v664, 2147483648
  %v666 = vmul.f32 %v665, 1.442695
  %v667 = vpow.pop %v666
  %v668 = vadd.f32 %v667, 1.0
  %v669 = vrcp.pop %v668
  %v670 = vmul.f32 1.0, %v669
  %672 = vrot.lane.b32.xlu0 %v659, 64
  %v673 = vpop.permute.xlu0 %672
  %v675 = vmul.f32 %v670, %v673
  %677 = vrot.lane.b32.xlu0 %v675, 64
  %v678 = vpop.permute.xlu0 %677
  %v680 = vadd.f32 %v617, %v678
  %v681 = vtanh.pop %v680
  %v682 = vsub.f32 %v607, %v681
  %684 = vrot.lane.b32.xlu0 %v682, 96
  %v685 = vpop.permute.xlu0 %684
  %v687 = vmul.f32 %v670, %v685
  %689 = vrot.lane.b32.xlu0 %v687, 32
  %v690 = vpop.permute.xlu0 %689
  %v692 = vadd.f32 %v681, %v690
  %694 = vrot.lane.b32.xlu0 %v692, 64
  %v695 = vpop.permute.xlu0 %694
  %697 = vst.msk [vmem:[#allocation3 + $0x8] sm:$0x3] %vm355, %v695
  %698 = vrot.lane.b32.xlu0 %v692, 96
  %v699 = vpop.permute.xlu0 %698
  %701 = vst.msk [vmem:[#allocation3 + $0x4] sm:$0xc] %vm360, %v699
  %v702 = vld [vmem:[#allocation2 + $0x14] sm:$0xf]
  %v703 = vsel %vm70, %v695, %v699
  %v704 = vmul.f32 %v703, %v77
  %v705 = vpack.c.bf16 %v704, %v704
  %v707 = vsel %vm278, %v705, 0
  %709 = vmatprep.subr.bf16.mxu0 0
  %710 = vmatpush1.bf16.msra.mxu0 %v270
  %711 = vmatprep.subr.bf16.mxu0 0
  %712 = vmatpush1.bf16.msra.mxu0 %v271
  %713 = vmatprep.subr.bf16.mxu0 0
  %714 = vmatpush1.bf16.msra.mxu0 %v272
  %715 = vmatprep.subr.bf16.mxu0 0
  %716 = vmatpush1.bf16.msra.mxu0 %v273
  %717 = vmatprep.subr.bf16.mxu0 0
  %718 = vmatpush1.bf16.msra.mxu0 0
  %719 = vmatprep.subr.bf16.mxu0 0
  %720 = vmatpush1.bf16.msra.mxu0 0
  %721 = vmatprep.subr.bf16.mxu0 0
  %722 = vmatpush1.bf16.msra.mxu0 0
  %723 = vmatprep.subr.bf16.mxu0 0
  %724 = vmatpush1.bf16.msra.mxu0 0
  %725 = vmatprep.subr.bf16.mxu0 0
  %726 = vmatpush1.bf16.msra.mxu0 0
  %727 = vmatprep.subr.bf16.mxu0 0
  %728 = vmatpush1.bf16.msra.mxu0 0
  %729 = vmatprep.subr.bf16.mxu0 0
  %730 = vmatpush1.bf16.msra.mxu0 0
  %731 = vmatprep.subr.bf16.mxu0 0
  %732 = vmatpush1.bf16.msra.mxu0 0
  %733 = vmatprep.subr.bf16.mxu0 0
  %734 = vmatpush1.bf16.msra.mxu0 0
  %735 = vmatprep.subr.bf16.mxu0 0
  %736 = vmatpush1.bf16.msra.mxu0 0
  %737 = vmatprep.subr.bf16.mxu0 0
  %738 = vmatpush1.bf16.msra.mxu0 0
  %739 = vmatprep.subr.bf16.mxu0 0
  %740 = vmatpush1.bf16.msra.mxu0 0
  %741 = vmatprep.mubr.bf16.mxu0 0
  %742 = vmatmul.mubr.bf16.gmra.mrb[0].mxu0 %v707
  %v743 = vpop.f32.mrb[0].mxu0
  %v744 = vadd.f32 %v47, %v743
  %v745 = vpop.f32.mrb[0].mxu0
  %v746 = vpop.f32.mrb[0].mxu0
  %v747 = vpop.f32.mrb[0].mxu0
  %748 = vdwg.mxu0
  %v749 = vadd.f32 %v702, %v744
  %v750 = vxor.u32 %v749, 2147483648
  %v751 = vmul.f32 %v750, 1.442695
  %v752 = vpow.pop %v751
  %v753 = vadd.f32 %v752, 1.0
  %v754 = vrcp.pop %v753
  %v755 = vmul.f32 1.0, %v754
  %757 = vrot.lane.b32.xlu0 %v744, 64
  %v758 = vpop.permute.xlu0 %757
  %v760 = vmul.f32 %v755, %v758
  %762 = vrot.lane.b32.xlu0 %v760, 64
  %v763 = vpop.permute.xlu0 %762
  %v765 = vadd.f32 %v702, %v763
  %v766 = vtanh.pop %v765
  %v767 = vsub.f32 %v692, %v766
  %769 = vrot.lane.b32.xlu0 %v767, 96
  %v770 = vpop.permute.xlu0 %769
  %v772 = vmul.f32 %v755, %v770
  %774 = vrot.lane.b32.xlu0 %v772, 32
  %v775 = vpop.permute.xlu0 %774
  %v777 = vadd.f32 %v766, %v775
  %779 = vrot.lane.b32.xlu0 %v777, 64
  %v780 = vpop.permute.xlu0 %779
  %782 = vst.msk [vmem:[#allocation3 + $0xa] sm:$0x3] %vm355, %v780
  %783 = vrot.lane.b32.xlu0 %v777, 96
  %v784 = vpop.permute.xlu0 %783
  %786 = vst.msk [vmem:[#allocation3 + $0x2] sm:$0xc] %vm360, %v784
  %v787 = vld [vmem:[#allocation2 + $0x18] sm:$0xf]
  %v788 = vsel %vm70, %v780, %v784
  %v789 = vmul.f32 %v788, %v77
  %v790 = vpack.c.bf16 %v789, %v789
  %v792 = vsel %vm278, %v790, 0
  %794 = vmatprep.subr.bf16.mxu0 0
  %795 = vmatpush1.bf16.msra.mxu0 %v270
  %796 = vmatprep.subr.bf16.mxu0 0
  %797 = vmatpush1.bf16.msra.mxu0 %v271
  %798 = vmatprep.subr.bf16.mxu0 0
  %799 = vmatpush1.bf16.msra.mxu0 %v272
  %800 = vmatprep.subr.bf16.mxu0 0
  %801 = vmatpush1.bf16.msra.mxu0 %v273
  %802 = vmatprep.subr.bf16.mxu0 0
  %803 = vmatpush1.bf16.msra.mxu0 0
  %804 = vmatprep.subr.bf16.mxu0 0
  %805 = vmatpush1.bf16.msra.mxu0 0
  %806 = vmatprep.subr.bf16.mxu0 0
  %807 = vmatpush1.bf16.msra.mxu0 0
  %808 = vmatprep.subr.bf16.mxu0 0
  %809 = vmatpush1.bf16.msra.mxu0 0
  %810 = vmatprep.subr.bf16.mxu0 0
  %811 = vmatpush1.bf16.msra.mxu0 0
  %812 = vmatprep.subr.bf16.mxu0 0
  %813 = vmatpush1.bf16.msra.mxu0 0
  %814 = vmatprep.subr.bf16.mxu0 0
  %815 = vmatpush1.bf16.msra.mxu0 0
  %816 = vmatprep.subr.bf16.mxu0 0
  %817 = vmatpush1.bf16.msra.mxu0 0
  %818 = vmatprep.subr.bf16.mxu0 0
  %819 = vmatpush1.bf16.msra.mxu0 0
  %820 = vmatprep.subr.bf16.mxu0 0
  %821 = vmatpush1.bf16.msra.mxu0 0
  %822 = vmatprep.subr.bf16.mxu0 0
  %823 = vmatpush1.bf16.msra.mxu0 0
  %824 = vmatprep.subr.bf16.mxu0 0
  %825 = vmatpush1.bf16.msra.mxu0 0
  %826 = vmatprep.mubr.bf16.mxu0 0
  %827 = vmatmul.mubr.bf16.gmra.mrb[0].mxu0 %v792
  %v828 = vpop.f32.mrb[0].mxu0
  %v829 = vadd.f32 %v47, %v828
  %v830 = vpop.f32.mrb[0].mxu0
  %v831 = vpop.f32.mrb[0].mxu0
  %v832 = vpop.f32.mrb[0].mxu0
  %833 = vdwg.mxu0
  %v834 = vadd.f32 %v787, %v829
  %v835 = vxor.u32 %v834, 2147483648
  %v836 = vmul.f32 %v835, 1.442695
  %v837 = vpow.pop %v836
  %v838 = vadd.f32 %v837, 1.0
  %v839 = vrcp.pop %v838
  %v840 = vmul.f32 1.0, %v839
  %842 = vrot.lane.b32.xlu0 %v829, 64
  %v843 = vpop.permute.xlu0 %842
  %v845 = vmul.f32 %v840, %v843
  %847 = vrot.lane.b32.xlu0 %v845, 64
  %v848 = vpop.permute.xlu0 %847
  %v850 = vadd.f32 %v787, %v848
  %v851 = vtanh.pop %v850
  %v852 = vsub.f32 %v777, %v851
  %854 = vrot.lane.b32.xlu0 %v852, 96
  %v855 = vpop.permute.xlu0 %854
  %v857 = vmul.f32 %v840, %v855
  %859 = vrot.lane.b32.xlu0 %v857, 32
  %v860 = vpop.permute.xlu0 %859
  %v862 = vadd.f32 %v851, %v860
  %864 = vrot.lane.b32.xlu0 %v862, 64
  %v865 = vpop.permute.xlu0 %864
  %867 = vst.msk [vmem:[#allocation3 + $0xc] sm:$0x3] %vm355, %v865
  %868 = vrot.lane.b32.xlu0 %v862, 96
  %v869 = vpop.permute.xlu0 %868
  %871 = vst.msk [vmem:[#allocation3] sm:$0xc] %vm360, %v869
  %v872 = vld [vmem:[#allocation2 + $0x1c] sm:$0xf]
  %v873 = vsel %vm70, %v865, %v869
  %v874 = vmul.f32 %v873, %v77
  %v875 = vpack.c.bf16 %v874, %v874
  %v877 = vsel %vm278, %v875, 0
  %879 = vmatprep.subr.bf16.mxu0 0
  %880 = vmatpush1.bf16.msra.mxu0 %v270
  %881 = vmatprep.subr.bf16.mxu0 0
  %882 = vmatpush1.bf16.msra.mxu0 %v271
  %883 = vmatprep.subr.bf16.mxu0 0
  %884 = vmatpush1.bf16.msra.mxu0 %v272
  %885 = vmatprep.subr.bf16.mxu0 0
  %886 = vmatpush1.bf16.msra.mxu0 %v273
  %887 = vmatprep.subr.bf16.mxu0 0
  %888 = vmatpush1.bf16.msra.mxu0 0
  %889 = vmatprep.subr.bf16.mxu0 0
  %890 = vmatpush1.bf16.msra.mxu0 0
  %891 = vmatprep.subr.bf16.mxu0 0
  %892 = vmatpush1.bf16.msra.mxu0 0
  %893 = vmatprep.subr.bf16.mxu0 0
  %894 = vmatpush1.bf16.msra.mxu0 0
  %895 = vmatprep.subr.bf16.mxu0 0
  %896 = vmatpush1.bf16.msra.mxu0 0
  %897 = vmatprep.subr.bf16.mxu0 0
  %898 = vmatpush1.bf16.msra.mxu0 0
  %899 = vmatprep.subr.bf16.mxu0 0
  %900 = vmatpush1.bf16.msra.mxu0 0
  %901 = vmatprep.subr.bf16.mxu0 0
  %902 = vmatpush1.bf16.msra.mxu0 0
  %903 = vmatprep.subr.bf16.mxu0 0
  %904 = vmatpush1.bf16.msra.mxu0 0
  %905 = vmatprep.subr.bf16.mxu0 0
  %906 = vmatpush1.bf16.msra.mxu0 0
  %907 = vmatprep.subr.bf16.mxu0 0
  %908 = vmatpush1.bf16.msra.mxu0 0
  %909 = vmatprep.subr.bf16.mxu0 0
  %910 = vmatpush1.bf16.msra.mxu0 0
  %911 = vmatprep.mubr.bf16.mxu0 0
  %912 = vmatmul.mubr.bf16.gmra.mrb[0].mxu0 %v877
  %v913 = vpop.f32.mrb[0].mxu0
  %v914 = vadd.f32 %v47, %v913
  %v915 = vpop.f32.mrb[0].mxu0
  %v916 = vpop.f32.mrb[0].mxu0
  %v917 = vpop.f32.mrb[0].mxu0
  %918 = vdwg.mxu0
  %v919 = vadd.f32 %v872, %v914
  %v920 = vxor.u32 %v919, 2147483648
  %v921 = vmul.f32 %v920, 1.442695
  %v922 = vpow.pop %v921
  %v923 = vadd.f32 %v922, 1.0
  %v924 = vrcp.pop %v923
  %v925 = vmul.f32 1.0, %v924
  %927 = vrot.lane.b32.xlu0 %v914, 64
  %v928 = vpop.permute.xlu0 %927
  %v930 = vmul.f32 %v925, %v928
  %932 = vrot.lane.b32.xlu0 %v930, 64
  %v933 = vpop.permute.xlu0 %932
  %v935 = vadd.f32 %v872, %v933
  %v936 = vtanh.pop %v935
  %v937 = vsub.f32 %v862, %v936
  %939 = vrot.lane.b32.xlu0 %v937, 96
  %v940 = vpop.permute.xlu0 %939
  %v942 = vmul.f32 %v925, %v940
  %944 = vrot.lane.b32.xlu0 %v942, 32
  %v945 = vpop.permute.xlu0 %944
  %v947 = vadd.f32 %v936, %v945
  %949 = vrot.lane.b32.xlu0 %v947, 64
  %v950 = vpop.permute.xlu0 %949
  %952 = vst.msk [vmem:[#allocation3 + $0xe] sm:$0x3] %vm355, %v950
  %953 = vrot.lane.b32.xlu0 %v947, 96
  %v954 = vpop.permute.xlu0 %953
  %956 = vst.msk [vmem:[#allocation3 - $0x2] sm:$0xc] %vm360, %v954
  %v957 = vld [vmem:[#allocation3] sm:$0xff]
  %v958 = vld [vmem:[#allocation3 + $0x8] sm:$0xff]
  %v959 = vpack.c.bf16 %v958, %v957
  %v960 = vlaneseq
  %v961 = vshrl.u32 %v960, 7
  %v962 = vsub.s32 0, %v961
  %v963 = vrot.slane %v36, %v962
  %v964 = vlaneseq
  %v965 = vshrl.u32 %v964, 7
  %v966 = vsub.s32 0, %v965
  %v967 = vrot.slane %v37, %v966
  %v976 = vunpack.c.l.b16 %v27
  %v977 = vunpack.c.h.b16 %v27
  %v978 = vunpack.c.l.b16 %v28
  %v979 = vunpack.c.h.b16 %v28
  %v980 = vunpack.c.l.b16 %v29
  %v981 = vunpack.c.h.b16 %v29
  %v982 = vunpack.c.l.b16 %v30
  %v983 = vunpack.c.h.b16 %v30
  %v984 = vunpack.c.l.b16 %v31
  %v985 = vunpack.c.h.b16 %v31
  %v986 = vunpack.c.l.b16 %v32
  %v987 = vunpack.c.h.b16 %v32
  %v988 = vunpack.c.l.b16 %v33
  %v989 = vunpack.c.h.b16 %v33
  %v990 = vunpack.c.l.b16 %v34
  %v991 = vunpack.c.h.b16 %v34
  %v992 = vpack.c.b16 %v978, %v976
  %v993 = vpack.c.b16 %v979, %v977
  %v994 = vpack.c.b16 %v982, %v980
  %v995 = vpack.c.b16 %v983, %v981
  %v996 = vpack.c.b16 %v986, %v984
  %v997 = vpack.c.b16 %v987, %v985
  %v998 = vpack.c.b16 %v990, %v988
  %v999 = vpack.c.b16 %v991, %v989
  %v1009 = vsel %vm278, %v959, 0
  %1011 = vmatprep.subr.bf16.mxu0 %v993
  %1012 = vmatpush1.bf16.msra.mxu0 %v992
  %1013 = vmatprep.subr.bf16.mxu0 %v995
  %1014 = vmatpush1.bf16.msra.mxu0 %v994
  %1015 = vmatprep.subr.bf16.mxu0 %v997
  %1016 = vmatpush1.bf16.msra.mxu0 %v996
  %1017 = vmatprep.subr.bf16.mxu0 %v999
  %1018 = vmatpush1.bf16.msra.mxu0 %v998
  %1019 = vmatprep.subr.bf16.mxu0 0
  %1020 = vmatpush1.bf16.msra.mxu0 0
  %1021 = vmatprep.subr.bf16.mxu0 0
  %1022 = vmatpush1.bf16.msra.mxu0 0
  %1023 = vmatprep.subr.bf16.mxu0 0
  %1024 = vmatpush1.bf16.msra.mxu0 0
  %1025 = vmatprep.subr.bf16.mxu0 0
  %1026 = vmatpush1.bf16.msra.mxu0 0
  %1027 = vmatprep.subr.bf16.mxu0 0
  %1028 = vmatpush1.bf16.msra.mxu0 0
  %1029 = vmatprep.subr.bf16.mxu0 0
  %1030 = vmatpush1.bf16.msra.mxu0 0
  %1031 = vmatprep.subr.bf16.mxu0 0
  %1032 = vmatpush1.bf16.msra.mxu0 0
  %1033 = vmatprep.subr.bf16.mxu0 0
  %1034 = vmatpush1.bf16.msra.mxu0 0
  %1035 = vmatprep.subr.bf16.mxu0 0
  %1036 = vmatpush1.bf16.msra.mxu0 0
  %1037 = vmatprep.subr.bf16.mxu0 0
  %1038 = vmatpush1.bf16.msra.mxu0 0
  %1039 = vmatprep.subr.bf16.mxu0 0
  %1040 = vmatpush1.bf16.msra.mxu0 0
  %1041 = vmatprep.subr.bf16.mxu0 0
  %1042 = vmatpush1.bf16.msra.mxu0 0
  %1043 = vmatprep.mubr.bf16.mxu0 0
  %1044 = vmatmul.mubr.bf16.gmra.mrb[0].mxu0 %v1009
  %v1045 = vpop.f32.mrb[0].mxu0
  %v1046 = vadd.f32 %v963, %v1045
  %v1047 = vpop.f32.mrb[0].mxu0
  %v1048 = vadd.f32 %v967, %v1047
  %v1049 = vpop.f32.mrb[0].mxu0
  %v1050 = vadd.f32 %v963, %v1049
  %v1051 = vpop.f32.mrb[0].mxu0
  %v1052 = vadd.f32 %v967, %v1051
  %1053 = vdwg.mxu0
  %1054 = vst.msk [vmem:[#allocation2] sm:$0x3] %vm215, %v1046
  %1057 = vrot.lane.b32.xlu0 %v1050, 32
  %v1058 = vpop.permute.xlu0 %1057
  %1059 = vrot.lane.b32.xlu0 %v1052, 32
  %v1060 = vpop.permute.xlu0 %1059
  %v1061 = vsel %vm70, %v1058, %v1060
  %1063 = vst.msk [vmem:[#allocation2 - $0x4] sm:$0xc0] %vm225, %v1061
  %1064 = vst.msk [vmem:[#allocation2 + $0x2] sm:$0xc] %vm227, %v1046
  %1065 = vst.msk [vmem:[#allocation2 + $0x2] sm:$0x30] %vm229, %v1061
  %1066 = vst.msk [vmem:[#allocation2 + $0x4] sm:$0x30] %vm229, %v1046
  %1067 = vst.msk [vmem:[#allocation2 + $0x8] sm:$0xc] %vm227, %v1061
  %1068 = vst.msk [vmem:[#allocation2 + $0x6] sm:$0xc0] %vm225, %v1046
  %1069 = vst.msk [vmem:[#allocation2 + $0xe] sm:$0x3] %vm215, %v1061
  %1070 = vst.msk [vmem:[#allocation2 + $0x10] sm:$0x3] %vm215, %v1050
  %1073 = vrot.lane.b32.xlu0 %v1046, 32
  %v1074 = vpop.permute.xlu0 %1073
  %1075 = vrot.lane.b32.xlu0 %v1048, 32
  %v1076 = vpop.permute.xlu0 %1075
  %v1077 = vsel %vm70, %v1074, %v1076
  %1079 = vst.msk [vmem:[#allocation2 + $0xc] sm:$0xc0] %vm225, %v1077
  %1080 = vst.msk [vmem:[#allocation2 + $0x12] sm:$0xc] %vm227, %v1050
  %1081 = vst.msk [vmem:[#allocation2 + $0x12] sm:$0x30] %vm229, %v1077
  %1082 = vst.msk [vmem:[#allocation2 + $0x14] sm:$0x30] %vm229, %v1050
  %1083 = vst.msk [vmem:[#allocation2 + $0x18] sm:$0xc] %vm227, %v1077
  %1084 = vst.msk [vmem:[#allocation2 + $0x16] sm:$0xc0] %vm225, %v1050
  %1085 = vst.msk [vmem:[#allocation2 + $0x1e] sm:$0x3] %vm215, %v1077
  %v1086 = vld [vmem:[#allocation2] sm:$0xf]
  %v1095 = vunpack.c.l.b16 %v48
  %v1096 = vunpack.c.l.b16 %v49
  %v1097 = vunpack.c.l.b16 %v50
  %v1098 = vunpack.c.l.b16 %v51
  %v1099 = vunpack.c.l.b16 %v52
  %v1100 = vunpack.c.l.b16 %v53
  %v1101 = vunpack.c.l.b16 %v54
  %v1102 = vunpack.c.l.b16 %v55
  %v1103 = vpack.c.b16 %v1096, %v1095
  %v1104 = vpack.c.b16 %v1098, %v1097
  %v1105 = vpack.c.b16 %v1100, %v1099
  %v1106 = vpack.c.b16 %v1102, %v1101
  %1111 = vmatprep.subr.bf16.mxu0 0
  %1112 = vmatpush1.bf16.msra.mxu0 %v1103
  %1113 = vmatprep.subr.bf16.mxu0 0
  %1114 = vmatpush1.bf16.msra.mxu0 %v1104
  %1115 = vmatprep.subr.bf16.mxu0 0
  %1116 = vmatpush1.bf16.msra.mxu0 %v1105
  %1117 = vmatprep.subr.bf16.mxu0 0
  %1118 = vmatpush1.bf16.msra.mxu0 %v1106
  %1119 = vmatprep.subr.bf16.mxu0 0
  %1120 = vmatpush1.bf16.msra.mxu0 0
  %1121 = vmatprep.subr.bf16.mxu0 0
  %1122 = vmatpush1.bf16.msra.mxu0 0
  %1123 = vmatprep.subr.bf16.mxu0 0
  %1124 = vmatpush1.bf16.msra.mxu0 0
  %1125 = vmatprep.subr.bf16.mxu0 0
  %1126 = vmatpush1.bf16.msra.mxu0 0
  %1127 = vmatprep.subr.bf16.mxu0 0
  %1128 = vmatpush1.bf16.msra.mxu0 0
  %1129 = vmatprep.subr.bf16.mxu0 0
  %1130 = vmatpush1.bf16.msra.mxu0 0
  %1131 = vmatprep.subr.bf16.mxu0 0
  %1132 = vmatpush1.bf16.msra.mxu0 0
  %1133 = vmatprep.subr.bf16.mxu0 0
  %1134 = vmatpush1.bf16.msra.mxu0 0
  %1135 = vmatprep.subr.bf16.mxu0 0
  %1136 = vmatpush1.bf16.msra.mxu0 0
  %1137 = vmatprep.subr.bf16.mxu0 0
  %1138 = vmatpush1.bf16.msra.mxu0 0
  %1139 = vmatprep.subr.bf16.mxu0 0
  %1140 = vmatpush1.bf16.msra.mxu0 0
  %1141 = vmatprep.subr.bf16.mxu0 0
  %1142 = vmatpush1.bf16.msra.mxu0 0
  %1143 = vmatprep.mubr.bf16.mxu0 0
  %1144 = vmatmul.mubr.bf16.gmra.mrb[0].mxu0 %v280
  %v1145 = vpop.f32.mrb[0].mxu0
  %v1146 = vadd.f32 %v57, %v1145
  %v1147 = vpop.f32.mrb[0].mxu0
  %v1148 = vpop.f32.mrb[0].mxu0
  %v1149 = vpop.f32.mrb[0].mxu0
  %1150 = vdwg.mxu0
  %v1151 = vadd.f32 %v1086, %v1146
  %v1152 = vxor.u32 %v1151, 2147483648
  %v1153 = vmul.f32 %v1152, 1.442695
  %v1154 = vpow.pop %v1153
  %v1155 = vadd.f32 %v1154, 1.0
  %v1156 = vrcp.pop %v1155
  %v1157 = vmul.f32 1.0, %v1156
  %1159 = vrot.lane.b32.xlu0 %v1146, 64
  %v1160 = vpop.permute.xlu0 %1159
  %v1162 = vmul.f32 %v1157, %v1160
  %1164 = vrot.lane.b32.xlu0 %v1162, 64
  %v1165 = vpop.permute.xlu0 %1164
  %v1167 = vadd.f32 %v1086, %v1165
  %v1168 = vtanh.pop %v1167
  %v1169 = vsub.f32 0.0, %v1168
  %1171 = vrot.lane.b32.xlu0 %v1169, 96
  %v1172 = vpop.permute.xlu0 %1171
  %v1174 = vmul.f32 %v1157, %v1172
  %1176 = vrot.lane.b32.xlu0 %v1174, 32
  %v1177 = vpop.permute.xlu0 %1176
  %v1179 = vadd.f32 %v1168, %v1177
  %1181 = vrot.lane.b32.xlu0 %v1179, 64
  %v1182 = vpop.permute.xlu0 %1181
  %1184 = vst.msk [vmem:[#allocation3] sm:$0x3] %vm355, %v1182
  %1185 = vrot.lane.b32.xlu0 %v1179, 96
  %v1186 = vpop.permute.xlu0 %1185
  %1188 = vst.msk [vmem:[#allocation3 + $0xc] sm:$0xc] %vm360, %v1186
  %v1189 = vld [vmem:[#allocation2 + $0x4] sm:$0xf]
  %v1190 = vsel %vm70, %v1182, %v1186
  %v1191 = vmul.f32 %v1190, %v77
  %v1192 = vpack.c.bf16 %v1191, %v1191
  %v1194 = vsel %vm278, %v1192, 0
  %1196 = vmatprep.subr.bf16.mxu0 0
  %1197 = vmatpush1.bf16.msra.mxu0 %v1103
  %1198 = vmatprep.subr.bf16.mxu0 0
  %1199 = vmatpush1.bf16.msra.mxu0 %v1104
  %1200 = vmatprep.subr.bf16.mxu0 0
  %1201 = vmatpush1.bf16.msra.mxu0 %v1105
  %1202 = vmatprep.subr.bf16.mxu0 0
  %1203 = vmatpush1.bf16.msra.mxu0 %v1106
  %1204 = vmatprep.subr.bf16.mxu0 0
  %1205 = vmatpush1.bf16.msra.mxu0 0
  %1206 = vmatprep.subr.bf16.mxu0 0
  %1207 = vmatpush1.bf16.msra.mxu0 0
  %1208 = vmatprep.subr.bf16.mxu0 0
  %1209 = vmatpush1.bf16.msra.mxu0 0
  %1210 = vmatprep.subr.bf16.mxu0 0
  %1211 = vmatpush1.bf16.msra.mxu0 0
  %1212 = vmatprep.subr.bf16.mxu0 0
  %1213 = vmatpush1.bf16.msra.mxu0 0
  %1214 = vmatprep.subr.bf16.mxu0 0
  %1215 = vmatpush1.bf16.msra.mxu0 0
  %1216 = vmatprep.subr.bf16.mxu0 0
  %1217 = vmatpush1.bf16.msra.mxu0 0
  %1218 = vmatprep.subr.bf16.mxu0 0
  %1219 = vmatpush1.bf16.msra.mxu0 0
  %1220 = vmatprep.subr.bf16.mxu0 0
  %1221 = vmatpush1.bf16.msra.mxu0 0
  %1222 = vmatprep.subr.bf16.mxu0 0
  %1223 = vmatpush1.bf16.msra.mxu0 0
  %1224 = vmatprep.subr.bf16.mxu0 0
  %1225 = vmatpush1.bf16.msra.mxu0 0
  %1226 = vmatprep.subr.bf16.mxu0 0
  %1227 = vmatpush1.bf16.msra.mxu0 0
  %1228 = vmatprep.mubr.bf16.mxu0 0
  %1229 = vmatmul.mubr.bf16.gmra.mrb[0].mxu0 %v1194
  %v1230 = vpop.f32.mrb[0].mxu0
  %v1231 = vadd.f32 %v57, %v1230
  %v1232 = vpop.f32.mrb[0].mxu0
  %v1233 = vpop.f32.mrb[0].mxu0
  %v1234 = vpop.f32.mrb[0].mxu0
  %1235 = vdwg.mxu0
  %v1236 = vadd.f32 %v1189, %v1231
  %v1237 = vxor.u32 %v1236, 2147483648
  %v1238 = vmul.f32 %v1237, 1.442695
  %v1239 = vpow.pop %v1238
  %v1240 = vadd.f32 %v1239, 1.0
  %v1241 = vrcp.pop %v1240
  %v1242 = vmul.f32 1.0, %v1241
  %1244 = vrot.lane.b32.xlu0 %v1231, 64
  %v1245 = vpop.permute.xlu0 %1244
  %v1247 = vmul.f32 %v1242, %v1245
  %1249 = vrot.lane.b32.xlu0 %v1247, 64
  %v1250 = vpop.permute.xlu0 %1249
  %v1252 = vadd.f32 %v1189, %v1250
  %v1253 = vtanh.pop %v1252
  %v1254 = vsub.f32 %v1179, %v1253
  %1256 = vrot.lane.b32.xlu0 %v1254, 96
  %v1257 = vpop.permute.xlu0 %1256
  %v1259 = vmul.f32 %v1242, %v1257
  %1261 = vrot.lane.b32.xlu0 %v1259, 32
  %v1262 = vpop.permute.xlu0 %1261
  %v1264 = vadd.f32 %v1253, %v1262
  %1266 = vrot.lane.b32.xlu0 %v1264, 64
  %v1267 = vpop.permute.xlu0 %1266
  %1269 = vst.msk [vmem:[#allocation3 + $0x2] sm:$0x3] %vm355, %v1267
  %1270 = vrot.lane.b32.xlu0 %v1264, 96
  %v1271 = vpop.permute.xlu0 %1270
  %1273 = vst.msk [vmem:[#allocation3 + $0xa] sm:$0xc] %vm360, %v1271
  %v1274 = vld [vmem:[#allocation2 + $0x8] sm:$0xf]
  %v1275 = vsel %vm70, %v1267, %v1271
  %v1276 = vmul.f32 %v1275, %v77
  %v1277 = vpack.c.bf16 %v1276, %v1276
  %v1279 = vsel %vm278, %v1277, 0
  %1281 = vmatprep.subr.bf16.mxu0 0
  %1282 = vmatpush1.bf16.msra.mxu0 %v1103
  %1283 = vmatprep.subr.bf16.mxu0 0
  %1284 = vmatpush1.bf16.msra.mxu0 %v1104
  %1285 = vmatprep.subr.bf16.mxu0 0
  %1286 = vmatpush1.bf16.msra.mxu0 %v1105
  %1287 = vmatprep.subr.bf16.mxu0 0
  %1288 = vmatpush1.bf16.msra.mxu0 %v1106
  %1289 = vmatprep.subr.bf16.mxu0 0
  %1290 = vmatpush1.bf16.msra.mxu0 0
  %1291 = vmatprep.subr.bf16.mxu0 0
  %1292 = vmatpush1.bf16.msra.mxu0 0
  %1293 = vmatprep.subr.bf16.mxu0 0
  %1294 = vmatpush1.bf16.msra.mxu0 0
  %1295 = vmatprep.subr.bf16.mxu0 0
  %1296 = vmatpush1.bf16.msra.mxu0 0
  %1297 = vmatprep.subr.bf16.mxu0 0
  %1298 = vmatpush1.bf16.msra.mxu0 0
  %1299 = vmatprep.subr.bf16.mxu0 0
  %1300 = vmatpush1.bf16.msra.mxu0 0
  %1301 = vmatprep.subr.bf16.mxu0 0
  %1302 = vmatpush1.bf16.msra.mxu0 0
  %1303 = vmatprep.subr.bf16.mxu0 0
  %1304 = vmatpush1.bf16.msra.mxu0 0
  %1305 = vmatprep.subr.bf16.mxu0 0
  %1306 = vmatpush1.bf16.msra.mxu0 0
  %1307 = vmatprep.subr.bf16.mxu0 0
  %1308 = vmatpush1.bf16.msra.mxu0 0
  %1309 = vmatprep.subr.bf16.mxu0 0
  %1310 = vmatpush1.bf16.msra.mxu0 0
  %1311 = vmatprep.subr.bf16.mxu0 0
  %1312 = vmatpush1.bf16.msra.mxu0 0
  %1313 = vmatprep.mubr.bf16.mxu0 0
  %1314 = vmatmul.mubr.bf16.gmra.mrb[0].mxu0 %v1279
  %v1315 = vpop.f32.mrb[0].mxu0
  %v1316 = vadd.f32 %v57, %v1315
  %v1317 = vpop.f32.mrb[0].mxu0
  %v1318 = vpop.f32.mrb[0].mxu0
  %v1319 = vpop.f32.mrb[0].mxu0
  %1320 = vdwg.mxu0
  %v1321 = vadd.f32 %v1274, %v1316
  %v1322 = vxor.u32 %v1321, 2147483648
  %v1323 = vmul.f32 %v1322, 1.442695
  %v1324 = vpow.pop %v1323
  %v1325 = vadd.f32 %v1324, 1.0
  %v1326 = vrcp.pop %v1325
  %v1327 = vmul.f32 1.0, %v1326
  %1329 = vrot.lane.b32.xlu0 %v1316, 64
  %v1330 = vpop.permute.xlu0 %1329
  %v1332 = vmul.f32 %v1327, %v1330
  %1334 = vrot.lane.b32.xlu0 %v1332, 64
  %v1335 = vpop.permute.xlu0 %1334
  %v1337 = vadd.f32 %v1274, %v1335
  %v1338 = vtanh.pop %v1337
  %v1339 = vsub.f32 %v1264, %v1338
  %1341 = vrot.lane.b32.xlu0 %v1339, 96
  %v1342 = vpop.permute.xlu0 %1341
  %v1344 = vmul.f32 %v1327, %v1342
  %1346 = vrot.lane.b32.xlu0 %v1344, 32
  %v1347 = vpop.permute.xlu0 %1346
  %v1349 = vadd.f32 %v1338, %v1347
  %1351 = vrot.lane.b32.xlu0 %v1349, 64
  %v1352 = vpop.permute.xlu0 %1351
  %1354 = vst.msk [vmem:[#allocation3 + $0x4] sm:$0x3] %vm355, %v1352
  %1355 = vrot.lane.b32.xlu0 %v1349, 96
  %v1356 = vpop.permute.xlu0 %1355
  %1358 = vst.msk [vmem:[#allocation3 + $0x8] sm:$0xc] %vm360, %v1356
  %v1359 = vld [vmem:[#allocation2 + $0xc] sm:$0xf]
  %v1360 = vsel %vm70, %v1352, %v1356
  %v1361 = vmul.f32 %v1360, %v77
  %v1362 = vpack.c.bf16 %v1361, %v1361
  %v1364 = vsel %vm278, %v1362, 0
  %1366 = vmatprep.subr.bf16.mxu0 0
  %1367 = vmatpush1.bf16.msra.mxu0 %v1103
  %1368 = vmatprep.subr.bf16.mxu0 0
  %1369 = vmatpush1.bf16.msra.mxu0 %v1104
  %1370 = vmatprep.subr.bf16.mxu0 0
  %1371 = vmatpush1.bf16.msra.mxu0 %v1105
  %1372 = vmatprep.subr.bf16.mxu0 0
  %1373 = vmatpush1.bf16.msra.mxu0 %v1106
  %1374 = vmatprep.subr.bf16.mxu0 0
  %1375 = vmatpush1.bf16.msra.mxu0 0
  %1376 = vmatprep.subr.bf16.mxu0 0
  %1377 = vmatpush1.bf16.msra.mxu0 0
  %1378 = vmatprep.subr.bf16.mxu0 0
  %1379 = vmatpush1.bf16.msra.mxu0 0
  %1380 = vmatprep.subr.bf16.mxu0 0
  %1381 = vmatpush1.bf16.msra.mxu0 0
  %1382 = vmatprep.subr.bf16.mxu0 0
  %1383 = vmatpush1.bf16.msra.mxu0 0
  %1384 = vmatprep.subr.bf16.mxu0 0
  %1385 = vmatpush1.bf16.msra.mxu0 0
  %1386 = vmatprep.subr.bf16.mxu0 0
  %1387 = vmatpush1.bf16.msra.mxu0 0
  %1388 = vmatprep.subr.bf16.mxu0 0
  %1389 = vmatpush1.bf16.msra.mxu0 0
  %1390 = vmatprep.subr.bf16.mxu0 0
  %1391 = vmatpush1.bf16.msra.mxu0 0
  %1392 = vmatprep.subr.bf16.mxu0 0
  %1393 = vmatpush1.bf16.msra.mxu0 0
  %1394 = vmatprep.subr.bf16.mxu0 0
  %1395 = vmatpush1.bf16.msra.mxu0 0
  %1396 = vmatprep.subr.bf16.mxu0 0
  %1397 = vmatpush1.bf16.msra.mxu0 0
  %1398 = vmatprep.mubr.bf16.mxu0 0
  %1399 = vmatmul.mubr.bf16.gmra.mrb[0].mxu0 %v1364
  %v1400 = vpop.f32.mrb[0].mxu0
  %v1401 = vadd.f32 %v57, %v1400
  %v1402 = vpop.f32.mrb[0].mxu0
  %v1403 = vpop.f32.mrb[0].mxu0
  %v1404 = vpop.f32.mrb[0].mxu0
  %1405 = vdwg.mxu0
  %v1406 = vadd.f32 %v1359, %v1401
  %v1407 = vxor.u32 %v1406, 2147483648
  %v1408 = vmul.f32 %v1407, 1.442695
  %v1409 = vpow.pop %v1408
  %v1410 = vadd.f32 %v1409, 1.0
  %v1411 = vrcp.pop %v1410
  %v1412 = vmul.f32 1.0, %v1411
  %1414 = vrot.lane.b32.xlu0 %v1401, 64
  %v1415 = vpop.permute.xlu0 %1414
  %v1417 = vmul.f32 %v1412, %v1415
  %1419 = vrot.lane.b32.xlu0 %v1417, 64
  %v1420 = vpop.permute.xlu0 %1419
  %v1422 = vadd.f32 %v1359, %v1420
  %v1423 = vtanh.pop %v1422
  %v1424 = vsub.f32 %v1349, %v1423
  %1426 = vrot.lane.b32.xlu0 %v1424, 96
  %v1427 = vpop.permute.xlu0 %1426
  %v1429 = vmul.f32 %v1412, %v1427
  %1431 = vrot.lane.b32.xlu0 %v1429, 32
  %v1432 = vpop.permute.xlu0 %1431
  %v1434 = vadd.f32 %v1423, %v1432
  %1436 = vrot.lane.b32.xlu0 %v1434, 64
  %v1437 = vpop.permute.xlu0 %1436
  %1439 = vst.msk [vmem:[#allocation3 + $0x6] sm:$0x3] %vm355, %v1437
  %1440 = vrot.lane.b32.xlu0 %v1434, 96
  %v1441 = vpop.permute.xlu0 %1440
  %1443 = vst.msk [vmem:[#allocation3 + $0x6] sm:$0xc] %vm360, %v1441
  %v1444 = vld [vmem:[#allocation2 + $0x10] sm:$0xf]
  %v1445 = vsel %vm70, %v1437, %v1441
  %v1446 = vmul.f32 %v1445, %v77
  %v1447 = vpack.c.bf16 %v1446, %v1446
  %v1449 = vsel %vm278, %v1447, 0
  %1451 = vmatprep.subr.bf16.mxu0 0
  %1452 = vmatpush1.bf16.msra.mxu0 %v1103
  %1453 = vmatprep.subr.bf16.mxu0 0
  %1454 = vmatpush1.bf16.msra.mxu0 %v1104
  %1455 = vmatprep.subr.bf16.mxu0 0
  %1456 = vmatpush1.bf16.msra.mxu0 %v1105
  %1457 = vmatprep.subr.bf16.mxu0 0
  %1458 = vmatpush1.bf16.msra.mxu0 %v1106
  %1459 = vmatprep.subr.bf16.mxu0 0
  %1460 = vmatpush1.bf16.msra.mxu0 0
  %1461 = vmatprep.subr.bf16.mxu0 0
  %1462 = vmatpush1.bf16.msra.mxu0 0
  %1463 = vmatprep.subr.bf16.mxu0 0
  %1464 = vmatpush1.bf16.msra.mxu0 0
  %1465 = vmatprep.subr.bf16.mxu0 0
  %1466 = vmatpush1.bf16.msra.mxu0 0
  %1467 = vmatprep.subr.bf16.mxu0 0
  %1468 = vmatpush1.bf16.msra.mxu0 0
  %1469 = vmatprep.subr.bf16.mxu0 0
  %1470 = vmatpush1.bf16.msra.mxu0 0
  %1471 = vmatprep.subr.bf16.mxu0 0
  %1472 = vmatpush1.bf16.msra.mxu0 0
  %1473 = vmatprep.subr.bf16.mxu0 0
  %1474 = vmatpush1.bf16.msra.mxu0 0
  %1475 = vmatprep.subr.bf16.mxu0 0
  %1476 = vmatpush1.bf16.msra.mxu0 0
  %1477 = vmatprep.subr.bf16.mxu0 0
  %1478 = vmatpush1.bf16.msra.mxu0 0
  %1479 = vmatprep.subr.bf16.mxu0 0
  %1480 = vmatpush1.bf16.msra.mxu0 0
  %1481 = vmatprep.subr.bf16.mxu0 0
  %1482 = vmatpush1.bf16.msra.mxu0 0
  %1483 = vmatprep.mubr.bf16.mxu0 0
  %1484 = vmatmul.mubr.bf16.gmra.mrb[0].mxu0 %v1449
  %v1485 = vpop.f32.mrb[0].mxu0
  %v1486 = vadd.f32 %v57, %v1485
  %v1487 = vpop.f32.mrb[0].mxu0
  %v1488 = vpop.f32.mrb[0].mxu0
  %v1489 = vpop.f32.mrb[0].mxu0
  %1490 = vdwg.mxu0
  %v1491 = vadd.f32 %v1444, %v1486
  %v1492 = vxor.u32 %v1491, 2147483648
  %v1493 = vmul.f32 %v1492, 1.442695
  %v1494 = vpow.pop %v1493
  %v1495 = vadd.f32 %v1494, 1.0
  %v1496 = vrcp.pop %v1495
  %v1497 = vmul.f32 1.0, %v1496
  %1499 = vrot.lane.b32.xlu0 %v1486, 64
  %v1500 = vpop.permute.xlu0 %1499
  %v1502 = vmul.f32 %v1497, %v1500
  %1504 = vrot.lane.b32.xlu0 %v1502, 64
  %v1505 = vpop.permute.xlu0 %1504
  %v1507 = vadd.f32 %v1444, %v1505
  %v1508 = vtanh.pop %v1507
  %v1509 = vsub.f32 %v1434, %v1508
  %1511 = vrot.lane.b32.xlu0 %v1509, 96
  %v1512 = vpop.permute.xlu0 %1511
  %v1514 = vmul.f32 %v1497, %v1512
  %1516 = vrot.lane.b32.xlu0 %v1514, 32
  %v1517 = vpop.permute.xlu0 %1516
  %v1519 = vadd.f32 %v1508, %v1517
  %1521 = vrot.lane.b32.xlu0 %v1519, 64
  %v1522 = vpop.permute.xlu0 %1521
  %1524 = vst.msk [vmem:[#allocation3 + $0x8] sm:$0x3] %vm355, %v1522
  %1525 = vrot.lane.b32.xlu0 %v1519, 96
  %v1526 = vpop.permute.xlu0 %1525
  %1528 = vst.msk [vmem:[#allocation3 + $0x4] sm:$0xc] %vm360, %v1526
  %v1529 = vld [vmem:[#allocation2 + $0x14] sm:$0xf]
  %v1530 = vsel %vm70, %v1522, %v1526
  %v1531 = vmul.f32 %v1530, %v77
  %v1532 = vpack.c.bf16 %v1531, %v1531
  %v1534 = vsel %vm278, %v1532, 0
  %1536 = vmatprep.subr.bf16.mxu0 0
  %1537 = vmatpush1.bf16.msra.mxu0 %v1103
  %1538 = vmatprep.subr.bf16.mxu0 0
  %1539 = vmatpush1.bf16.msra.mxu0 %v1104
  %1540 = vmatprep.subr.bf16.mxu0 0
  %1541 = vmatpush1.bf16.msra.mxu0 %v1105
  %1542 = vmatprep.subr.bf16.mxu0 0
  %1543 = vmatpush1.bf16.msra.mxu0 %v1106
  %1544 = vmatprep.subr.bf16.mxu0 0
  %1545 = vmatpush1.bf16.msra.mxu0 0
  %1546 = vmatprep.subr.bf16.mxu0 0
  %1547 = vmatpush1.bf16.msra.mxu0 0
  %1548 = vmatprep.subr.bf16.mxu0 0
  %1549 = vmatpush1.bf16.msra.mxu0 0
  %1550 = vmatprep.subr.bf16.mxu0 0
  %1551 = vmatpush1.bf16.msra.mxu0 0
  %1552 = vmatprep.subr.bf16.mxu0 0
  %1553 = vmatpush1.bf16.msra.mxu0 0
  %1554 = vmatprep.subr.bf16.mxu0 0
  %1555 = vmatpush1.bf16.msra.mxu0 0
  %1556 = vmatprep.subr.bf16.mxu0 0
  %1557 = vmatpush1.bf16.msra.mxu0 0
  %1558 = vmatprep.subr.bf16.mxu0 0
  %1559 = vmatpush1.bf16.msra.mxu0 0
  %1560 = vmatprep.subr.bf16.mxu0 0
  %1561 = vmatpush1.bf16.msra.mxu0 0
  %1562 = vmatprep.subr.bf16.mxu0 0
  %1563 = vmatpush1.bf16.msra.mxu0 0
  %1564 = vmatprep.subr.bf16.mxu0 0
  %1565 = vmatpush1.bf16.msra.mxu0 0
  %1566 = vmatprep.subr.bf16.mxu0 0
  %1567 = vmatpush1.bf16.msra.mxu0 0
  %1568 = vmatprep.mubr.bf16.mxu0 0
  %1569 = vmatmul.mubr.bf16.gmra.mrb[0].mxu0 %v1534
  %v1570 = vpop.f32.mrb[0].mxu0
  %v1571 = vadd.f32 %v57, %v1570
  %v1572 = vpop.f32.mrb[0].mxu0
  %v1573 = vpop.f32.mrb[0].mxu0
  %v1574 = vpop.f32.mrb[0].mxu0
  %1575 = vdwg.mxu0
  %v1576 = vadd.f32 %v1529, %v1571
  %v1577 = vxor.u32 %v1576, 2147483648
  %v1578 = vmul.f32 %v1577, 1.442695
  %v1579 = vpow.pop %v1578
  %v1580 = vadd.f32 %v1579, 1.0
  %v1581 = vrcp.pop %v1580
  %v1582 = vmul.f32 1.0, %v1581
  %1584 = vrot.lane.b32.xlu0 %v1571, 64
  %v1585 = vpop.permute.xlu0 %1584
  %v1587 = vmul.f32 %v1582, %v1585
  %1589 = vrot.lane.b32.xlu0 %v1587, 64
  %v1590 = vpop.permute.xlu0 %1589
  %v1592 = vadd.f32 %v1529, %v1590
  %v1593 = vtanh.pop %v1592
  %v1594 = vsub.f32 %v1519, %v1593
  %1596 = vrot.lane.b32.xlu0 %v1594, 96
  %v1597 = vpop.permute.xlu0 %1596
  %v1599 = vmul.f32 %v1582, %v1597
  %1601 = vrot.lane.b32.xlu0 %v1599, 32
  %v1602 = vpop.permute.xlu0 %1601
  %v1604 = vadd.f32 %v1593, %v1602
  %1606 = vrot.lane.b32.xlu0 %v1604, 64
  %v1607 = vpop.permute.xlu0 %1606
  %1609 = vst.msk [vmem:[#allocation3 + $0xa] sm:$0x3] %vm355, %v1607
  %1610 = vrot.lane.b32.xlu0 %v1604, 96
  %v1611 = vpop.permute.xlu0 %1610
  %1613 = vst.msk [vmem:[#allocation3 + $0x2] sm:$0xc] %vm360, %v1611
  %v1614 = vld [vmem:[#allocation2 + $0x18] sm:$0xf]
  %v1615 = vsel %vm70, %v1607, %v1611
  %v1616 = vmul.f32 %v1615, %v77
  %v1617 = vpack.c.bf16 %v1616, %v1616
  %v1619 = vsel %vm278, %v1617, 0
  %1621 = vmatprep.subr.bf16.mxu0 0
  %1622 = vmatpush1.bf16.msra.mxu0 %v1103
  %1623 = vmatprep.subr.bf16.mxu0 0
  %1624 = vmatpush1.bf16.msra.mxu0 %v1104
  %1625 = vmatprep.subr.bf16.mxu0 0
  %1626 = vmatpush1.bf16.msra.mxu0 %v1105
  %1627 = vmatprep.subr.bf16.mxu0 0
  %1628 = vmatpush1.bf16.msra.mxu0 %v1106
  %1629 = vmatprep.subr.bf16.mxu0 0
  %1630 = vmatpush1.bf16.msra.mxu0 0
  %1631 = vmatprep.subr.bf16.mxu0 0
  %1632 = vmatpush1.bf16.msra.mxu0 0
  %1633 = vmatprep.subr.bf16.mxu0 0
  %1634 = vmatpush1.bf16.msra.mxu0 0
  %1635 = vmatprep.subr.bf16.mxu0 0
  %1636 = vmatpush1.bf16.msra.mxu0 0
  %1637 = vmatprep.subr.bf16.mxu0 0
  %1638 = vmatpush1.bf16.msra.mxu0 0
  %1639 = vmatprep.subr.bf16.mxu0 0
  %1640 = vmatpush1.bf16.msra.mxu0 0
  %1641 = vmatprep.subr.bf16.mxu0 0
  %1642 = vmatpush1.bf16.msra.mxu0 0
  %1643 = vmatprep.subr.bf16.mxu0 0
  %1644 = vmatpush1.bf16.msra.mxu0 0
  %1645 = vmatprep.subr.bf16.mxu0 0
  %1646 = vmatpush1.bf16.msra.mxu0 0
  %1647 = vmatprep.subr.bf16.mxu0 0
  %1648 = vmatpush1.bf16.msra.mxu0 0
  %1649 = vmatprep.subr.bf16.mxu0 0
  %1650 = vmatpush1.bf16.msra.mxu0 0
  %1651 = vmatprep.subr.bf16.mxu0 0
  %1652 = vmatpush1.bf16.msra.mxu0 0
  %1653 = vmatprep.mubr.bf16.mxu0 0
  %1654 = vmatmul.mubr.bf16.gmra.mrb[0].mxu0 %v1619
  %v1655 = vpop.f32.mrb[0].mxu0
  %v1656 = vadd.f32 %v57, %v1655
  %v1657 = vpop.f32.mrb[0].mxu0
  %v1658 = vpop.f32.mrb[0].mxu0
  %v1659 = vpop.f32.mrb[0].mxu0
  %1660 = vdwg.mxu0
  %v1661 = vadd.f32 %v1614, %v1656
  %v1662 = vxor.u32 %v1661, 2147483648
  %v1663 = vmul.f32 %v1662, 1.442695
  %v1664 = vpow.pop %v1663
  %v1665 = vadd.f32 %v1664, 1.0
  %v1666 = vrcp.pop %v1665
  %v1667 = vmul.f32 1.0, %v1666
  %1669 = vrot.lane.b32.xlu0 %v1656, 64
  %v1670 = vpop.permute.xlu0 %1669
  %v1672 = vmul.f32 %v1667, %v1670
  %1674 = vrot.lane.b32.xlu0 %v1672, 64
  %v1675 = vpop.permute.xlu0 %1674
  %v1677 = vadd.f32 %v1614, %v1675
  %v1678 = vtanh.pop %v1677
  %v1679 = vsub.f32 %v1604, %v1678
  %1681 = vrot.lane.b32.xlu0 %v1679, 96
  %v1682 = vpop.permute.xlu0 %1681
  %v1684 = vmul.f32 %v1667, %v1682
  %1686 = vrot.lane.b32.xlu0 %v1684, 32
  %v1687 = vpop.permute.xlu0 %1686
  %v1689 = vadd.f32 %v1678, %v1687
  %1691 = vrot.lane.b32.xlu0 %v1689, 64
  %v1692 = vpop.permute.xlu0 %1691
  %1694 = vst.msk [vmem:[#allocation3 + $0xc] sm:$0x3] %vm355, %v1692
  %1695 = vrot.lane.b32.xlu0 %v1689, 96
  %v1696 = vpop.permute.xlu0 %1695
  %1698 = vst.msk [vmem:[#allocation3] sm:$0xc] %vm360, %v1696
  %v1699 = vld [vmem:[#allocation2 + $0x1c] sm:$0xf]
  %v1700 = vsel %vm70, %v1692, %v1696
  %v1701 = vmul.f32 %v1700, %v77
  %v1702 = vpack.c.bf16 %v1701, %v1701
  %v1704 = vsel %vm278, %v1702, 0
  %1706 = vmatprep.subr.bf16.mxu0 0
  %1707 = vmatpush1.bf16.msra.mxu0 %v1103
  %1708 = vmatprep.subr.bf16.mxu0 0
  %1709 = vmatpush1.bf16.msra.mxu0 %v1104
  %1710 = vmatprep.subr.bf16.mxu0 0
  %1711 = vmatpush1.bf16.msra.mxu0 %v1105
  %1712 = vmatprep.subr.bf16.mxu0 0
  %1713 = vmatpush1.bf16.msra.mxu0 %v1106
  %1714 = vmatprep.subr.bf16.mxu0 0
  %1715 = vmatpush1.bf16.msra.mxu0 0
  %1716 = vmatprep.subr.bf16.mxu0 0
  %1717 = vmatpush1.bf16.msra.mxu0 0
  %1718 = vmatprep.subr.bf16.mxu0 0
  %1719 = vmatpush1.bf16.msra.mxu0 0
  %1720 = vmatprep.subr.bf16.mxu0 0
  %1721 = vmatpush1.bf16.msra.mxu0 0
  %1722 = vmatprep.subr.bf16.mxu0 0
  %1723 = vmatpush1.bf16.msra.mxu0 0
  %1724 = vmatprep.subr.bf16.mxu0 0
  %1725 = vmatpush1.bf16.msra.mxu0 0
  %1726 = vmatprep.subr.bf16.mxu0 0
  %1727 = vmatpush1.bf16.msra.mxu0 0
  %1728 = vmatprep.subr.bf16.mxu0 0
  %1729 = vmatpush1.bf16.msra.mxu0 0
  %1730 = vmatprep.subr.bf16.mxu0 0
  %1731 = vmatpush1.bf16.msra.mxu0 0
  %1732 = vmatprep.subr.bf16.mxu0 0
  %1733 = vmatpush1.bf16.msra.mxu0 0
  %1734 = vmatprep.subr.bf16.mxu0 0
  %1735 = vmatpush1.bf16.msra.mxu0 0
  %1736 = vmatprep.subr.bf16.mxu0 0
  %1737 = vmatpush1.bf16.msra.mxu0 0
  %1738 = vmatprep.mubr.bf16.mxu0 0
  %1739 = vmatmul.mubr.bf16.gmra.mrb[0].mxu0 %v1704
  %v1740 = vpop.f32.mrb[0].mxu0
  %v1741 = vadd.f32 %v57, %v1740
  %v1742 = vpop.f32.mrb[0].mxu0
  %v1743 = vpop.f32.mrb[0].mxu0
  %v1744 = vpop.f32.mrb[0].mxu0
  %1745 = vdwg.mxu0
  %v1746 = vadd.f32 %v1699, %v1741
  %v1747 = vxor.u32 %v1746, 2147483648
  %v1748 = vmul.f32 %v1747, 1.442695
  %v1749 = vpow.pop %v1748
  %v1750 = vadd.f32 %v1749, 1.0
  %v1751 = vrcp.pop %v1750
  %v1752 = vmul.f32 1.0, %v1751
  %1754 = vrot.lane.b32.xlu0 %v1741, 64
  %v1755 = vpop.permute.xlu0 %1754
  %v1757 = vmul.f32 %v1752, %v1755
  %1759 = vrot.lane.b32.xlu0 %v1757, 64
  %v1760 = vpop.permute.xlu0 %1759
  %v1762 = vadd.f32 %v1699, %v1760
  %v1763 = vtanh.pop %v1762
  %v1764 = vsub.f32 %v1689, %v1763
  %1766 = vrot.lane.b32.xlu0 %v1764, 96
  %v1767 = vpop.permute.xlu0 %1766
  %v1769 = vmul.f32 %v1752, %v1767
  %1771 = vrot.lane.b32.xlu0 %v1769, 32
  %v1772 = vpop.permute.xlu0 %1771
  %v1774 = vadd.f32 %v1763, %v1772
  %1776 = vrot.lane.b32.xlu0 %v1774, 64
  %v1777 = vpop.permute.xlu0 %1776
  %1779 = vst.msk [vmem:[#allocation3 + $0xe] sm:$0x3] %vm355, %v1777
  %1780 = vrot.lane.b32.xlu0 %v1774, 96
  %v1781 = vpop.permute.xlu0 %1780
  %1783 = vst.msk [vmem:[#allocation3 - $0x2] sm:$0xc] %vm360, %v1781
  %v1784 = vld [vmem:[#allocation3] sm:$0xff]
  %v1785 = vld [vmem:[#allocation3 + $0x8] sm:$0xff]
  %v1786 = vlaneseq
  %v1787 = vshrl.u32 %v1786, 7
  %v1788 = vsub.s32 0, %v1787
  %v1789 = vrot.slane %v63, %v1788
  %v1790 = vmul.f32 %v1784, %v1789
  %v1791 = vmul.f32 %v1785, %v1789
  %v1792 = vsel %vm278, %v1790, 0.0
  %1793 = vadd.xlane.f32.xlu0 %v1792
  %v1794 = vpop.xlane.xlu0 %1793
  %v1795 = vsel %vm278, %v1791, 0.0
  %1796 = vadd.xlane.f32.xlu0 %v1795
  %v1797 = vpop.xlane.xlu0 %1796
  %v1798 = vlaneseq
  %v1799 = vshrl.u32 %v1798, 7
  %v1800 = vsub.s32 0, %v1799
  %v1801 = vrot.slane %v69, %v1800
  %v1802 = vadd.f32 %v1794, %v1801
  %v1803 = vadd.f32 %v1797, %v1801
  %v1804 = vmax.f32 %v1802, 0.0
  %v1805 = vmax.f32 %v1803, 0.0
  %v1806 = vmul.f32 %v1804, %v66
  %v1807 = vmul.f32 %v1805, %v67
  %v1809 = vrot.slane %v1806, 2
  %v1811 = vadd.f32 %v1806, %v1809
  %v1812 = vrot.slane %v1806, 4
  %v1814 = vadd.f32 %v1811, %v1812
  %v1815 = vrot.slane %v1806, 6
  %v1817 = vadd.f32 %v1814, %v1815
  %v1818 = vadd.f32 %v1817, %v1807
  %v1820 = vrot.slane %v1807, 2
  %v1822 = vadd.f32 %v1818, %v1820
  %v1823 = vrot.slane %v1807, 4
  %v1825 = vadd.f32 %v1822, %v1823
  %v1826 = vrot.slane %v1807, 6
  %v1828 = vadd.f32 %v1825, %v1826
  %1830 = vrot.lane.b32.xlu0 %v1801, 127
  %v1831 = vpop.permute.xlu0 %1830
  %v1833 = vadd.f32 %v1828, %v1831
  %1835 = vset.pattern.permute.xlu0 0
  %1836 = vperm.xlu0 %1835, %v1833
  %v1837 = vpop.permute.xlu0 %1836
  %1839 = vst [vmem:[%s4] sm:$0x3] %v1837
  // Predicated region
  $region18: #{time_series_rnn_discriminator.1} parent=0 // pred_check
    _
  $region19: #{time_series_rnn_discriminator.1} parent=0 // pred_check_branch
    %1841 = sbr.rel (0) target = $region21
  $region20: #{time_series_rnn_discriminator.1} parent=0 // pred_region
    _
  $region21: #{time_series_rnn_discriminator.1} parent=0 // pred_fallthru
    _
  // Predicated region
  $region22: #{time_series_rnn_discriminator.1} parent=0 // pred_check
    _
  $region23: #{time_series_rnn_discriminator.1} parent=0 // pred_check_branch
    %1843 = sbr.rel (0) target = $region25
  $region24: #{time_series_rnn_discriminator.1} parent=0 // pred_region
    _
  $region25: #{time_series_rnn_discriminator.1} parent=0 // pred_fallthru
    _

</llo_original>
